<compile_context>
chip_gen: v7x
topology: tpu7x:2x2x1
jax: 0.10.0
libtpu: 0.0.40
codegen_flags: <defaults>
</compile_context>

<pallas_src>
import math

import jax
import jax.numpy as jnp
from jax import lax
from jax.experimental import pallas as pl
from jax.experimental.pallas import tpu as pltpu

# ----- problem sizes (small, consistent with the module) -----
B = 2            # batch
S_T = 8          # target sequence length
S_M = 16         # memory (encoder output) sequence length
D = 32           # d_model
H = 4            # nhead
HD = D // H      # head_dim
F = 64           # dim_feedforward
L = 2            # num_layers (torch ModuleList shares ONE layer's params L times)
N_T = B * S_T    # flattened target tokens
N_M = B * S_M    # flattened memory tokens
LN_EPS = 1e-5
NEG = -1e9


def decoder_kernel(
    tgt_ref,        # (N_T, D)
    mem_ref,        # (N_M, D)
    selfmask_ref,   # (N_T, H*N_T)  additive (causal + tgt padding + cross-batch), head-tiled
    crossmask_ref,  # (N_T, H*N_M)  additive (memory padding + cross-batch), head-tiled
    hm_t_ref,       # (H*N_T, D)    0/1 per-head block mask for self K/V
    hm_m_ref,       # (H*N_M, D)    0/1 per-head block mask for cross K/V
    ind_t_ref,      # (H*N_T, H*N_T) 0/1 segment indicator (softmax denom via matmul)
    ind_m_ref,      # (H*N_M, H*N_M)
    w_sqkv_ref,     # (D, 3D)  self-attn fused [wq*scale | wk | wv]
    wo_s_ref,       # (D, D)
    wq_c_ref,       # (D, D)   cross-attn q weight (scale folded)
    w_ckv_ref,      # (D, 2D)  cross-attn fused [wk | wv]
    wo_c_ref,       # (D, D)
    w1_ref,         # (D, F)
    w2_ref,         # (F, D)
    vec_ref,        # (13, 3D) packed small vectors (one DMA instead of 13)
    o_ref,          # (N_T, D)
):
    f32 = jnp.float32

    # ---- unpack the small-vector slab ----
    vec = vec_ref[...]
    b_sqkv = vec[0:1, :]              # (1, 3D)  [bq*scale | 0 | bv]
    b_ckv = vec[1:2, :2 * D]          # (1, 2D)  [0 | bv]
    b1 = vec[2:3, :F]                 # (1, F)
    bo_s = vec[3:4, :D]
    bq_c = vec[4:5, :D]
    bo_c = vec[5:6, :D]
    g1, be1 = vec[6:7, :D], vec[7:8, :D]
    g2, be2 = vec[8:9, :D], vec[9:10, :D]
    g3, be3 = vec[10:11, :D], vec[11:12, :D]
    b2 = vec[12:13, :D]

    def layer_norm(x, g, b):
        mu = jnp.mean(x, axis=-1, keepdims=True)
        var = jnp.mean((x - mu) ** 2, axis=-1, keepdims=True)
        return (x - mu) * lax.rsqrt(var + LN_EPS) * g + b

    def block_kv(k, v, hm):
        """Replicate K/V H times along sublanes and block-mask per head so a single
        matmul computes all heads. k,v: (n_kv, D); hm: (H*n_kv, D)."""
        kr = jnp.concatenate([k] * H, axis=0) * hm
        vr = jnp.concatenate([v] * H, axis=0) * hm
        return kr, vr

    def seg_max(s, n_kv):
        """Per-head (lane-segment of width n_kv) row max, broadcast back to lanes."""
        nq = s.shape[0]
        return jnp.concatenate(
            [jnp.broadcast_to(
                jnp.max(s[:, h * n_kv:(h + 1) * n_kv], axis=-1, keepdims=True),
                (nq, n_kv))
             for h in range(H)], axis=-1)

    def mha(q, kbd, vbd, mask, ind, n_kv, wo, bo):
        """q: (N_T, D) with 1/sqrt(HD) folded in; kbd/vbd: (H*n_kv, D) block-masked
        replicated K/V; mask: (N_T, H*n_kv) additive; ind: (H*n_kv, H*n_kv)."""
        # scores for ALL heads & batches in one MXU op (K^T folded into rhs contraction)
        s = lax.dot_general(q, kbd, (((1,), (1,)), ((), ())),
                            preferred_element_type=f32)            # (N_T, H*n_kv)
        s = s + mask
        s = s - seg_max(s, n_kv)                                    # per-head stability
        p = jnp.exp(s)                                              # one wide EUP exp
        denom = jnp.dot(p, ind, preferred_element_type=f32)         # segment sums (MXU)
        r = pl.reciprocal(denom, approx=True)
        r = r * (2.0 - denom * r)                                   # one Newton step
        p = p * r
        # context for all heads, already laid out as the head-concat (N_T, D)
        ctx = jnp.dot(p, vbd, preferred_element_type=f32)
        return jnp.dot(ctx, wo, preferred_element_type=f32) + bo

    x = tgt_ref[...]                                                # (N_T, D)
    mem = mem_ref[...]                                              # (N_M, D)
    self_mask = selfmask_ref[...]
    cross_mask = crossmask_ref[...]
    hm_t = hm_t_ref[...]
    hm_m = hm_m_ref[...]
    ind_t = ind_t_ref[...]
    ind_m = ind_m_ref[...]

    w_sqkv = w_sqkv_ref[...]
    wo_s = wo_s_ref[...]
    wq_c = wq_c_ref[...]
    wo_c = wo_c_ref[...]
    w1 = w1_ref[...]
    w2 = w2_ref[...]

    # Cross-attention K/V of `memory`: weights are shared across layers and memory is
    # constant, so compute (and block-diagonalize) once; reuse in every layer.
    kv_c = jnp.dot(mem, w_ckv_ref[...], preferred_element_type=f32) + b_ckv
    kbd_c, vbd_c = block_kv(kv_c[:, :D], kv_c[:, D:], hm_m)

    # Shared-weight layer applied L times (matches the torch module). L is tiny, so a
    # static loop is fine; switch to lax.fori_loop if L ever grows beyond ~4.
    for _ in range(L):
        # ---- masked (causal + padding) self-attention ----
        qkv = jnp.dot(x, w_sqkv, preferred_element_type=f32) + b_sqkv     # (N_T, 3D)
        kbd_s, vbd_s = block_kv(qkv[:, D:2 * D], qkv[:, 2 * D:], hm_t)
        sa = mha(qkv[:, :D], kbd_s, vbd_s, self_mask, ind_t, N_T, wo_s, bo_s)
        x = layer_norm(x + sa, g1, be1)         # dropout1 = identity (inference)

        # ---- cross-attention over memory ----
        q_c = jnp.dot(x, wq_c, preferred_element_type=f32) + bq_c
        ca = mha(q_c, kbd_c, vbd_c, cross_mask, ind_m, N_M, wo_c, bo_c)
        x = layer_norm(x + ca, g2, be2)         # dropout2 = identity

        # ---- feed-forward ----
        hdn = jnp.maximum(jnp.dot(x, w1, preferred_element_type=f32) + b1, 0.0)
        ff = jnp.dot(hdn, w2, preferred_element_type=f32) + b2
        x = layer_norm(x + ff, g3, be3)         # dropout3/4 = identity

    o_ref[...] = x.astype(o_ref.dtype)
    # TODO(synk): dropout layers are no-ops here (inference mode); training-mode dropout
    # would need pltpu.prng_seed / pltpu.prng_random_bits inside the kernel.


# --------------------------------------------------------------------------------
# One-time parameter / mask packing (hoisted OUT of the per-call jitted hot path).
# --------------------------------------------------------------------------------
def prepare_params(params, tgt_mask, memory_key_padding_mask, tgt_key_padding_mask):
    scale = 1.0 / math.sqrt(HD)

    # --- fused / pre-scaled weights ---
    w_sqkv = jnp.concatenate(
        [params["wq_s"] * scale, params["wk_s"], params["wv_s"]], axis=1)   # (D, 3D)
    w_ckv = jnp.concatenate([params["wk_c"], params["wv_c"]], axis=1)       # (D, 2D)
    wq_c = params["wq_c"] * scale

    # --- pack all tiny bias / LayerNorm vectors into one (13, 3D) slab ---
    W = 3 * D

    def pad_row(v):
        return jnp.pad(v, ((0, 0), (0, W - v.shape[1])))

    vec = jnp.concatenate([
        jnp.concatenate([params["bq_s"] * scale,
                         jnp.zeros((1, D), jnp.float32),
                         params["bv_s"]], axis=1),                          # row 0
        pad_row(jnp.concatenate([jnp.zeros((1, D), jnp.float32),
                                 params["bv_c"]], axis=1)),                 # row 1
        pad_row(params["b1"]),                                              # row 2
        pad_row(params["bo_s"]),                                            # row 3
        pad_row(params["bq_c"] * scale),                                    # row 4
        pad_row(params["bo_c"]),                                            # row 5
        pad_row(params["g1"]), pad_row(params["be1"]),                      # rows 6,7
        pad_row(params["g2"]), pad_row(params["be2"]),                      # rows 8,9
        pad_row(params["g3"]), pad_row(params["be3"]),                      # rows 10,11
        pad_row(params["b2"]),                                              # row 12
    ], axis=0).astype(jnp.float32)                                          # (13, 3D)

    # --- block-diagonal (cross-batch masked) additive masks, tiled per head ---
    self_base = jnp.full((N_T, N_T), NEG, jnp.float32)
    cross_base = jnp.full((N_T, N_M), NEG, jnp.float32)
    for b in range(B):
        blk = tgt_mask + tgt_key_padding_mask[b][None, :]                   # (S_T, S_T)
        self_base = self_base.at[b * S_T:(b + 1) * S_T,
                                 b * S_T:(b + 1) * S_T].set(blk)
        cross_base = cross_base.at[b * S_T:(b + 1) * S_T,
                                   b * S_M:(b + 1) * S_M].set(
            jnp.broadcast_to(memory_key_padding_mask[b][None, :], (S_T, S_M)))
    self_mask = jnp.tile(self_base, (1, H))                                 # (N_T, H*N_T)
    cross_mask = jnp.tile(cross_base, (1, H))                               # (N_T, H*N_M)

    # --- per-head block masks for replicated K/V, and segment-sum indicators ---
    def head_mask(n_kv):
        r = jnp.arange(H * n_kv)[:, None] // n_kv       # head owning this K/V row
        c = jnp.arange(D)[None, :] // HD                 # head owning this feature
        return (r == c).astype(jnp.float32)              # (H*n_kv, D)

    def seg_indicator(n_kv):
        g = jnp.arange(H * n_kv) // n_kv
        return (g[:, None] == g[None, :]).astype(jnp.float32)  # (H*n_kv, H*n_kv)

    return {
        "w_sqkv": w_sqkv, "wo_s": params["wo_s"], "wq_c": wq_c, "w_ckv": w_ckv,
        "wo_c": params["wo_c"], "w1": params["w1"], "w2": params["w2"], "vec": vec,
        "self_mask": self_mask, "cross_mask": cross_mask,
        "hm_t": head_mask(N_T), "hm_m": head_mask(N_M),
        "ind_t": seg_indicator(N_T), "ind_m": seg_indicator(N_M),
    }


@jax.jit
def transformer_decoder(tgt, memory, packed):
    """Hot path: just two reshapes and one pallas_call (grid=())."""
    tgt2 = tgt.reshape(N_T, D)
    mem2 = memory.reshape(N_M, D)

    vspec = pl.BlockSpec(memory_space=pltpu.MemorySpace.VMEM)
    out = pl.pallas_call(
        decoder_kernel,
        out_shape=jax.ShapeDtypeStruct((N_T, D), tgt.dtype),
        in_specs=[vspec] * 16,
        out_specs=vspec,
    )(tgt2, mem2,
      packed["self_mask"], packed["cross_mask"],
      packed["hm_t"], packed["hm_m"], packed["ind_t"], packed["ind_m"],
      packed["w_sqkv"], packed["wo_s"], packed["wq_c"], packed["w_ckv"],
      packed["wo_c"], packed["w1"], packed["w2"], packed["vec"])
    return out.reshape(B, S_T, D)


# ---------------- pure-JAX reference (mirrors the torch module) ----------------
def _mha_ref(x_q, x_kv, p, pre, key_padding_mask=None, causal_mask=None):
    q = x_q @ p[f"wq_{pre}"] + p[f"bq_{pre}"]
    k = x_kv @ p[f"wk_{pre}"]                       # k_linear has no bias
    v = x_kv @ p[f"wv_{pre}"] + p[f"bv_{pre}"]
    Bb, Sq, _ = x_q.shape
    Sk = x_kv.shape[1]

    def split(t, S_):
        return t.reshape(Bb, S_, H, HD).transpose(0, 2, 1, 3)

    qh, kh, vh = split(q, Sq), split(k, Sk), split(v, Sk)
    scores = jnp.einsum("bhqd,bhkd->bhqk", qh, kh) / math.sqrt(HD)
    if key_padding_mask is not None:
        scores = scores + key_padding_mask[:, None, None, :]
    if causal_mask is not None:
        scores = scores + causal_mask[None, None, :, :]
    probs = jax.nn.softmax(scores, axis=-1)
    out = jnp.einsum("bhqk,bhkd->bhqd", probs, vh)
    out = out.transpose(0, 2, 1, 3).reshape(Bb, Sq, D)
    return out @ p[f"wo_{pre}"] + p[f"bo_{pre}"]


def _ln_ref(x, g, b):
    mu = jnp.mean(x, axis=-1, keepdims=True)
    var = jnp.mean((x - mu) ** 2, axis=-1, keepdims=True)
    return (x - mu) * lax.rsqrt(var + LN_EPS) * g + b


def reference(tgt, memory, p, tgt_mask, mem_kpm, tgt_kpm):
    x = tgt
    for _ in range(L):   # same params every layer (torch ModuleList aliases one layer)
        sa = _mha_ref(x, x, p, "s", key_padding_mask=tgt_kpm, causal_mask=tgt_mask)
        x = _ln_ref(x + sa, p["g1"], p["be1"])
        ca = _mha_ref(x, memory, p, "c", key_padding_mask=mem_kpm, causal_mask=None)
        x = _ln_ref(x + ca, p["g2"], p["be2"])
        ff = jnp.maximum(x @ p["w1"] + p["b1"], 0.0) @ p["w2"] + p["b2"]
        x = _ln_ref(x + ff, p["g3"], p["be3"])
    return x


def make_params(key):
    ks = jax.random.split(key, 24)
    w = lambda k, shape: (0.08 * jax.random.normal(k, shape)).astype(jnp.float32)
    v = lambda k, n: (0.05 * jax.random.normal(k, (1, n))).astype(jnp.float32)
    it = iter(ks)
    return {
        # self-attention
        "wq_s": w(next(it), (D, D)), "bq_s": v(next(it), D),
        "wk_s": w(next(it), (D, D)),
        "wv_s": w(next(it), (D, D)), "bv_s": v(next(it), D),
        "wo_s": w(next(it), (D, D)), "bo_s": v(next(it), D),
        # cross-attention
        "wq_c": w(next(it), (D, D)), "bq_c": v(next(it), D),
        "wk_c": w(next(it), (D, D)),
        "wv_c": w(next(it), (D, D)), "bv_c": v(next(it), D),
        "wo_c": w(next(it), (D, D)), "bo_c": v(next(it), D),
        # layer norms
        "g1": 1.0 + v(next(it), D), "be1": v(next(it), D),
        "g2": 1.0 + v(next(it), D), "be2": v(next(it), D),
        "g3": 1.0 + v(next(it), D), "be3": v(next(it), D),
        # feed-forward
        "w1": w(next(it), (D, F)), "b1": v(next(it), F),
        "w2": w(next(it), (F, D)), "b2": v(next(it), D),
    }


if __name__ == "__main__":
    key = jax.random.PRNGKey(0)
    k_tgt, k_mem, k_par = jax.random.split(key, 3)

    tgt = jax.random.normal(k_tgt, (B, S_T, D), jnp.float32)
    memory = jax.random.normal(k_mem, (B, S_M, D), jnp.float32)
    params = make_params(k_par)

    # additive masks (0 = keep, -1e9 = mask), matching the torch module's convention
    rows = jnp.arange(S_T)
    causal_mask = jnp.where(rows[:, None] >= rows[None, :], 0.0, NEG).astype(jnp.float32)
    tgt_kpm = jnp.zeros((B, S_T), jnp.float32).at[1, S_T - 2:].set(NEG)
    mem_kpm = jnp.zeros((B, S_M), jnp.float32).at[1, S_M - 3:].set(NEG)

    # one-time packing (weights, bias slab, block-diag masks, indicators) — hoisted
    packed = prepare_params(params, causal_mask, mem_kpm, tgt_kpm)

    out = transformer_decoder(tgt, memory, packed)
    out = jax.block_until_ready(out)

    ref = reference(tgt, memory, params, causal_mask, mem_kpm, tgt_kpm)
    assert out.shape == (B, S_T, D)
    err = float(jnp.max(jnp.abs(out - ref)))
    assert err < 5e-3, f"max abs err {err}"

    print("KERNEL_OK")
</pallas_src>

<mosaic_0001>
module attributes {stable_mosaic.version = 11 : i64} {
  func.func @decoder_kernel(%arg0: memref<16x32xf32, #tpu.memory_space<vmem>>, %arg1: memref<32x32xf32, #tpu.memory_space<vmem>>, %arg2: memref<16x64xf32, #tpu.memory_space<vmem>>, %arg3: memref<16x128xf32, #tpu.memory_space<vmem>>, %arg4: memref<64x32xf32, #tpu.memory_space<vmem>>, %arg5: memref<128x32xf32, #tpu.memory_space<vmem>>, %arg6: memref<64x64xf32, #tpu.memory_space<vmem>>, %arg7: memref<128x128xf32, #tpu.memory_space<vmem>>, %arg8: memref<32x96xf32, #tpu.memory_space<vmem>>, %arg9: memref<32x32xf32, #tpu.memory_space<vmem>>, %arg10: memref<32x32xf32, #tpu.memory_space<vmem>>, %arg11: memref<32x64xf32, #tpu.memory_space<vmem>>, %arg12: memref<32x32xf32, #tpu.memory_space<vmem>>, %arg13: memref<32x64xf32, #tpu.memory_space<vmem>>, %arg14: memref<64x32xf32, #tpu.memory_space<vmem>>, %arg15: memref<13x96xf32, #tpu.memory_space<vmem>>, %arg16: memref<16x32xf32, #tpu.memory_space<vmem>>) attributes {dimension_semantics = [], scalar_prefetch = 0 : i64, scratch_operands = 0 : i64, tpu.core_type = #tpu.core_type<tc>} {
    %c0 = arith.constant 0 : index
    %c0_0 = arith.constant 0 : index
    %0 = vector.load %arg15[%c0, %c0_0] : memref<13x96xf32, #tpu.memory_space<vmem>>, vector<13x96xf32>
    %1 = vector.extract_strided_slice %0 {offsets = [0, 0], sizes = [1, 96], strides = [1, 1]} : vector<13x96xf32> to vector<1x96xf32>
    %2 = vector.extract_strided_slice %0 {offsets = [1, 0], sizes = [1, 64], strides = [1, 1]} : vector<13x96xf32> to vector<1x64xf32>
    %3 = vector.extract_strided_slice %0 {offsets = [2, 0], sizes = [1, 64], strides = [1, 1]} : vector<13x96xf32> to vector<1x64xf32>
    %4 = vector.extract_strided_slice %0 {offsets = [3, 0], sizes = [1, 32], strides = [1, 1]} : vector<13x96xf32> to vector<1x32xf32>
    %5 = vector.extract_strided_slice %0 {offsets = [4, 0], sizes = [1, 32], strides = [1, 1]} : vector<13x96xf32> to vector<1x32xf32>
    %6 = vector.extract_strided_slice %0 {offsets = [5, 0], sizes = [1, 32], strides = [1, 1]} : vector<13x96xf32> to vector<1x32xf32>
    %7 = vector.extract_strided_slice %0 {offsets = [6, 0], sizes = [1, 32], strides = [1, 1]} : vector<13x96xf32> to vector<1x32xf32>
    %8 = vector.extract_strided_slice %0 {offsets = [7, 0], sizes = [1, 32], strides = [1, 1]} : vector<13x96xf32> to vector<1x32xf32>
    %9 = vector.extract_strided_slice %0 {offsets = [8, 0], sizes = [1, 32], strides = [1, 1]} : vector<13x96xf32> to vector<1x32xf32>
    %10 = vector.extract_strided_slice %0 {offsets = [9, 0], sizes = [1, 32], strides = [1, 1]} : vector<13x96xf32> to vector<1x32xf32>
    %11 = vector.extract_strided_slice %0 {offsets = [10, 0], sizes = [1, 32], strides = [1, 1]} : vector<13x96xf32> to vector<1x32xf32>
    %12 = vector.extract_strided_slice %0 {offsets = [11, 0], sizes = [1, 32], strides = [1, 1]} : vector<13x96xf32> to vector<1x32xf32>
    %13 = vector.extract_strided_slice %0 {offsets = [12, 0], sizes = [1, 32], strides = [1, 1]} : vector<13x96xf32> to vector<1x32xf32>
    %c0_1 = arith.constant 0 : index
    %c0_2 = arith.constant 0 : index
    %14 = vector.load %arg0[%c0_1, %c0_2] : memref<16x32xf32, #tpu.memory_space<vmem>>, vector<16x32xf32>
    %c0_3 = arith.constant 0 : index
    %c0_4 = arith.constant 0 : index
    %15 = vector.load %arg1[%c0_3, %c0_4] : memref<32x32xf32, #tpu.memory_space<vmem>>, vector<32x32xf32>
    %c0_5 = arith.constant 0 : index
    %c0_6 = arith.constant 0 : index
    %16 = vector.load %arg2[%c0_5, %c0_6] : memref<16x64xf32, #tpu.memory_space<vmem>>, vector<16x64xf32>
    %c0_7 = arith.constant 0 : index
    %c0_8 = arith.constant 0 : index
    %17 = vector.load %arg3[%c0_7, %c0_8] : memref<16x128xf32, #tpu.memory_space<vmem>>, vector<16x128xf32>
    %c0_9 = arith.constant 0 : index
    %c0_10 = arith.constant 0 : index
    %18 = vector.load %arg4[%c0_9, %c0_10] : memref<64x32xf32, #tpu.memory_space<vmem>>, vector<64x32xf32>
    %c0_11 = arith.constant 0 : index
    %c0_12 = arith.constant 0 : index
    %19 = vector.load %arg5[%c0_11, %c0_12] : memref<128x32xf32, #tpu.memory_space<vmem>>, vector<128x32xf32>
    %c0_13 = arith.constant 0 : index
    %c0_14 = arith.constant 0 : index
    %20 = vector.load %arg6[%c0_13, %c0_14] : memref<64x64xf32, #tpu.memory_space<vmem>>, vector<64x64xf32>
    %c0_15 = arith.constant 0 : index
    %c0_16 = arith.constant 0 : index
    %21 = vector.load %arg7[%c0_15, %c0_16] : memref<128x128xf32, #tpu.memory_space<vmem>>, vector<128x128xf32>
    %c0_17 = arith.constant 0 : index
    %c0_18 = arith.constant 0 : index
    %22 = vector.load %arg8[%c0_17, %c0_18] : memref<32x96xf32, #tpu.memory_space<vmem>>, vector<32x96xf32>
    %c0_19 = arith.constant 0 : index
    %c0_20 = arith.constant 0 : index
    %23 = vector.load %arg9[%c0_19, %c0_20] : memref<32x32xf32, #tpu.memory_space<vmem>>, vector<32x32xf32>
    %c0_21 = arith.constant 0 : index
    %c0_22 = arith.constant 0 : index
    %24 = vector.load %arg10[%c0_21, %c0_22] : memref<32x32xf32, #tpu.memory_space<vmem>>, vector<32x32xf32>
    %c0_23 = arith.constant 0 : index
    %c0_24 = arith.constant 0 : index
    %25 = vector.load %arg12[%c0_23, %c0_24] : memref<32x32xf32, #tpu.memory_space<vmem>>, vector<32x32xf32>
    %c0_25 = arith.constant 0 : index
    %c0_26 = arith.constant 0 : index
    %26 = vector.load %arg13[%c0_25, %c0_26] : memref<32x64xf32, #tpu.memory_space<vmem>>, vector<32x64xf32>
    %c0_27 = arith.constant 0 : index
    %c0_28 = arith.constant 0 : index
    %27 = vector.load %arg14[%c0_27, %c0_28] : memref<64x32xf32, #tpu.memory_space<vmem>>, vector<64x32xf32>
    %c0_29 = arith.constant 0 : index
    %c0_30 = arith.constant 0 : index
    %28 = vector.load %arg11[%c0_29, %c0_30] : memref<32x64xf32, #tpu.memory_space<vmem>>, vector<32x64xf32>
    %cst = arith.constant dense<0.000000e+00> : vector<32x64xf32>
    %29 = tpu.matmul %15, %28, %cst {dimension_numbers = #tpu.dot_dimension_numbers<[1], [0], [0], [1], [0, 0, 1, 1], [], []>} : vector<32x32xf32>, vector<32x64xf32>, vector<32x64xf32> -> vector<32x64xf32>
    %30 = vector.broadcast %2 : vector<1x64xf32> to vector<32x64xf32>
    %31 = arith.addf %29, %30 : vector<32x64xf32>
    %32 = vector.extract_strided_slice %31 {offsets = [0, 0], sizes = [32, 32], strides = [1, 1]} : vector<32x64xf32> to vector<32x32xf32>
    %33 = vector.extract_strided_slice %31 {offsets = [0, 32], sizes = [32, 32], strides = [1, 1]} : vector<32x64xf32> to vector<32x32xf32>
    %34 = tpu.concatenate %32, %32, %32, %32 in 0 : vector<32x32xf32>, vector<32x32xf32>, vector<32x32xf32>, vector<32x32xf32> -> vector<128x32xf32>
    %35 = arith.mulf %34, %19 : vector<128x32xf32>
    %36 = tpu.concatenate %33, %33, %33, %33 in 0 : vector<32x32xf32>, vector<32x32xf32>, vector<32x32xf32>, vector<32x32xf32> -> vector<128x32xf32>
    %37 = arith.mulf %36, %19 : vector<128x32xf32>
    %cst_31 = arith.constant dense<0.000000e+00> : vector<16x96xf32>
    %38 = tpu.matmul %14, %22, %cst_31 {dimension_numbers = #tpu.dot_dimension_numbers<[1], [0], [0], [1], [0, 0, 1, 1], [], []>} : vector<16x32xf32>, vector<32x96xf32>, vector<16x96xf32> -> vector<16x96xf32>
    %39 = vector.broadcast %1 : vector<1x96xf32> to vector<16x96xf32>
    %40 = arith.addf %38, %39 : vector<16x96xf32>
    %41 = vector.extract_strided_slice %40 {offsets = [0, 32], sizes = [16, 32], strides = [1, 1]} : vector<16x96xf32> to vector<16x32xf32>
    %42 = vector.extract_strided_slice %40 {offsets = [0, 64], sizes = [16, 32], strides = [1, 1]} : vector<16x96xf32> to vector<16x32xf32>
    %43 = tpu.concatenate %41, %41, %41, %41 in 0 : vector<16x32xf32>, vector<16x32xf32>, vector<16x32xf32>, vector<16x32xf32> -> vector<64x32xf32>
    %44 = arith.mulf %43, %18 : vector<64x32xf32>
    %45 = tpu.concatenate %42, %42, %42, %42 in 0 : vector<16x32xf32>, vector<16x32xf32>, vector<16x32xf32>, vector<16x32xf32> -> vector<64x32xf32>
    %46 = arith.mulf %45, %18 : vector<64x32xf32>
    %47 = vector.extract_strided_slice %40 {offsets = [0, 0], sizes = [16, 32], strides = [1, 1]} : vector<16x96xf32> to vector<16x32xf32>
    %cst_32 = arith.constant dense<0.000000e+00> : vector<16x64xf32>
    %48 = tpu.matmul %47, %44, %cst_32 {dimension_numbers = #tpu.dot_dimension_numbers<[1], [1], [0], [0], [0, 0, 1, 0], [], []>} : vector<16x32xf32>, vector<64x32xf32>, vector<16x64xf32> -> vector<16x64xf32>
    %49 = arith.addf %48, %16 : vector<16x64xf32>
    %50 = vector.extract_strided_slice %49 {offsets = [0, 0], sizes = [16, 16], strides = [1, 1]} : vector<16x64xf32> to vector<16x16xf32>
    %cst_33 = arith.constant dense<0xFF800000> : vector<16xf32>
    %51 = vector.multi_reduction <maximumf>, %50, %cst_33 [1] : vector<16x16xf32> to vector<16xf32>
    %52 = vector.shape_cast %51 : vector<16xf32> to vector<16x1xf32>
    %53 = vector.shape_cast %52 : vector<16x1xf32> to vector<16x1xf32>
    %54 = vector.broadcast %53 : vector<16x1xf32> to vector<16x16xf32>
    %55 = vector.extract_strided_slice %49 {offsets = [0, 16], sizes = [16, 16], strides = [1, 1]} : vector<16x64xf32> to vector<16x16xf32>
    %cst_34 = arith.constant dense<0xFF800000> : vector<16xf32>
    %56 = vector.multi_reduction <maximumf>, %55, %cst_34 [1] : vector<16x16xf32> to vector<16xf32>
    %57 = vector.shape_cast %56 : vector<16xf32> to vector<16x1xf32>
    %58 = vector.shape_cast %57 : vector<16x1xf32> to vector<16x1xf32>
    %59 = vector.broadcast %58 : vector<16x1xf32> to vector<16x16xf32>
    %60 = vector.extract_strided_slice %49 {offsets = [0, 32], sizes = [16, 16], strides = [1, 1]} : vector<16x64xf32> to vector<16x16xf32>
    %cst_35 = arith.constant dense<0xFF800000> : vector<16xf32>
    %61 = vector.multi_reduction <maximumf>, %60, %cst_35 [1] : vector<16x16xf32> to vector<16xf32>
    %62 = vector.shape_cast %61 : vector<16xf32> to vector<16x1xf32>
    %63 = vector.shape_cast %62 : vector<16x1xf32> to vector<16x1xf32>
    %64 = vector.broadcast %63 : vector<16x1xf32> to vector<16x16xf32>
    %65 = vector.extract_strided_slice %49 {offsets = [0, 48], sizes = [16, 16], strides = [1, 1]} : vector<16x64xf32> to vector<16x16xf32>
    %cst_36 = arith.constant dense<0xFF800000> : vector<16xf32>
    %66 = vector.multi_reduction <maximumf>, %65, %cst_36 [1] : vector<16x16xf32> to vector<16xf32>
    %67 = vector.shape_cast %66 : vector<16xf32> to vector<16x1xf32>
    %68 = vector.shape_cast %67 : vector<16x1xf32> to vector<16x1xf32>
    %69 = vector.broadcast %68 : vector<16x1xf32> to vector<16x16xf32>
    %70 = tpu.concatenate %54, %59, %64, %69 in 1 : vector<16x16xf32>, vector<16x16xf32>, vector<16x16xf32>, vector<16x16xf32> -> vector<16x64xf32>
    %71 = arith.subf %49, %70 : vector<16x64xf32>
    %72 = math.exp %71 : vector<16x64xf32>
    %cst_37 = arith.constant dense<0.000000e+00> : vector<16x64xf32>
    %73 = tpu.matmul %72, %20, %cst_37 {dimension_numbers = #tpu.dot_dimension_numbers<[1], [0], [0], [1], [0, 0, 1, 1], [], []>} : vector<16x64xf32>, vector<64x64xf32>, vector<16x64xf32> -> vector<16x64xf32>
    %74 = tpu.reciprocal %73 {approx = true} : vector<16x64xf32> -> vector<16x64xf32>
    %75 = arith.mulf %73, %74 : vector<16x64xf32>
    %cst_38 = arith.constant 2.000000e+00 : f32
    %76 = vector.broadcast %cst_38 : f32 to vector<16x64xf32>
    %77 = arith.subf %76, %75 : vector<16x64xf32>
    %78 = arith.mulf %74, %77 : vector<16x64xf32>
    %79 = arith.mulf %72, %78 : vector<16x64xf32>
    %cst_39 = arith.constant dense<0.000000e+00> : vector<16x32xf32>
    %80 = tpu.matmul %79, %46, %cst_39 {dimension_numbers = #tpu.dot_dimension_numbers<[1], [0], [0], [1], [0, 0, 1, 1], [], []>} : vector<16x64xf32>, vector<64x32xf32>, vector<16x32xf32> -> vector<16x32xf32>
    %cst_40 = arith.constant dense<0.000000e+00> : vector<16x32xf32>
    %81 = tpu.matmul %80, %23, %cst_40 {dimension_numbers = #tpu.dot_dimension_numbers<[1], [0], [0], [1], [0, 0, 1, 1], [], []>} : vector<16x32xf32>, vector<32x32xf32>, vector<16x32xf32> -> vector<16x32xf32>
    %82 = vector.broadcast %4 : vector<1x32xf32> to vector<16x32xf32>
    %83 = arith.addf %81, %82 : vector<16x32xf32>
    %84 = arith.addf %14, %83 : vector<16x32xf32>
    %cst_41 = arith.constant dense<0.000000e+00> : vector<16xf32>
    %85 = vector.multi_reduction <add>, %84, %cst_41 [1] : vector<16x32xf32> to vector<16xf32>
    %86 = vector.shape_cast %85 : vector<16xf32> to vector<16x1xf32>
    %cst_42 = arith.constant 3.200000e+01 : f32
    %87 = vector.broadcast %cst_42 : f32 to vector<16x1xf32>
    %88 = arith.divf %86, %87 : vector<16x1xf32>
    %89 = vector.broadcast %88 : vector<16x1xf32> to vector<16x32xf32>
    %90 = arith.subf %84, %89 : vector<16x32xf32>
    %91 = arith.mulf %90, %90 : vector<16x32xf32>
    %cst_43 = arith.constant dense<0.000000e+00> : vector<16xf32>
    %92 = vector.multi_reduction <add>, %91, %cst_43 [1] : vector<16x32xf32> to vector<16xf32>
    %93 = vector.shape_cast %92 : vector<16xf32> to vector<16x1xf32>
    %cst_44 = arith.constant 3.200000e+01 : f32
    %94 = vector.broadcast %cst_44 : f32 to vector<16x1xf32>
    %95 = arith.divf %93, %94 : vector<16x1xf32>
    %96 = vector.broadcast %88 : vector<16x1xf32> to vector<16x32xf32>
    %97 = arith.subf %84, %96 : vector<16x32xf32>
    %cst_45 = arith.constant 9.99999974E-6 : f32
    %98 = vector.broadcast %cst_45 : f32 to vector<16x1xf32>
    %99 = arith.addf %95, %98 : vector<16x1xf32>
    %100 = math.rsqrt %99 : vector<16x1xf32>
    %101 = vector.broadcast %100 : vector<16x1xf32> to vector<16x32xf32>
    %102 = arith.mulf %97, %101 : vector<16x32xf32>
    %103 = vector.broadcast %7 : vector<1x32xf32> to vector<16x32xf32>
    %104 = arith.mulf %102, %103 : vector<16x32xf32>
    %105 = vector.broadcast %8 : vector<1x32xf32> to vector<16x32xf32>
    %106 = arith.addf %104, %105 : vector<16x32xf32>
    %cst_46 = arith.constant dense<0.000000e+00> : vector<16x32xf32>
    %107 = tpu.matmul %106, %24, %cst_46 {dimension_numbers = #tpu.dot_dimension_numbers<[1], [0], [0], [1], [0, 0, 1, 1], [], []>} : vector<16x32xf32>, vector<32x32xf32>, vector<16x32xf32> -> vector<16x32xf32>
    %108 = vector.broadcast %5 : vector<1x32xf32> to vector<16x32xf32>
    %109 = arith.addf %107, %108 : vector<16x32xf32>
    %cst_47 = arith.constant dense<0.000000e+00> : vector<16x128xf32>
    %110 = tpu.matmul %109, %35, %cst_47 {dimension_numbers = #tpu.dot_dimension_numbers<[1], [1], [0], [0], [0, 0, 1, 0], [], []>} : vector<16x32xf32>, vector<128x32xf32>, vector<16x128xf32> -> vector<16x128xf32>
    %111 = arith.addf %110, %17 : vector<16x128xf32>
    %112 = vector.extract_strided_slice %111 {offsets = [0, 0], sizes = [16, 32], strides = [1, 1]} : vector<16x128xf32> to vector<16x32xf32>
    %cst_48 = arith.constant dense<0xFF800000> : vector<16xf32>
    %113 = vector.multi_reduction <maximumf>, %112, %cst_48 [1] : vector<16x32xf32> to vector<16xf32>
    %114 = vector.shape_cast %113 : vector<16xf32> to vector<16x1xf32>
    %115 = vector.shape_cast %114 : vector<16x1xf32> to vector<16x1xf32>
    %116 = vector.broadcast %115 : vector<16x1xf32> to vector<16x32xf32>
    %117 = vector.extract_strided_slice %111 {offsets = [0, 32], sizes = [16, 32], strides = [1, 1]} : vector<16x128xf32> to vector<16x32xf32>
    %cst_49 = arith.constant dense<0xFF800000> : vector<16xf32>
    %118 = vector.multi_reduction <maximumf>, %117, %cst_49 [1] : vector<16x32xf32> to vector<16xf32>
    %119 = vector.shape_cast %118 : vector<16xf32> to vector<16x1xf32>
    %120 = vector.shape_cast %119 : vector<16x1xf32> to vector<16x1xf32>
    %121 = vector.broadcast %120 : vector<16x1xf32> to vector<16x32xf32>
    %122 = vector.extract_strided_slice %111 {offsets = [0, 64], sizes = [16, 32], strides = [1, 1]} : vector<16x128xf32> to vector<16x32xf32>
    %cst_50 = arith.constant dense<0xFF800000> : vector<16xf32>
    %123 = vector.multi_reduction <maximumf>, %122, %cst_50 [1] : vector<16x32xf32> to vector<16xf32>
    %124 = vector.shape_cast %123 : vector<16xf32> to vector<16x1xf32>
    %125 = vector.shape_cast %124 : vector<16x1xf32> to vector<16x1xf32>
    %126 = vector.broadcast %125 : vector<16x1xf32> to vector<16x32xf32>
    %127 = vector.extract_strided_slice %111 {offsets = [0, 96], sizes = [16, 32], strides = [1, 1]} : vector<16x128xf32> to vector<16x32xf32>
    %cst_51 = arith.constant dense<0xFF800000> : vector<16xf32>
    %128 = vector.multi_reduction <maximumf>, %127, %cst_51 [1] : vector<16x32xf32> to vector<16xf32>
    %129 = vector.shape_cast %128 : vector<16xf32> to vector<16x1xf32>
    %130 = vector.shape_cast %129 : vector<16x1xf32> to vector<16x1xf32>
    %131 = vector.broadcast %130 : vector<16x1xf32> to vector<16x32xf32>
    %132 = tpu.concatenate %116, %121, %126, %131 in 1 : vector<16x32xf32>, vector<16x32xf32>, vector<16x32xf32>, vector<16x32xf32> -> vector<16x128xf32>
    %133 = arith.subf %111, %132 : vector<16x128xf32>
    %134 = math.exp %133 : vector<16x128xf32>
    %cst_52 = arith.constant dense<0.000000e+00> : vector<16x128xf32>
    %135 = tpu.matmul %134, %21, %cst_52 {dimension_numbers = #tpu.dot_dimension_numbers<[1], [0], [0], [1], [0, 0, 1, 1], [], []>} : vector<16x128xf32>, vector<128x128xf32>, vector<16x128xf32> -> vector<16x128xf32>
    %136 = tpu.reciprocal %135 {approx = true} : vector<16x128xf32> -> vector<16x128xf32>
    %137 = arith.mulf %135, %136 : vector<16x128xf32>
    %cst_53 = arith.constant 2.000000e+00 : f32
    %138 = vector.broadcast %cst_53 : f32 to vector<16x128xf32>
    %139 = arith.subf %138, %137 : vector<16x128xf32>
    %140 = arith.mulf %136, %139 : vector<16x128xf32>
    %141 = arith.mulf %134, %140 : vector<16x128xf32>
    %cst_54 = arith.constant dense<0.000000e+00> : vector<16x32xf32>
    %142 = tpu.matmul %141, %37, %cst_54 {dimension_numbers = #tpu.dot_dimension_numbers<[1], [0], [0], [1], [0, 0, 1, 1], [], []>} : vector<16x128xf32>, vector<128x32xf32>, vector<16x32xf32> -> vector<16x32xf32>
    %cst_55 = arith.constant dense<0.000000e+00> : vector<16x32xf32>
    %143 = tpu.matmul %142, %25, %cst_55 {dimension_numbers = #tpu.dot_dimension_numbers<[1], [0], [0], [1], [0, 0, 1, 1], [], []>} : vector<16x32xf32>, vector<32x32xf32>, vector<16x32xf32> -> vector<16x32xf32>
    %144 = vector.broadcast %6 : vector<1x32xf32> to vector<16x32xf32>
    %145 = arith.addf %143, %144 : vector<16x32xf32>
    %146 = arith.addf %106, %145 : vector<16x32xf32>
    %cst_56 = arith.constant dense<0.000000e+00> : vector<16xf32>
    %147 = vector.multi_reduction <add>, %146, %cst_56 [1] : vector<16x32xf32> to vector<16xf32>
    %148 = vector.shape_cast %147 : vector<16xf32> to vector<16x1xf32>
    %cst_57 = arith.constant 3.200000e+01 : f32
    %149 = vector.broadcast %cst_57 : f32 to vector<16x1xf32>
    %150 = arith.divf %148, %149 : vector<16x1xf32>
    %151 = vector.broadcast %150 : vector<16x1xf32> to vector<16x32xf32>
    %152 = arith.subf %146, %151 : vector<16x32xf32>
    %153 = arith.mulf %152, %152 : vector<16x32xf32>
    %cst_58 = arith.constant dense<0.000000e+00> : vector<16xf32>
    %154 = vector.multi_reduction <add>, %153, %cst_58 [1] : vector<16x32xf32> to vector<16xf32>
    %155 = vector.shape_cast %154 : vector<16xf32> to vector<16x1xf32>
    %cst_59 = arith.constant 3.200000e+01 : f32
    %156 = vector.broadcast %cst_59 : f32 to vector<16x1xf32>
    %157 = arith.divf %155, %156 : vector<16x1xf32>
    %158 = vector.broadcast %150 : vector<16x1xf32> to vector<16x32xf32>
    %159 = arith.subf %146, %158 : vector<16x32xf32>
    %cst_60 = arith.constant 9.99999974E-6 : f32
    %160 = vector.broadcast %cst_60 : f32 to vector<16x1xf32>
    %161 = arith.addf %157, %160 : vector<16x1xf32>
    %162 = math.rsqrt %161 : vector<16x1xf32>
    %163 = vector.broadcast %162 : vector<16x1xf32> to vector<16x32xf32>
    %164 = arith.mulf %159, %163 : vector<16x32xf32>
    %165 = vector.broadcast %9 : vector<1x32xf32> to vector<16x32xf32>
    %166 = arith.mulf %164, %165 : vector<16x32xf32>
    %167 = vector.broadcast %10 : vector<1x32xf32> to vector<16x32xf32>
    %168 = arith.addf %166, %167 : vector<16x32xf32>
    %cst_61 = arith.constant dense<0.000000e+00> : vector<16x64xf32>
    %169 = tpu.matmul %168, %26, %cst_61 {dimension_numbers = #tpu.dot_dimension_numbers<[1], [0], [0], [1], [0, 0, 1, 1], [], []>} : vector<16x32xf32>, vector<32x64xf32>, vector<16x64xf32> -> vector<16x64xf32>
    %170 = vector.broadcast %3 : vector<1x64xf32> to vector<16x64xf32>
    %171 = arith.addf %169, %170 : vector<16x64xf32>
    %cst_62 = arith.constant 0.000000e+00 : f32
    %172 = vector.broadcast %cst_62 : f32 to vector<16x64xf32>
    %173 = arith.maximumf %171, %172 : vector<16x64xf32>
    %cst_63 = arith.constant dense<0.000000e+00> : vector<16x32xf32>
    %174 = tpu.matmul %173, %27, %cst_63 {dimension_numbers = #tpu.dot_dimension_numbers<[1], [0], [0], [1], [0, 0, 1, 1], [], []>} : vector<16x64xf32>, vector<64x32xf32>, vector<16x32xf32> -> vector<16x32xf32>
    %175 = vector.broadcast %13 : vector<1x32xf32> to vector<16x32xf32>
    %176 = arith.addf %174, %175 : vector<16x32xf32>
    %177 = arith.addf %168, %176 : vector<16x32xf32>
    %cst_64 = arith.constant dense<0.000000e+00> : vector<16xf32>
    %178 = vector.multi_reduction <add>, %177, %cst_64 [1] : vector<16x32xf32> to vector<16xf32>
    %179 = vector.shape_cast %178 : vector<16xf32> to vector<16x1xf32>
    %cst_65 = arith.constant 3.200000e+01 : f32
    %180 = vector.broadcast %cst_65 : f32 to vector<16x1xf32>
    %181 = arith.divf %179, %180 : vector<16x1xf32>
    %182 = vector.broadcast %181 : vector<16x1xf32> to vector<16x32xf32>
    %183 = arith.subf %177, %182 : vector<16x32xf32>
    %184 = arith.mulf %183, %183 : vector<16x32xf32>
    %cst_66 = arith.constant dense<0.000000e+00> : vector<16xf32>
    %185 = vector.multi_reduction <add>, %184, %cst_66 [1] : vector<16x32xf32> to vector<16xf32>
    %186 = vector.shape_cast %185 : vector<16xf32> to vector<16x1xf32>
    %cst_67 = arith.constant 3.200000e+01 : f32
    %187 = vector.broadcast %cst_67 : f32 to vector<16x1xf32>
    %188 = arith.divf %186, %187 : vector<16x1xf32>
    %189 = vector.broadcast %181 : vector<16x1xf32> to vector<16x32xf32>
    %190 = arith.subf %177, %189 : vector<16x32xf32>
    %cst_68 = arith.constant 9.99999974E-6 : f32
    %191 = vector.broadcast %cst_68 : f32 to vector<16x1xf32>
    %192 = arith.addf %188, %191 : vector<16x1xf32>
    %193 = math.rsqrt %192 : vector<16x1xf32>
    %194 = vector.broadcast %193 : vector<16x1xf32> to vector<16x32xf32>
    %195 = arith.mulf %190, %194 : vector<16x32xf32>
    %196 = vector.broadcast %11 : vector<1x32xf32> to vector<16x32xf32>
    %197 = arith.mulf %195, %196 : vector<16x32xf32>
    %198 = vector.broadcast %12 : vector<1x32xf32> to vector<16x32xf32>
    %199 = arith.addf %197, %198 : vector<16x32xf32>
    %cst_69 = arith.constant dense<0.000000e+00> : vector<16x96xf32>
    %200 = tpu.matmul %199, %22, %cst_69 {dimension_numbers = #tpu.dot_dimension_numbers<[1], [0], [0], [1], [0, 0, 1, 1], [], []>} : vector<16x32xf32>, vector<32x96xf32>, vector<16x96xf32> -> vector<16x96xf32>
    %201 = vector.broadcast %1 : vector<1x96xf32> to vector<16x96xf32>
    %202 = arith.addf %200, %201 : vector<16x96xf32>
    %203 = vector.extract_strided_slice %202 {offsets = [0, 32], sizes = [16, 32], strides = [1, 1]} : vector<16x96xf32> to vector<16x32xf32>
    %204 = vector.extract_strided_slice %202 {offsets = [0, 64], sizes = [16, 32], strides = [1, 1]} : vector<16x96xf32> to vector<16x32xf32>
    %205 = tpu.concatenate %203, %203, %203, %203 in 0 : vector<16x32xf32>, vector<16x32xf32>, vector<16x32xf32>, vector<16x32xf32> -> vector<64x32xf32>
    %206 = arith.mulf %205, %18 : vector<64x32xf32>
    %207 = tpu.concatenate %204, %204, %204, %204 in 0 : vector<16x32xf32>, vector<16x32xf32>, vector<16x32xf32>, vector<16x32xf32> -> vector<64x32xf32>
    %208 = arith.mulf %207, %18 : vector<64x32xf32>
    %209 = vector.extract_strided_slice %202 {offsets = [0, 0], sizes = [16, 32], strides = [1, 1]} : vector<16x96xf32> to vector<16x32xf32>
    %cst_70 = arith.constant dense<0.000000e+00> : vector<16x64xf32>
    %210 = tpu.matmul %209, %206, %cst_70 {dimension_numbers = #tpu.dot_dimension_numbers<[1], [1], [0], [0], [0, 0, 1, 0], [], []>} : vector<16x32xf32>, vector<64x32xf32>, vector<16x64xf32> -> vector<16x64xf32>
    %211 = arith.addf %210, %16 : vector<16x64xf32>
    %212 = vector.extract_strided_slice %211 {offsets = [0, 0], sizes = [16, 16], strides = [1, 1]} : vector<16x64xf32> to vector<16x16xf32>
    %cst_71 = arith.constant dense<0xFF800000> : vector<16xf32>
    %213 = vector.multi_reduction <maximumf>, %212, %cst_71 [1] : vector<16x16xf32> to vector<16xf32>
    %214 = vector.shape_cast %213 : vector<16xf32> to vector<16x1xf32>
    %215 = vector.shape_cast %214 : vector<16x1xf32> to vector<16x1xf32>
    %216 = vector.broadcast %215 : vector<16x1xf32> to vector<16x16xf32>
    %217 = vector.extract_strided_slice %211 {offsets = [0, 16], sizes = [16, 16], strides = [1, 1]} : vector<16x64xf32> to vector<16x16xf32>
    %cst_72 = arith.constant dense<0xFF800000> : vector<16xf32>
    %218 = vector.multi_reduction <maximumf>, %217, %cst_72 [1] : vector<16x16xf32> to vector<16xf32>
    %219 = vector.shape_cast %218 : vector<16xf32> to vector<16x1xf32>
    %220 = vector.shape_cast %219 : vector<16x1xf32> to vector<16x1xf32>
    %221 = vector.broadcast %220 : vector<16x1xf32> to vector<16x16xf32>
    %222 = vector.extract_strided_slice %211 {offsets = [0, 32], sizes = [16, 16], strides = [1, 1]} : vector<16x64xf32> to vector<16x16xf32>
    %cst_73 = arith.constant dense<0xFF800000> : vector<16xf32>
    %223 = vector.multi_reduction <maximumf>, %222, %cst_73 [1] : vector<16x16xf32> to vector<16xf32>
    %224 = vector.shape_cast %223 : vector<16xf32> to vector<16x1xf32>
    %225 = vector.shape_cast %224 : vector<16x1xf32> to vector<16x1xf32>
    %226 = vector.broadcast %225 : vector<16x1xf32> to vector<16x16xf32>
    %227 = vector.extract_strided_slice %211 {offsets = [0, 48], sizes = [16, 16], strides = [1, 1]} : vector<16x64xf32> to vector<16x16xf32>
    %cst_74 = arith.constant dense<0xFF800000> : vector<16xf32>
    %228 = vector.multi_reduction <maximumf>, %227, %cst_74 [1] : vector<16x16xf32> to vector<16xf32>
    %229 = vector.shape_cast %228 : vector<16xf32> to vector<16x1xf32>
    %230 = vector.shape_cast %229 : vector<16x1xf32> to vector<16x1xf32>
    %231 = vector.broadcast %230 : vector<16x1xf32> to vector<16x16xf32>
    %232 = tpu.concatenate %216, %221, %226, %231 in 1 : vector<16x16xf32>, vector<16x16xf32>, vector<16x16xf32>, vector<16x16xf32> -> vector<16x64xf32>
    %233 = arith.subf %211, %232 : vector<16x64xf32>
    %234 = math.exp %233 : vector<16x64xf32>
    %cst_75 = arith.constant dense<0.000000e+00> : vector<16x64xf32>
    %235 = tpu.matmul %234, %20, %cst_75 {dimension_numbers = #tpu.dot_dimension_numbers<[1], [0], [0], [1], [0, 0, 1, 1], [], []>} : vector<16x64xf32>, vector<64x64xf32>, vector<16x64xf32> -> vector<16x64xf32>
    %236 = tpu.reciprocal %235 {approx = true} : vector<16x64xf32> -> vector<16x64xf32>
    %237 = arith.mulf %235, %236 : vector<16x64xf32>
    %cst_76 = arith.constant 2.000000e+00 : f32
    %238 = vector.broadcast %cst_76 : f32 to vector<16x64xf32>
    %239 = arith.subf %238, %237 : vector<16x64xf32>
    %240 = arith.mulf %236, %239 : vector<16x64xf32>
    %241 = arith.mulf %234, %240 : vector<16x64xf32>
    %cst_77 = arith.constant dense<0.000000e+00> : vector<16x32xf32>
    %242 = tpu.matmul %241, %208, %cst_77 {dimension_numbers = #tpu.dot_dimension_numbers<[1], [0], [0], [1], [0, 0, 1, 1], [], []>} : vector<16x64xf32>, vector<64x32xf32>, vector<16x32xf32> -> vector<16x32xf32>
    %cst_78 = arith.constant dense<0.000000e+00> : vector<16x32xf32>
    %243 = tpu.matmul %242, %23, %cst_78 {dimension_numbers = #tpu.dot_dimension_numbers<[1], [0], [0], [1], [0, 0, 1, 1], [], []>} : vector<16x32xf32>, vector<32x32xf32>, vector<16x32xf32> -> vector<16x32xf32>
    %244 = vector.broadcast %4 : vector<1x32xf32> to vector<16x32xf32>
    %245 = arith.addf %243, %244 : vector<16x32xf32>
    %246 = arith.addf %199, %245 : vector<16x32xf32>
    %cst_79 = arith.constant dense<0.000000e+00> : vector<16xf32>
    %247 = vector.multi_reduction <add>, %246, %cst_79 [1] : vector<16x32xf32> to vector<16xf32>
    %248 = vector.shape_cast %247 : vector<16xf32> to vector<16x1xf32>
    %cst_80 = arith.constant 3.200000e+01 : f32
    %249 = vector.broadcast %cst_80 : f32 to vector<16x1xf32>
    %250 = arith.divf %248, %249 : vector<16x1xf32>
    %251 = vector.broadcast %250 : vector<16x1xf32> to vector<16x32xf32>
    %252 = arith.subf %246, %251 : vector<16x32xf32>
    %253 = arith.mulf %252, %252 : vector<16x32xf32>
    %cst_81 = arith.constant dense<0.000000e+00> : vector<16xf32>
    %254 = vector.multi_reduction <add>, %253, %cst_81 [1] : vector<16x32xf32> to vector<16xf32>
    %255 = vector.shape_cast %254 : vector<16xf32> to vector<16x1xf32>
    %cst_82 = arith.constant 3.200000e+01 : f32
    %256 = vector.broadcast %cst_82 : f32 to vector<16x1xf32>
    %257 = arith.divf %255, %256 : vector<16x1xf32>
    %258 = vector.broadcast %250 : vector<16x1xf32> to vector<16x32xf32>
    %259 = arith.subf %246, %258 : vector<16x32xf32>
    %cst_83 = arith.constant 9.99999974E-6 : f32
    %260 = vector.broadcast %cst_83 : f32 to vector<16x1xf32>
    %261 = arith.addf %257, %260 : vector<16x1xf32>
    %262 = math.rsqrt %261 : vector<16x1xf32>
    %263 = vector.broadcast %262 : vector<16x1xf32> to vector<16x32xf32>
    %264 = arith.mulf %259, %263 : vector<16x32xf32>
    %265 = vector.broadcast %7 : vector<1x32xf32> to vector<16x32xf32>
    %266 = arith.mulf %264, %265 : vector<16x32xf32>
    %267 = vector.broadcast %8 : vector<1x32xf32> to vector<16x32xf32>
    %268 = arith.addf %266, %267 : vector<16x32xf32>
    %cst_84 = arith.constant dense<0.000000e+00> : vector<16x32xf32>
    %269 = tpu.matmul %268, %24, %cst_84 {dimension_numbers = #tpu.dot_dimension_numbers<[1], [0], [0], [1], [0, 0, 1, 1], [], []>} : vector<16x32xf32>, vector<32x32xf32>, vector<16x32xf32> -> vector<16x32xf32>
    %270 = vector.broadcast %5 : vector<1x32xf32> to vector<16x32xf32>
    %271 = arith.addf %269, %270 : vector<16x32xf32>
    %cst_85 = arith.constant dense<0.000000e+00> : vector<16x128xf32>
    %272 = tpu.matmul %271, %35, %cst_85 {dimension_numbers = #tpu.dot_dimension_numbers<[1], [1], [0], [0], [0, 0, 1, 0], [], []>} : vector<16x32xf32>, vector<128x32xf32>, vector<16x128xf32> -> vector<16x128xf32>
    %273 = arith.addf %272, %17 : vector<16x128xf32>
    %274 = vector.extract_strided_slice %273 {offsets = [0, 0], sizes = [16, 32], strides = [1, 1]} : vector<16x128xf32> to vector<16x32xf32>
    %cst_86 = arith.constant dense<0xFF800000> : vector<16xf32>
    %275 = vector.multi_reduction <maximumf>, %274, %cst_86 [1] : vector<16x32xf32> to vector<16xf32>
    %276 = vector.shape_cast %275 : vector<16xf32> to vector<16x1xf32>
    %277 = vector.shape_cast %276 : vector<16x1xf32> to vector<16x1xf32>
    %278 = vector.broadcast %277 : vector<16x1xf32> to vector<16x32xf32>
    %279 = vector.extract_strided_slice %273 {offsets = [0, 32], sizes = [16, 32], strides = [1, 1]} : vector<16x128xf32> to vector<16x32xf32>
    %cst_87 = arith.constant dense<0xFF800000> : vector<16xf32>
    %280 = vector.multi_reduction <maximumf>, %279, %cst_87 [1] : vector<16x32xf32> to vector<16xf32>
    %281 = vector.shape_cast %280 : vector<16xf32> to vector<16x1xf32>
    %282 = vector.shape_cast %281 : vector<16x1xf32> to vector<16x1xf32>
    %283 = vector.broadcast %282 : vector<16x1xf32> to vector<16x32xf32>
    %284 = vector.extract_strided_slice %273 {offsets = [0, 64], sizes = [16, 32], strides = [1, 1]} : vector<16x128xf32> to vector<16x32xf32>
    %cst_88 = arith.constant dense<0xFF800000> : vector<16xf32>
    %285 = vector.multi_reduction <maximumf>, %284, %cst_88 [1] : vector<16x32xf32> to vector<16xf32>
    %286 = vector.shape_cast %285 : vector<16xf32> to vector<16x1xf32>
    %287 = vector.shape_cast %286 : vector<16x1xf32> to vector<16x1xf32>
    %288 = vector.broadcast %287 : vector<16x1xf32> to vector<16x32xf32>
    %289 = vector.extract_strided_slice %273 {offsets = [0, 96], sizes = [16, 32], strides = [1, 1]} : vector<16x128xf32> to vector<16x32xf32>
    %cst_89 = arith.constant dense<0xFF800000> : vector<16xf32>
    %290 = vector.multi_reduction <maximumf>, %289, %cst_89 [1] : vector<16x32xf32> to vector<16xf32>
    %291 = vector.shape_cast %290 : vector<16xf32> to vector<16x1xf32>
    %292 = vector.shape_cast %291 : vector<16x1xf32> to vector<16x1xf32>
    %293 = vector.broadcast %292 : vector<16x1xf32> to vector<16x32xf32>
    %294 = tpu.concatenate %278, %283, %288, %293 in 1 : vector<16x32xf32>, vector<16x32xf32>, vector<16x32xf32>, vector<16x32xf32> -> vector<16x128xf32>
    %295 = arith.subf %273, %294 : vector<16x128xf32>
    %296 = math.exp %295 : vector<16x128xf32>
    %cst_90 = arith.constant dense<0.000000e+00> : vector<16x128xf32>
    %297 = tpu.matmul %296, %21, %cst_90 {dimension_numbers = #tpu.dot_dimension_numbers<[1], [0], [0], [1], [0, 0, 1, 1], [], []>} : vector<16x128xf32>, vector<128x128xf32>, vector<16x128xf32> -> vector<16x128xf32>
    %298 = tpu.reciprocal %297 {approx = true} : vector<16x128xf32> -> vector<16x128xf32>
    %299 = arith.mulf %297, %298 : vector<16x128xf32>
    %cst_91 = arith.constant 2.000000e+00 : f32
    %300 = vector.broadcast %cst_91 : f32 to vector<16x128xf32>
    %301 = arith.subf %300, %299 : vector<16x128xf32>
    %302 = arith.mulf %298, %301 : vector<16x128xf32>
    %303 = arith.mulf %296, %302 : vector<16x128xf32>
    %cst_92 = arith.constant dense<0.000000e+00> : vector<16x32xf32>
    %304 = tpu.matmul %303, %37, %cst_92 {dimension_numbers = #tpu.dot_dimension_numbers<[1], [0], [0], [1], [0, 0, 1, 1], [], []>} : vector<16x128xf32>, vector<128x32xf32>, vector<16x32xf32> -> vector<16x32xf32>
    %cst_93 = arith.constant dense<0.000000e+00> : vector<16x32xf32>
    %305 = tpu.matmul %304, %25, %cst_93 {dimension_numbers = #tpu.dot_dimension_numbers<[1], [0], [0], [1], [0, 0, 1, 1], [], []>} : vector<16x32xf32>, vector<32x32xf32>, vector<16x32xf32> -> vector<16x32xf32>
    %306 = vector.broadcast %6 : vector<1x32xf32> to vector<16x32xf32>
    %307 = arith.addf %305, %306 : vector<16x32xf32>
    %308 = arith.addf %268, %307 : vector<16x32xf32>
    %cst_94 = arith.constant dense<0.000000e+00> : vector<16xf32>
    %309 = vector.multi_reduction <add>, %308, %cst_94 [1] : vector<16x32xf32> to vector<16xf32>
    %310 = vector.shape_cast %309 : vector<16xf32> to vector<16x1xf32>
    %cst_95 = arith.constant 3.200000e+01 : f32
    %311 = vector.broadcast %cst_95 : f32 to vector<16x1xf32>
    %312 = arith.divf %310, %311 : vector<16x1xf32>
    %313 = vector.broadcast %312 : vector<16x1xf32> to vector<16x32xf32>
    %314 = arith.subf %308, %313 : vector<16x32xf32>
    %315 = arith.mulf %314, %314 : vector<16x32xf32>
    %cst_96 = arith.constant dense<0.000000e+00> : vector<16xf32>
    %316 = vector.multi_reduction <add>, %315, %cst_96 [1] : vector<16x32xf32> to vector<16xf32>
    %317 = vector.shape_cast %316 : vector<16xf32> to vector<16x1xf32>
    %cst_97 = arith.constant 3.200000e+01 : f32
    %318 = vector.broadcast %cst_97 : f32 to vector<16x1xf32>
    %319 = arith.divf %317, %318 : vector<16x1xf32>
    %320 = vector.broadcast %312 : vector<16x1xf32> to vector<16x32xf32>
    %321 = arith.subf %308, %320 : vector<16x32xf32>
    %cst_98 = arith.constant 9.99999974E-6 : f32
    %322 = vector.broadcast %cst_98 : f32 to vector<16x1xf32>
    %323 = arith.addf %319, %322 : vector<16x1xf32>
    %324 = math.rsqrt %323 : vector<16x1xf32>
    %325 = vector.broadcast %324 : vector<16x1xf32> to vector<16x32xf32>
    %326 = arith.mulf %321, %325 : vector<16x32xf32>
    %327 = vector.broadcast %9 : vector<1x32xf32> to vector<16x32xf32>
    %328 = arith.mulf %326, %327 : vector<16x32xf32>
    %329 = vector.broadcast %10 : vector<1x32xf32> to vector<16x32xf32>
    %330 = arith.addf %328, %329 : vector<16x32xf32>
    %cst_99 = arith.constant dense<0.000000e+00> : vector<16x64xf32>
    %331 = tpu.matmul %330, %26, %cst_99 {dimension_numbers = #tpu.dot_dimension_numbers<[1], [0], [0], [1], [0, 0, 1, 1], [], []>} : vector<16x32xf32>, vector<32x64xf32>, vector<16x64xf32> -> vector<16x64xf32>
    %332 = vector.broadcast %3 : vector<1x64xf32> to vector<16x64xf32>
    %333 = arith.addf %331, %332 : vector<16x64xf32>
    %cst_100 = arith.constant 0.000000e+00 : f32
    %334 = vector.broadcast %cst_100 : f32 to vector<16x64xf32>
    %335 = arith.maximumf %333, %334 : vector<16x64xf32>
    %cst_101 = arith.constant dense<0.000000e+00> : vector<16x32xf32>
    %336 = tpu.matmul %335, %27, %cst_101 {dimension_numbers = #tpu.dot_dimension_numbers<[1], [0], [0], [1], [0, 0, 1, 1], [], []>} : vector<16x64xf32>, vector<64x32xf32>, vector<16x32xf32> -> vector<16x32xf32>
    %337 = vector.broadcast %13 : vector<1x32xf32> to vector<16x32xf32>
    %338 = arith.addf %336, %337 : vector<16x32xf32>
    %339 = arith.addf %330, %338 : vector<16x32xf32>
    %cst_102 = arith.constant dense<0.000000e+00> : vector<16xf32>
    %340 = vector.multi_reduction <add>, %339, %cst_102 [1] : vector<16x32xf32> to vector<16xf32>
    %341 = vector.shape_cast %340 : vector<16xf32> to vector<16x1xf32>
    %cst_103 = arith.constant 3.200000e+01 : f32
    %342 = vector.broadcast %cst_103 : f32 to vector<16x1xf32>
    %343 = arith.divf %341, %342 : vector<16x1xf32>
    %344 = vector.broadcast %343 : vector<16x1xf32> to vector<16x32xf32>
    %345 = arith.subf %339, %344 : vector<16x32xf32>
    %346 = arith.mulf %345, %345 : vector<16x32xf32>
    %cst_104 = arith.constant dense<0.000000e+00> : vector<16xf32>
    %347 = vector.multi_reduction <add>, %346, %cst_104 [1] : vector<16x32xf32> to vector<16xf32>
    %348 = vector.shape_cast %347 : vector<16xf32> to vector<16x1xf32>
    %cst_105 = arith.constant 3.200000e+01 : f32
    %349 = vector.broadcast %cst_105 : f32 to vector<16x1xf32>
    %350 = arith.divf %348, %349 : vector<16x1xf32>
    %351 = vector.broadcast %343 : vector<16x1xf32> to vector<16x32xf32>
    %352 = arith.subf %339, %351 : vector<16x32xf32>
    %cst_106 = arith.constant 9.99999974E-6 : f32
    %353 = vector.broadcast %cst_106 : f32 to vector<16x1xf32>
    %354 = arith.addf %350, %353 : vector<16x1xf32>
    %355 = math.rsqrt %354 : vector<16x1xf32>
    %356 = vector.broadcast %355 : vector<16x1xf32> to vector<16x32xf32>
    %357 = arith.mulf %352, %356 : vector<16x32xf32>
    %358 = vector.broadcast %11 : vector<1x32xf32> to vector<16x32xf32>
    %359 = arith.mulf %357, %358 : vector<16x32xf32>
    %360 = vector.broadcast %12 : vector<1x32xf32> to vector<16x32xf32>
    %361 = arith.addf %359, %360 : vector<16x32xf32>
    %c0_107 = arith.constant 0 : index
    %c0_108 = arith.constant 0 : index
    %362 = vector.load %arg16[%c0_107, %c0_108] : memref<16x32xf32, #tpu.memory_space<vmem>>, vector<16x32xf32>
    tpu.vector_store %arg16[%c0_107, %c0_108], %361 {strides = array<i32>} : memref<16x32xf32, #tpu.memory_space<vmem>>, vector<16x32xf32>,
    return
  }
}

</mosaic_0001>

<llo_original>
// kernel: transformer_decoder.1
$region0: #{transformer_decoder.1}
  #allocation0 [shape = 'u32[]', space=smem, size = 0x4, offset = 0x4, fixed_abs, tag = 'smem constant byte address 0x4 - core index']
  #allocation1 [shape = 'u32[144,128]{1,0:T(1,128)}', space=vmem, size = 0x12000, scoped, tag = 'internal scratch']
  %s0 = inlined_call_operand.hbm [shape: f32[16,32], index: 0, kind: input, shape index: {}]
  %s1 = inlined_call_operand.vmem [shape: f32[32,32], index: 1, kind: input, shape index: {}]
  %s2 = inlined_call_operand.hbm [shape: f32[16,64], index: 2, kind: input, shape index: {}]
  %s3 = inlined_call_operand.hbm [shape: f32[16,128], index: 3, kind: input, shape index: {}]
  %s4 = inlined_call_operand.vmem [shape: f32[64,32], index: 4, kind: input, shape index: {}]
  %s5 = inlined_call_operand.vmem [shape: f32[128,32], index: 5, kind: input, shape index: {}]
  %s6 = inlined_call_operand.vmem [shape: f32[64,64], index: 6, kind: input, shape index: {}]
  %s7 = inlined_call_operand.vmem [shape: f32[128,128], index: 7, kind: input, shape index: {}]
  %s8 = inlined_call_operand.vmem [shape: f32[32,96], index: 8, kind: input, shape index: {}]
  %s9 = inlined_call_operand.vmem [shape: f32[32,32], index: 9, kind: input, shape index: {}]
  %s10 = inlined_call_operand.vmem [shape: f32[32,32], index: 10, kind: input, shape index: {}]
  %s11 = inlined_call_operand.hbm [shape: f32[32,64], index: 11, kind: input, shape index: {}]
  %s12 = inlined_call_operand.hbm [shape: f32[32,32], index: 12, kind: input, shape index: {}]
  %s13 = inlined_call_operand.hbm [shape: f32[32,64], index: 13, kind: input, shape index: {}]
  %s14 = inlined_call_operand.vmem [shape: f32[64,32], index: 14, kind: input, shape index: {}]
  %s15 = inlined_call_operand.hbm [shape: f32[13,96], index: 15, kind: input, shape index: {}]
  %s16 = inlined_call_operand.hbm [shape: f32[16,32], index: 16, kind: output, shape index: {}]
  %s17 = sld [smem:[#allocation0]]
  $region102: #{transformer_decoder.1} parent=0
    _
  %s19 = ssub.s32 1, %s17
  %s20 = scalar_select 0, %s19, %s17
  $region1: #{transformer_decoder.1} parent=0
    #allocation2 [shape = 'u8[8192]{0}', space=vmem, size = 0x2000, scoped, tag = 'input window, operand 0, single buffered']
    #allocation3 [shape = 's32[1]{0}', space=sflag, size = 0x4, scoped, tag = 'scoped memory for transformer_decoder.1']
    #allocation4 [shape = 's32[1]{0}', space=sflag, size = 0x4, scoped, tag = 'scoped memory for transformer_decoder.1']
    #allocation5 [shape = 'u8[8192]{0}', space=vmem, size = 0x2000, scoped, tag = 'input window, operand 2, single buffered']
    #allocation6 [shape = 's32[1]{0}', space=sflag, size = 0x4, scoped, tag = 'scoped memory for transformer_decoder.1']
    #allocation7 [shape = 'u8[8192]{0}', space=vmem, size = 0x2000, scoped, tag = 'input window, operand 3, single buffered']
    #allocation8 [shape = 'u8[16384]{0}', space=vmem, size = 0x4000, scoped, tag = 'input window, operand 11, single buffered']
    #allocation9 [shape = 's32[1]{0}', space=sflag, size = 0x4, scoped, tag = 'scoped memory for transformer_decoder.1']
    #allocation10 [shape = 'u8[16384]{0}', space=vmem, size = 0x4000, scoped, tag = 'input window, operand 12, single buffered']
    #allocation11 [shape = 'u8[16384]{0}', space=vmem, size = 0x4000, scoped, tag = 'input window, operand 13, single buffered']
    #allocation12 [shape = 's32[1]{0}', space=sflag, size = 0x4, scoped, tag = 'scoped memory for transformer_decoder.1']
    #allocation13 [shape = 'u8[8192]{0}', space=vmem, size = 0x2000, scoped, tag = 'input window, operand 15, single buffered']
    #allocation14 [shape = 'u8[8192]{0}', space=vmem, size = 0x2000, scoped, tag = 'output window, operand 0, single buffered']
    %21 = vsyncpa [#allocation3], 0
    %22 = vsyncpa [#allocation6], 0
    %23 = vsyncpa [#allocation9], 0
    %24 = vsyncpa [#allocation12], 0
    %25 = vsyncpa [#allocation4], 0
    // Predicated region
    $region2: #{transformer_decoder.1} parent=1 // pred_check
      _
    $region3: #{transformer_decoder.1} parent=1 // pred_check_branch
      %27 = sbr.rel (0) target = $region5
    $region4: #{transformer_decoder.1} parent=1 // pred_region
      %s29 = ssub.s32 256, 256
      %30 = vsyncadd [#allocation3], %s29
      %s31 = sshll.u32 [#allocation2], 4
      %s32 = int_to_ptr.vmem [resolvable:$true] %s31
      %37 = dma.hbm_to_vmem [thread:$0]  %s0, 256, %s32, [#allocation3], 128, 128, 8
    $region5: #{transformer_decoder.1} parent=1 // pred_fallthru
      _
    // Predicated region
    $region6: #{transformer_decoder.1} parent=1 // pred_check
      _
    $region7: #{transformer_decoder.1} parent=1 // pred_check_branch
      %39 = sbr.rel (0) target = $region9
    $region8: #{transformer_decoder.1} parent=1 // pred_region
      _
    $region9: #{transformer_decoder.1} parent=1 // pred_fallthru
      _
    // Predicated region
    $region10: #{transformer_decoder.1} parent=1 // pred_check
      _
    $region11: #{transformer_decoder.1} parent=1 // pred_check_branch
      %41 = sbr.rel (0) target = $region13
    $region12: #{transformer_decoder.1} parent=1 // pred_region
      %s43 = ssub.s32 256, 256
      %44 = vsyncadd [#allocation6], %s43
      %s45 = sshll.u32 [#allocation5], 4
      %s46 = int_to_ptr.vmem [resolvable:$true] %s45
      %51 = dma.hbm_to_vmem [thread:$0]  %s2, 256, %s46, [#allocation6], 128, 128, 8
    $region13: #{transformer_decoder.1} parent=1 // pred_fallthru
      _
    // Predicated region
    $region14: #{transformer_decoder.1} parent=1 // pred_check
      _
    $region15: #{transformer_decoder.1} parent=1 // pred_check_branch
      %53 = sbr.rel (0) target = $region17
    $region16: #{transformer_decoder.1} parent=1 // pred_region
      %s55 = ssub.s32 256, 256
      %56 = vsyncadd [#allocation6], %s55
      %s57 = sshll.u32 [#allocation7], 4
      %s58 = int_to_ptr.vmem [resolvable:$true] %s57
      %63 = dma.hbm_to_vmem [thread:$0]  %s3, 256, %s58, [#allocation6], 128, 128, 8
    $region17: #{transformer_decoder.1} parent=1 // pred_fallthru
      _
    // Predicated region
    $region18: #{transformer_decoder.1} parent=1 // pred_check
      _
    $region19: #{transformer_decoder.1} parent=1 // pred_check_branch
      %65 = sbr.rel (0) target = $region21
    $region20: #{transformer_decoder.1} parent=1 // pred_region
      _
    $region21: #{transformer_decoder.1} parent=1 // pred_fallthru
      _
    // Predicated region
    $region22: #{transformer_decoder.1} parent=1 // pred_check
      _
    $region23: #{transformer_decoder.1} parent=1 // pred_check_branch
      %67 = sbr.rel (0) target = $region25
    $region24: #{transformer_decoder.1} parent=1 // pred_region
      _
    $region25: #{transformer_decoder.1} parent=1 // pred_fallthru
      _
    // Predicated region
    $region26: #{transformer_decoder.1} parent=1 // pred_check
      _
    $region27: #{transformer_decoder.1} parent=1 // pred_check_branch
      %69 = sbr.rel (0) target = $region29
    $region28: #{transformer_decoder.1} parent=1 // pred_region
      _
    $region29: #{transformer_decoder.1} parent=1 // pred_fallthru
      _
    // Predicated region
    $region30: #{transformer_decoder.1} parent=1 // pred_check
      _
    $region31: #{transformer_decoder.1} parent=1 // pred_check_branch
      %71 = sbr.rel (0) target = $region33
    $region32: #{transformer_decoder.1} parent=1 // pred_region
      _
    $region33: #{transformer_decoder.1} parent=1 // pred_fallthru
      _
    // Predicated region
    $region34: #{transformer_decoder.1} parent=1 // pred_check
      _
    $region35: #{transformer_decoder.1} parent=1 // pred_check_branch
      %73 = sbr.rel (0) target = $region37
    $region36: #{transformer_decoder.1} parent=1 // pred_region
      _
    $region37: #{transformer_decoder.1} parent=1 // pred_fallthru
      _
    // Predicated region
    $region38: #{transformer_decoder.1} parent=1 // pred_check
      _
    $region39: #{transformer_decoder.1} parent=1 // pred_check_branch
      %75 = sbr.rel (0) target = $region41
    $region40: #{transformer_decoder.1} parent=1 // pred_region
      _
    $region41: #{transformer_decoder.1} parent=1 // pred_fallthru
      _
    // Predicated region
    $region42: #{transformer_decoder.1} parent=1 // pred_check
      _
    $region43: #{transformer_decoder.1} parent=1 // pred_check_branch
      %77 = sbr.rel (0) target = $region45
    $region44: #{transformer_decoder.1} parent=1 // pred_region
      _
    $region45: #{transformer_decoder.1} parent=1 // pred_fallthru
      _
    // Predicated region
    $region46: #{transformer_decoder.1} parent=1 // pred_check
      _
    $region47: #{transformer_decoder.1} parent=1 // pred_check_branch
      %79 = sbr.rel (0) target = $region49
    $region48: #{transformer_decoder.1} parent=1 // pred_region
      %s81 = ssub.s32 512, 512
      %82 = vsyncadd [#allocation9], %s81
      %s83 = sshll.u32 [#allocation8], 4
      %s84 = int_to_ptr.vmem [resolvable:$true] %s83
      %89 = dma.hbm_to_vmem [thread:$0]  %s11, 512, %s84, [#allocation9], 128, 128, 8
    $region49: #{transformer_decoder.1} parent=1 // pred_fallthru
      _
    // Predicated region
    $region50: #{transformer_decoder.1} parent=1 // pred_check
      _
    $region51: #{transformer_decoder.1} parent=1 // pred_check_branch
      %91 = sbr.rel (0) target = $region53
    $region52: #{transformer_decoder.1} parent=1 // pred_region
      %s93 = ssub.s32 512, 512
      %94 = vsyncadd [#allocation9], %s93
      %s95 = sshll.u32 [#allocation10], 4
      %s96 = int_to_ptr.vmem [resolvable:$true] %s95
      %101 = dma.hbm_to_vmem [thread:$0]  %s12, 512, %s96, [#allocation9], 128, 128, 8
    $region53: #{transformer_decoder.1} parent=1 // pred_fallthru
      _
    // Predicated region
    $region54: #{transformer_decoder.1} parent=1 // pred_check
      _
    $region55: #{transformer_decoder.1} parent=1 // pred_check_branch
      %103 = sbr.rel (0) target = $region57
    $region56: #{transformer_decoder.1} parent=1 // pred_region
      %s105 = ssub.s32 512, 512
      %106 = vsyncadd [#allocation12], %s105
      %s107 = sshll.u32 [#allocation11], 4
      %s108 = int_to_ptr.vmem [resolvable:$true] %s107
      %113 = dma.hbm_to_vmem [thread:$0]  %s13, 512, %s108, [#allocation12], 128, 128, 8
    $region57: #{transformer_decoder.1} parent=1 // pred_fallthru
      _
    // Predicated region
    $region58: #{transformer_decoder.1} parent=1 // pred_check
      _
    $region59: #{transformer_decoder.1} parent=1 // pred_check_branch
      %115 = sbr.rel (0) target = $region61
    $region60: #{transformer_decoder.1} parent=1 // pred_region
      _
    $region61: #{transformer_decoder.1} parent=1 // pred_fallthru
      _
    // Predicated region
    $region62: #{transformer_decoder.1} parent=1 // pred_check
      _
    $region63: #{transformer_decoder.1} parent=1 // pred_check_branch
      %117 = sbr.rel (0) target = $region65
    $region64: #{transformer_decoder.1} parent=1 // pred_region
      %s119 = ssub.s32 256, 256
      %120 = vsyncadd [#allocation12], %s119
      %s121 = sshll.u32 [#allocation13], 4
      %s122 = int_to_ptr.vmem [resolvable:$true] %s121
      %127 = dma.hbm_to_vmem [thread:$0]  %s15, 256, %s122, [#allocation12], 128, 128, 8
    $region65: #{transformer_decoder.1} parent=1 // pred_fallthru
      _
    // Predicated region
    $region66: #{transformer_decoder.1} parent=1 // pred_check
      _
    $region67: #{transformer_decoder.1} parent=1 // pred_check_branch
      %129 = sbr.rel (0) target = $region69
    $region68: #{transformer_decoder.1} parent=1 // pred_region
      %130 = dma.done [#allocation3], 256
    $region69: #{transformer_decoder.1} parent=1 // pred_fallthru
      _
    // Predicated region
    $region70: #{transformer_decoder.1} parent=1 // pred_check
      _
    $region71: #{transformer_decoder.1} parent=1 // pred_check_branch
      %132 = sbr.rel (0) target = $region73
    $region72: #{transformer_decoder.1} parent=1 // pred_region
      %133 = dma.done [#allocation6], 256
    $region73: #{transformer_decoder.1} parent=1 // pred_fallthru
      _
    // Predicated region
    $region74: #{transformer_decoder.1} parent=1 // pred_check
      _
    $region75: #{transformer_decoder.1} parent=1 // pred_check_branch
      %135 = sbr.rel (0) target = $region77
    $region76: #{transformer_decoder.1} parent=1 // pred_region
      %136 = dma.done [#allocation6], 256
    $region77: #{transformer_decoder.1} parent=1 // pred_fallthru
      _
    // Predicated region
    $region78: #{transformer_decoder.1} parent=1 // pred_check
      _
    $region79: #{transformer_decoder.1} parent=1 // pred_check_branch
      %138 = sbr.rel (0) target = $region81
    $region80: #{transformer_decoder.1} parent=1 // pred_region
      %139 = dma.done [#allocation9], 512
    $region81: #{transformer_decoder.1} parent=1 // pred_fallthru
      _
    // Predicated region
    $region82: #{transformer_decoder.1} parent=1 // pred_check
      _
    $region83: #{transformer_decoder.1} parent=1 // pred_check_branch
      %141 = sbr.rel (0) target = $region85
    $region84: #{transformer_decoder.1} parent=1 // pred_region
      %142 = dma.done [#allocation9], 512
    $region85: #{transformer_decoder.1} parent=1 // pred_fallthru
      _
    // Predicated region
    $region86: #{transformer_decoder.1} parent=1 // pred_check
      _
    $region87: #{transformer_decoder.1} parent=1 // pred_check_branch
      %144 = sbr.rel (0) target = $region89
    $region88: #{transformer_decoder.1} parent=1 // pred_region
      %145 = dma.done [#allocation12], 512
    $region89: #{transformer_decoder.1} parent=1 // pred_fallthru
      _
    // Predicated region
    $region90: #{transformer_decoder.1} parent=1 // pred_check
      _
    $region91: #{transformer_decoder.1} parent=1 // pred_check_branch
      %147 = sbr.rel (0) target = $region93
    $region92: #{transformer_decoder.1} parent=1 // pred_region
      %148 = dma.done [#allocation12], 256
    $region93: #{transformer_decoder.1} parent=1 // pred_fallthru
      _
    %v149 = vld [vmem:[#allocation13] sm:$0xff]
    %v150 = vld [vmem:[#allocation13 + $0x8] sm:$0x1f]
    %v151 = vld [vmem:[#allocation2] sm:$0xff]
    %v152 = vld [vmem:[#allocation2 + $0x8] sm:$0xff]
    %v153 = vld [vmem:[%s1] sm:$0xff]
    %v154 = vld [vmem:[%s1 + $0x8] sm:$0xff]
    %v155 = vld [vmem:[%s1 + $0x10] sm:$0xff]
    %v156 = vld [vmem:[%s1 + $0x18] sm:$0xff]
    %v157 = vld [vmem:[#allocation5] sm:$0xff]
    %v158 = vld [vmem:[#allocation5 + $0x8] sm:$0xff]
    %v159 = vld [vmem:[#allocation7] sm:$0xff]
    %v160 = vld [vmem:[#allocation7 + $0x8] sm:$0xff]
    %v161 = vld [vmem:[%s4] sm:$0xff]
    %v162 = vld [vmem:[%s4 + $0x8] sm:$0xff]
    %v163 = vld [vmem:[%s4 + $0x10] sm:$0xff]
    %v164 = vld [vmem:[%s4 + $0x18] sm:$0xff]
    %v165 = vld [vmem:[%s4 + $0x20] sm:$0xff]
    %v166 = vld [vmem:[%s4 + $0x28] sm:$0xff]
    %v167 = vld [vmem:[%s4 + $0x30] sm:$0xff]
    %v168 = vld [vmem:[%s4 + $0x38] sm:$0xff]
    %v169 = vld [vmem:[%s5] sm:$0xff]
    %v170 = vld [vmem:[%s5 + $0x8] sm:$0xff]
    %v171 = vld [vmem:[%s5 + $0x10] sm:$0xff]
    %v172 = vld [vmem:[%s5 + $0x18] sm:$0xff]
    %v173 = vld [vmem:[%s5 + $0x20] sm:$0xff]
    %v174 = vld [vmem:[%s5 + $0x28] sm:$0xff]
    %v175 = vld [vmem:[%s5 + $0x30] sm:$0xff]
    %v176 = vld [vmem:[%s5 + $0x38] sm:$0xff]
    %v177 = vld [vmem:[%s5 + $0x40] sm:$0xff]
    %v178 = vld [vmem:[%s5 + $0x48] sm:$0xff]
    %v179 = vld [vmem:[%s5 + $0x50] sm:$0xff]
    %v180 = vld [vmem:[%s5 + $0x58] sm:$0xff]
    %v181 = vld [vmem:[%s5 + $0x60] sm:$0xff]
    %v182 = vld [vmem:[%s5 + $0x68] sm:$0xff]
    %v183 = vld [vmem:[%s5 + $0x70] sm:$0xff]
    %v184 = vld [vmem:[%s5 + $0x78] sm:$0xff]
    %v185 = vld [vmem:[%s6] sm:$0xff]
    %v186 = vld [vmem:[%s6 + $0x8] sm:$0xff]
    %v187 = vld [vmem:[%s6 + $0x10] sm:$0xff]
    %v188 = vld [vmem:[%s6 + $0x18] sm:$0xff]
    %v189 = vld [vmem:[%s6 + $0x20] sm:$0xff]
    %v190 = vld [vmem:[%s6 + $0x28] sm:$0xff]
    %v191 = vld [vmem:[%s6 + $0x30] sm:$0xff]
    %v192 = vld [vmem:[%s6 + $0x38] sm:$0xff]
    %v193 = vld [vmem:[%s7] sm:$0xff]
    %v194 = vld [vmem:[%s7 + $0x8] sm:$0xff]
    %v195 = vld [vmem:[%s7 + $0x10] sm:$0xff]
    %v196 = vld [vmem:[%s7 + $0x18] sm:$0xff]
    %v197 = vld [vmem:[%s7 + $0x20] sm:$0xff]
    %v198 = vld [vmem:[%s7 + $0x28] sm:$0xff]
    %v199 = vld [vmem:[%s7 + $0x30] sm:$0xff]
    %v200 = vld [vmem:[%s7 + $0x38] sm:$0xff]
    %v201 = vld [vmem:[%s7 + $0x40] sm:$0xff]
    %v202 = vld [vmem:[%s7 + $0x48] sm:$0xff]
    %v203 = vld [vmem:[%s7 + $0x50] sm:$0xff]
    %v204 = vld [vmem:[%s7 + $0x58] sm:$0xff]
    %v205 = vld [vmem:[%s7 + $0x60] sm:$0xff]
    %v206 = vld [vmem:[%s7 + $0x68] sm:$0xff]
    %v207 = vld [vmem:[%s7 + $0x70] sm:$0xff]
    %v208 = vld [vmem:[%s7 + $0x78] sm:$0xff]
    %v209 = vld [vmem:[%s8] sm:$0xff]
    %v210 = vld [vmem:[%s8 + $0x8] sm:$0xff]
    %v211 = vld [vmem:[%s8 + $0x10] sm:$0xff]
    %v212 = vld [vmem:[%s8 + $0x18] sm:$0xff]
    %v213 = vld [vmem:[%s9] sm:$0xff]
    %v214 = vld [vmem:[%s9 + $0x8] sm:$0xff]
    %v215 = vld [vmem:[%s9 + $0x10] sm:$0xff]
    %v216 = vld [vmem:[%s9 + $0x18] sm:$0xff]
    %v217 = vld [vmem:[%s10] sm:$0xff]
    %v218 = vld [vmem:[%s10 + $0x8] sm:$0xff]
    %v219 = vld [vmem:[%s10 + $0x10] sm:$0xff]
    %v220 = vld [vmem:[%s10 + $0x18] sm:$0xff]
    %v221 = vld [vmem:[#allocation10] sm:$0xff]
    %v222 = vld [vmem:[#allocation10 + $0x8] sm:$0xff]
    %v223 = vld [vmem:[#allocation10 + $0x10] sm:$0xff]
    %v224 = vld [vmem:[#allocation10 + $0x18] sm:$0xff]
    %v225 = vld [vmem:[#allocation11] sm:$0xff]
    %v226 = vld [vmem:[#allocation11 + $0x8] sm:$0xff]
    %v227 = vld [vmem:[#allocation11 + $0x10] sm:$0xff]
    %v228 = vld [vmem:[#allocation11 + $0x18] sm:$0xff]
    %v229 = vld [vmem:[%s14] sm:$0xff]
    %v230 = vld [vmem:[%s14 + $0x8] sm:$0xff]
    %v231 = vld [vmem:[%s14 + $0x10] sm:$0xff]
    %v232 = vld [vmem:[%s14 + $0x18] sm:$0xff]
    %v233 = vld [vmem:[%s14 + $0x20] sm:$0xff]
    %v234 = vld [vmem:[%s14 + $0x28] sm:$0xff]
    %v235 = vld [vmem:[%s14 + $0x30] sm:$0xff]
    %v236 = vld [vmem:[%s14 + $0x38] sm:$0xff]
    %v237 = vld [vmem:[#allocation8] sm:$0xff]
    %v238 = vld [vmem:[#allocation8 + $0x8] sm:$0xff]
    %v239 = vld [vmem:[#allocation8 + $0x10] sm:$0xff]
    %v240 = vld [vmem:[#allocation8 + $0x18] sm:$0xff]
    %v241 = vlaneseq
    %v242 = vshrl.u32 %v241, 7
    %v243 = vsub.s32 1, %v242
    %v244 = vrot.slane %v149, %v243
    %vm245 = vcmask 261120
    %v247 = vsel %vm245, %v153, 0
    %v250 = vsel %vm245, %v154, 0
    %v253 = vsel %vm245, %v155, 0
    %v256 = vsel %vm245, %v156, 0
    %258 = vmatprep.subr.mxu0 0.0
    %259 = vmatpush1.msra.mxu0 %v237
    %260 = vmatprep.subr.mxu0 0.0
    %261 = vmatpush1.msra.mxu0 %v238
    %262 = vmatprep.subr.mxu0 0.0
    %263 = vmatpush1.msra.mxu0 %v239
    %264 = vmatprep.subr.mxu0 0.0
    %265 = vmatpush1.msra.mxu0 %v240
    %266 = vmatprep.subr.mxu0 0.0
    %267 = vmatpush1.msra.mxu0 0.0
    %268 = vmatprep.subr.mxu0 0.0
    %269 = vmatpush1.msra.mxu0 0.0
    %270 = vmatprep.subr.mxu0 0.0
    %271 = vmatpush1.msra.mxu0 0.0
    %272 = vmatprep.subr.mxu0 0.0
    %273 = vmatpush1.msra.mxu0 0.0
    %274 = vmatprep.subr.mxu0 0.0
    %275 = vmatpush1.msra.mxu0 0.0
    %276 = vmatprep.subr.mxu0 0.0
    %277 = vmatpush1.msra.mxu0 0.0
    %278 = vmatprep.subr.mxu0 0.0
    %279 = vmatpush1.msra.mxu0 0.0
    %280 = vmatprep.subr.mxu0 0.0
    %281 = vmatpush1.msra.mxu0 0.0
    %282 = vmatprep.subr.mxu0 0.0
    %283 = vmatpush1.msra.mxu0 0.0
    %284 = vmatprep.subr.mxu0 0.0
    %285 = vmatpush1.msra.mxu0 0.0
    %286 = vmatprep.subr.mxu0 0.0
    %287 = vmatpush1.msra.mxu0 0.0
    %288 = vmatprep.subr.mxu0 0.0
    %289 = vmatpush1.msra.mxu0 0.0
    %290 = vmatprep.subr.mxu0 0.0
    %291 = vmatpush1.msra.mxu0 0.0
    %292 = vmatprep.subr.mxu0 0.0
    %293 = vmatpush1.msra.mxu0 0.0
    %294 = vmatprep.subr.mxu0 0.0
    %295 = vmatpush1.msra.mxu0 0.0
    %296 = vmatprep.subr.mxu0 0.0
    %297 = vmatpush1.msra.mxu0 0.0
    %298 = vmatprep.subr.mxu0 0.0
    %299 = vmatpush1.msra.mxu0 0.0
    %300 = vmatprep.subr.mxu0 0.0
    %301 = vmatpush1.msra.mxu0 0.0
    %302 = vmatprep.subr.mxu0 0.0
    %303 = vmatpush1.msra.mxu0 0.0
    %304 = vmatprep.subr.mxu0 0.0
    %305 = vmatpush1.msra.mxu0 0.0
    %306 = vmatprep.subr.mxu0 0.0
    %307 = vmatpush1.msra.mxu0 0.0
    %308 = vmatprep.subr.mxu0 0.0
    %309 = vmatpush1.msra.mxu0 0.0
    %310 = vmatprep.subr.mxu0 0.0
    %311 = vmatpush1.msra.mxu0 0.0
    %312 = vmatprep.subr.mxu0 0.0
    %313 = vmatpush1.msra.mxu0 0.0
    %314 = vmatprep.subr.mxu0 0.0
    %315 = vmatpush1.msra.mxu0 0.0
    %316 = vmatprep.subr.mxu0 0.0
    %317 = vmatpush1.msra.mxu0 0.0
    %318 = vmatprep.subr.mxu0 0.0
    %319 = vmatpush1.msra.mxu0 0.0
    %320 = vmatprep.subr.mxu0 0.0
    %321 = vmatpush1.msra.mxu0 0.0
    %322 = vmatprep.mubr.f32.mxu0 0.0
    %323 = vmatmul.mubr.f32.gmra.mrb[0].mxu0 %v247
    %v324 = vpop.f32.mrb[0].mxu0
    %v325 = vadd.f32 %v244, %v324
    %v326 = vpop.f32.mrb[0].mxu0
    %327 = vmatprep.mubr.f32.mxu0 0.0
    %328 = vmatmul.mubr.f32.gmra.mrb[0].mxu0 %v250
    %v329 = vpop.f32.mrb[0].mxu0
    %v330 = vadd.f32 %v244, %v329
    %v331 = vpop.f32.mrb[0].mxu0
    %332 = vmatprep.mubr.f32.mxu0 0.0
    %333 = vmatmul.mubr.f32.gmra.mrb[0].mxu0 %v253
    %v334 = vpop.f32.mrb[0].mxu0
    %v335 = vadd.f32 %v244, %v334
    %v336 = vpop.f32.mrb[0].mxu0
    %337 = vmatprep.mubr.f32.mxu0 0.0
    %338 = vmatmul.mubr.f32.gmra.mrb[0].mxu0 %v256
    %v339 = vpop.f32.mrb[0].mxu0
    %v340 = vadd.f32 %v244, %v339
    %v341 = vpop.f32.mrb[0].mxu0
    %342 = vdwg.mxu0
    %v343 = vmul.f32 %v325, %v169
    %v344 = vmul.f32 %v330, %v170
    %v345 = vmul.f32 %v335, %v171
    %v346 = vmul.f32 %v340, %v172
    %v347 = vmul.f32 %v325, %v173
    %v348 = vmul.f32 %v330, %v174
    %v349 = vmul.f32 %v335, %v175
    %v350 = vmul.f32 %v340, %v176
    %v351 = vmul.f32 %v325, %v177
    %v352 = vmul.f32 %v330, %v178
    %v353 = vmul.f32 %v335, %v179
    %v354 = vmul.f32 %v340, %v180
    %v355 = vmul.f32 %v325, %v181
    %v356 = vmul.f32 %v330, %v182
    %v357 = vmul.f32 %v335, %v183
    %v358 = vmul.f32 %v340, %v184
    %375 = vrot.lane.b32.xlu0 %v169, 32
    %v376 = vpop.permute.xlu0 %375
    %377 = vrot.lane.b32.xlu0 %v170, 32
    %v378 = vpop.permute.xlu0 %377
    %379 = vrot.lane.b32.xlu0 %v171, 32
    %v380 = vpop.permute.xlu0 %379
    %381 = vrot.lane.b32.xlu0 %v172, 32
    %v382 = vpop.permute.xlu0 %381
    %383 = vrot.lane.b32.xlu0 %v173, 32
    %v384 = vpop.permute.xlu0 %383
    %385 = vrot.lane.b32.xlu0 %v174, 32
    %v386 = vpop.permute.xlu0 %385
    %387 = vrot.lane.b32.xlu0 %v175, 32
    %v388 = vpop.permute.xlu0 %387
    %389 = vrot.lane.b32.xlu0 %v176, 32
    %v390 = vpop.permute.xlu0 %389
    %391 = vrot.lane.b32.xlu0 %v177, 32
    %v392 = vpop.permute.xlu0 %391
    %393 = vrot.lane.b32.xlu0 %v178, 32
    %v394 = vpop.permute.xlu0 %393
    %395 = vrot.lane.b32.xlu0 %v179, 32
    %v396 = vpop.permute.xlu0 %395
    %397 = vrot.lane.b32.xlu0 %v180, 32
    %v398 = vpop.permute.xlu0 %397
    %399 = vrot.lane.b32.xlu0 %v181, 32
    %v400 = vpop.permute.xlu0 %399
    %401 = vrot.lane.b32.xlu0 %v182, 32
    %v402 = vpop.permute.xlu0 %401
    %403 = vrot.lane.b32.xlu0 %v183, 32
    %v404 = vpop.permute.xlu0 %403
    %405 = vrot.lane.b32.xlu0 %v184, 32
    %v406 = vpop.permute.xlu0 %405
    %v423 = vmul.f32 %v325, %v376
    %v424 = vmul.f32 %v330, %v378
    %v425 = vmul.f32 %v335, %v380
    %v426 = vmul.f32 %v340, %v382
    %v427 = vmul.f32 %v325, %v384
    %v428 = vmul.f32 %v330, %v386
    %v429 = vmul.f32 %v335, %v388
    %v430 = vmul.f32 %v340, %v390
    %v431 = vmul.f32 %v325, %v392
    %v432 = vmul.f32 %v330, %v394
    %v433 = vmul.f32 %v335, %v396
    %v434 = vmul.f32 %v340, %v398
    %v435 = vmul.f32 %v325, %v400
    %v436 = vmul.f32 %v330, %v402
    %v437 = vmul.f32 %v335, %v404
    %v438 = vmul.f32 %v340, %v406
    %v439 = vlaneseq
    %v440 = vshrl.u32 %v439, 7
    %v441 = vsub.s32 0, %v440
    %v442 = vrot.slane %v149, %v441
    %v444 = vsel %vm245, %v151, 0
    %v447 = vsel %vm245, %v152, 0
    %449 = vmatprep.subr.mxu0 0.0
    %450 = vmatpush1.msra.mxu0 %v209
    %451 = vmatprep.subr.mxu0 0.0
    %452 = vmatpush1.msra.mxu0 %v210
    %453 = vmatprep.subr.mxu0 0.0
    %454 = vmatpush1.msra.mxu0 %v211
    %455 = vmatprep.subr.mxu0 0.0
    %456 = vmatpush1.msra.mxu0 %v212
    %457 = vmatprep.subr.mxu0 0.0
    %458 = vmatpush1.msra.mxu0 0.0
    %459 = vmatprep.subr.mxu0 0.0
    %460 = vmatpush1.msra.mxu0 0.0
    %461 = vmatprep.subr.mxu0 0.0
    %462 = vmatpush1.msra.mxu0 0.0
    %463 = vmatprep.subr.mxu0 0.0
    %464 = vmatpush1.msra.mxu0 0.0
    %465 = vmatprep.subr.mxu0 0.0
    %466 = vmatpush1.msra.mxu0 0.0
    %467 = vmatprep.subr.mxu0 0.0
    %468 = vmatpush1.msra.mxu0 0.0
    %469 = vmatprep.subr.mxu0 0.0
    %470 = vmatpush1.msra.mxu0 0.0
    %471 = vmatprep.subr.mxu0 0.0
    %472 = vmatpush1.msra.mxu0 0.0
    %473 = vmatprep.subr.mxu0 0.0
    %474 = vmatpush1.msra.mxu0 0.0
    %475 = vmatprep.subr.mxu0 0.0
    %476 = vmatpush1.msra.mxu0 0.0
    %477 = vmatprep.subr.mxu0 0.0
    %478 = vmatpush1.msra.mxu0 0.0
    %479 = vmatprep.subr.mxu0 0.0
    %480 = vmatpush1.msra.mxu0 0.0
    %481 = vmatprep.subr.mxu0 0.0
    %482 = vmatpush1.msra.mxu0 0.0
    %483 = vmatprep.subr.mxu0 0.0
    %484 = vmatpush1.msra.mxu0 0.0
    %485 = vmatprep.subr.mxu0 0.0
    %486 = vmatpush1.msra.mxu0 0.0
    %487 = vmatprep.subr.mxu0 0.0
    %488 = vmatpush1.msra.mxu0 0.0
    %489 = vmatprep.subr.mxu0 0.0
    %490 = vmatpush1.msra.mxu0 0.0
    %491 = vmatprep.subr.mxu0 0.0
    %492 = vmatpush1.msra.mxu0 0.0
    %493 = vmatprep.subr.mxu0 0.0
    %494 = vmatpush1.msra.mxu0 0.0
    %495 = vmatprep.subr.mxu0 0.0
    %496 = vmatpush1.msra.mxu0 0.0
    %497 = vmatprep.subr.mxu0 0.0
    %498 = vmatpush1.msra.mxu0 0.0
    %499 = vmatprep.subr.mxu0 0.0
    %500 = vmatpush1.msra.mxu0 0.0
    %501 = vmatprep.subr.mxu0 0.0
    %502 = vmatpush1.msra.mxu0 0.0
    %503 = vmatprep.subr.mxu0 0.0
    %504 = vmatpush1.msra.mxu0 0.0
    %505 = vmatprep.subr.mxu0 0.0
    %506 = vmatpush1.msra.mxu0 0.0
    %507 = vmatprep.subr.mxu0 0.0
    %508 = vmatpush1.msra.mxu0 0.0
    %509 = vmatprep.subr.mxu0 0.0
    %510 = vmatpush1.msra.mxu0 0.0
    %511 = vmatprep.subr.mxu0 0.0
    %512 = vmatpush1.msra.mxu0 0.0
    %513 = vmatprep.mubr.f32.mxu0 0.0
    %514 = vmatmul.mubr.f32.gmra.mrb[0].mxu0 %v444
    %v515 = vpop.f32.mrb[0].mxu0
    %v516 = vadd.f32 %v442, %v515
    %v517 = vpop.f32.mrb[0].mxu0
    %518 = vmatprep.mubr.f32.mxu0 0.0
    %519 = vmatmul.mubr.f32.gmra.mrb[0].mxu0 %v447
    %v520 = vpop.f32.mrb[0].mxu0
    %v521 = vadd.f32 %v442, %v520
    %v522 = vpop.f32.mrb[0].mxu0
    %523 = vdwg.mxu0
    %532 = vrot.lane.b32.xlu0 %v161, 32
    %v533 = vpop.permute.xlu0 %532
    %534 = vrot.lane.b32.xlu0 %v162, 32
    %v535 = vpop.permute.xlu0 %534
    %536 = vrot.lane.b32.xlu0 %v163, 32
    %v537 = vpop.permute.xlu0 %536
    %538 = vrot.lane.b32.xlu0 %v164, 32
    %v539 = vpop.permute.xlu0 %538
    %540 = vrot.lane.b32.xlu0 %v165, 32
    %v541 = vpop.permute.xlu0 %540
    %542 = vrot.lane.b32.xlu0 %v166, 32
    %v543 = vpop.permute.xlu0 %542
    %544 = vrot.lane.b32.xlu0 %v167, 32
    %v545 = vpop.permute.xlu0 %544
    %546 = vrot.lane.b32.xlu0 %v168, 32
    %v547 = vpop.permute.xlu0 %546
    %v556 = vmul.f32 %v516, %v533
    %v557 = vmul.f32 %v521, %v535
    %v558 = vmul.f32 %v516, %v537
    %v559 = vmul.f32 %v521, %v539
    %v560 = vmul.f32 %v516, %v541
    %v561 = vmul.f32 %v521, %v543
    %v562 = vmul.f32 %v516, %v545
    %v563 = vmul.f32 %v521, %v547
    %564 = vrot.lane.b32.xlu0 %v161, 64
    %v565 = vpop.permute.xlu0 %564
    %566 = vrot.lane.b32.xlu0 %v162, 64
    %v567 = vpop.permute.xlu0 %566
    %568 = vrot.lane.b32.xlu0 %v163, 64
    %v569 = vpop.permute.xlu0 %568
    %570 = vrot.lane.b32.xlu0 %v164, 64
    %v571 = vpop.permute.xlu0 %570
    %572 = vrot.lane.b32.xlu0 %v165, 64
    %v573 = vpop.permute.xlu0 %572
    %574 = vrot.lane.b32.xlu0 %v166, 64
    %v575 = vpop.permute.xlu0 %574
    %576 = vrot.lane.b32.xlu0 %v167, 64
    %v577 = vpop.permute.xlu0 %576
    %578 = vrot.lane.b32.xlu0 %v168, 64
    %v579 = vpop.permute.xlu0 %578
    %v588 = vmul.f32 %v516, %v565
    %v589 = vmul.f32 %v521, %v567
    %v590 = vmul.f32 %v516, %v569
    %v591 = vmul.f32 %v521, %v571
    %v592 = vmul.f32 %v516, %v573
    %v593 = vmul.f32 %v521, %v575
    %v594 = vmul.f32 %v516, %v577
    %v595 = vmul.f32 %v521, %v579
    %604 = vrot.lane.b32.xlu0 %v556, 96
    %v605 = vpop.permute.xlu0 %604
    %606 = vrot.lane.b32.xlu0 %v557, 96
    %v607 = vpop.permute.xlu0 %606
    %608 = vrot.lane.b32.xlu0 %v558, 96
    %v609 = vpop.permute.xlu0 %608
    %610 = vrot.lane.b32.xlu0 %v559, 96
    %v611 = vpop.permute.xlu0 %610
    %612 = vrot.lane.b32.xlu0 %v560, 96
    %v613 = vpop.permute.xlu0 %612
    %614 = vrot.lane.b32.xlu0 %v561, 96
    %v615 = vpop.permute.xlu0 %614
    %616 = vrot.lane.b32.xlu0 %v562, 96
    %v617 = vpop.permute.xlu0 %616
    %618 = vrot.lane.b32.xlu0 %v563, 96
    %v619 = vpop.permute.xlu0 %618
    %v621 = vsel %vm245, %v516, 0
    %v624 = vsel %vm245, %v521, 0
    %v626 = vsel %vm245, %v605, 0
    %v628 = vsel %vm245, %v607, 0
    %v630 = vsel %vm245, %v609, 0
    %v632 = vsel %vm245, %v611, 0
    %v634 = vsel %vm245, %v613, 0
    %v636 = vsel %vm245, %v615, 0
    %v638 = vsel %vm245, %v617, 0
    %v640 = vsel %vm245, %v619, 0
    %642 = vmatprep.subr.mxu0 0.0
    %643 = vmatpush1.xpose.msra.mxu0 %v626
    %644 = vmatprep.subr.mxu0 0.0
    %645 = vmatpush1.xpose.msra.mxu0 %v628
    %646 = vmatprep.subr.mxu0 0.0
    %647 = vmatpush1.xpose.msra.mxu0 %v630
    %648 = vmatprep.subr.mxu0 0.0
    %649 = vmatpush1.xpose.msra.mxu0 %v632
    %650 = vmatprep.subr.mxu0 0.0
    %651 = vmatpush1.xpose.msra.mxu0 %v634
    %652 = vmatprep.subr.mxu0 0.0
    %653 = vmatpush1.xpose.msra.mxu0 %v636
    %654 = vmatprep.subr.mxu0 0.0
    %655 = vmatpush1.xpose.msra.mxu0 %v638
    %656 = vmatprep.subr.mxu0 0.0
    %657 = vmatpush1.xpose.msra.mxu0 %v640
    %658 = vmatprep.subr.mxu0 0.0
    %659 = vmatpush1.xpose.msra.mxu0 0.0
    %660 = vmatprep.subr.mxu0 0.0
    %661 = vmatpush1.xpose.msra.mxu0 0.0
    %662 = vmatprep.subr.mxu0 0.0
    %663 = vmatpush1.xpose.msra.mxu0 0.0
    %664 = vmatprep.subr.mxu0 0.0
    %665 = vmatpush1.xpose.msra.mxu0 0.0
    %666 = vmatprep.subr.mxu0 0.0
    %667 = vmatpush1.xpose.msra.mxu0 0.0
    %668 = vmatprep.subr.mxu0 0.0
    %669 = vmatpush1.xpose.msra.mxu0 0.0
    %670 = vmatprep.subr.mxu0 0.0
    %671 = vmatpush1.xpose.msra.mxu0 0.0
    %672 = vmatprep.subr.mxu0 0.0
    %673 = vmatpush1.xpose.msra.mxu0 0.0
    %674 = vmatprep.subr.mxu0 0.0
    %675 = vmatpush1.xpose.msra.mxu0 0.0
    %676 = vmatprep.subr.mxu0 0.0
    %677 = vmatpush1.xpose.msra.mxu0 0.0
    %678 = vmatprep.subr.mxu0 0.0
    %679 = vmatpush1.xpose.msra.mxu0 0.0
    %680 = vmatprep.subr.mxu0 0.0
    %681 = vmatpush1.xpose.msra.mxu0 0.0
    %682 = vmatprep.subr.mxu0 0.0
    %683 = vmatpush1.xpose.msra.mxu0 0.0
    %684 = vmatprep.subr.mxu0 0.0
    %685 = vmatpush1.xpose.msra.mxu0 0.0
    %686 = vmatprep.subr.mxu0 0.0
    %687 = vmatpush1.xpose.msra.mxu0 0.0
    %688 = vmatprep.subr.mxu0 0.0
    %689 = vmatpush1.xpose.msra.mxu0 0.0
    %690 = vmatprep.subr.mxu0 0.0
    %691 = vmatpush1.xpose.msra.mxu0 0.0
    %692 = vmatprep.subr.mxu0 0.0
    %693 = vmatpush1.xpose.msra.mxu0 0.0
    %694 = vmatprep.subr.mxu0 0.0
    %695 = vmatpush1.xpose.msra.mxu0 0.0
    %696 = vmatprep.subr.mxu0 0.0
    %697 = vmatpush1.xpose.msra.mxu0 0.0
    %698 = vmatprep.subr.mxu0 0.0
    %699 = vmatpush1.xpose.msra.mxu0 0.0
    %700 = vmatprep.subr.mxu0 0.0
    %701 = vmatpush1.xpose.msra.mxu0 0.0
    %702 = vmatprep.subr.mxu0 0.0
    %703 = vmatpush1.xpose.msra.mxu0 0.0
    %704 = vmatprep.subr.mxu0 0.0
    %705 = vmatpush1.xpose.msra.mxu0 0.0
    %706 = vmatprep.mubr.f32.mxu0 0.0
    %707 = vmatmul.mubr.f32.gmra.mrb[0].mxu0 %v621
    %v708 = vpop.f32.mrb[0].mxu0
    %v709 = vadd.f32 %v157, %v708
    %v710 = vpop.f32.mrb[0].mxu0
    %711 = vmatprep.mubr.f32.mxu0 0.0
    %712 = vmatmul.mubr.f32.gmra.mrb[0].mxu0 %v624
    %v713 = vpop.f32.mrb[0].mxu0
    %v714 = vadd.f32 %v158, %v713
    %v715 = vpop.f32.mrb[0].mxu0
    %716 = vdwg.mxu0
    %vm717 = vcmask 130048
    %v718 = vsel %vm717, %v709, -inf
    %719 = vmax.xlane.f32.xlu0 %v718
    %v720 = vpop.xlane.xlu0 %719
    %v721 = vsel %vm717, %v714, -inf
    %722 = vmax.xlane.f32.xlu0 %v721
    %v723 = vpop.xlane.xlu0 %722
    %vm724 = vcmask 261248
    %v725 = vsel %vm724, %v709, -inf
    %726 = vmax.xlane.f32.xlu0 %v725
    %v727 = vpop.xlane.xlu0 %726
    %v728 = vsel %vm724, %v714, -inf
    %729 = vmax.xlane.f32.xlu0 %v728
    %v730 = vpop.xlane.xlu0 %729
    %vm731 = vcmask 392448
    %v732 = vsel %vm731, %v709, -inf
    %733 = vmax.xlane.f32.xlu0 %v732
    %v734 = vpop.xlane.xlu0 %733
    %v735 = vsel %vm731, %v714, -inf
    %736 = vmax.xlane.f32.xlu0 %v735
    %v737 = vpop.xlane.xlu0 %736
    %vm738 = vcmask 523648
    %v739 = vsel %vm738, %v709, -inf
    %740 = vmax.xlane.f32.xlu0 %v739
    %v741 = vpop.xlane.xlu0 %740
    %v742 = vsel %vm738, %v714, -inf
    %743 = vmax.xlane.f32.xlu0 %v742
    %v744 = vpop.xlane.xlu0 %743
    %v745 = vsel %vm717, %v720, %v727
    %v746 = vsel %vm717, %v723, %v730
    %v747 = vsel %vm245, %v745, %v734
    %v748 = vsel %vm245, %v746, %v737
    %vm749 = vcmask 392192
    %v750 = vsel %vm749, %v747, %v741
    %v751 = vsel %vm749, %v748, %v744
    %v752 = vsub.f32 %v709, %v750
    %v753 = vsub.f32 %v714, %v751
    %v754 = vmul.f32 %v752, 1.442695
    %v755 = vpow.pop %v754
    %v756 = vmul.f32 %v753, 1.442695
    %v757 = vpow.pop %v756
    %vm758 = vcmask 523264
    %v760 = vsel %vm758, %v755, 0
    %v763 = vsel %vm758, %v757, 0
    %765 = vmatprep.subr.mxu0 0.0
    %766 = vmatpush1.msra.mxu0 %v185
    %767 = vmatprep.subr.mxu0 0.0
    %768 = vmatpush1.msra.mxu0 %v186
    %769 = vmatprep.subr.mxu0 0.0
    %770 = vmatpush1.msra.mxu0 %v187
    %771 = vmatprep.subr.mxu0 0.0
    %772 = vmatpush1.msra.mxu0 %v188
    %773 = vmatprep.subr.mxu0 0.0
    %774 = vmatpush1.msra.mxu0 %v189
    %775 = vmatprep.subr.mxu0 0.0
    %776 = vmatpush1.msra.mxu0 %v190
    %777 = vmatprep.subr.mxu0 0.0
    %778 = vmatpush1.msra.mxu0 %v191
    %779 = vmatprep.subr.mxu0 0.0
    %780 = vmatpush1.msra.mxu0 %v192
    %781 = vmatprep.subr.mxu0 0.0
    %782 = vmatpush1.msra.mxu0 0.0
    %783 = vmatprep.subr.mxu0 0.0
    %784 = vmatpush1.msra.mxu0 0.0
    %785 = vmatprep.subr.mxu0 0.0
    %786 = vmatpush1.msra.mxu0 0.0
    %787 = vmatprep.subr.mxu0 0.0
    %788 = vmatpush1.msra.mxu0 0.0
    %789 = vmatprep.subr.mxu0 0.0
    %790 = vmatpush1.msra.mxu0 0.0
    %791 = vmatprep.subr.mxu0 0.0
    %792 = vmatpush1.msra.mxu0 0.0
    %793 = vmatprep.subr.mxu0 0.0
    %794 = vmatpush1.msra.mxu0 0.0
    %795 = vmatprep.subr.mxu0 0.0
    %796 = vmatpush1.msra.mxu0 0.0
    %797 = vmatprep.subr.mxu0 0.0
    %798 = vmatpush1.msra.mxu0 0.0
    %799 = vmatprep.subr.mxu0 0.0
    %800 = vmatpush1.msra.mxu0 0.0
    %801 = vmatprep.subr.mxu0 0.0
    %802 = vmatpush1.msra.mxu0 0.0
    %803 = vmatprep.subr.mxu0 0.0
    %804 = vmatpush1.msra.mxu0 0.0
    %805 = vmatprep.subr.mxu0 0.0
    %806 = vmatpush1.msra.mxu0 0.0
    %807 = vmatprep.subr.mxu0 0.0
    %808 = vmatpush1.msra.mxu0 0.0
    %809 = vmatprep.subr.mxu0 0.0
    %810 = vmatpush1.msra.mxu0 0.0
    %811 = vmatprep.subr.mxu0 0.0
    %812 = vmatpush1.msra.mxu0 0.0
    %813 = vmatprep.subr.mxu0 0.0
    %814 = vmatpush1.msra.mxu0 0.0
    %815 = vmatprep.subr.mxu0 0.0
    %816 = vmatpush1.msra.mxu0 0.0
    %817 = vmatprep.subr.mxu0 0.0
    %818 = vmatpush1.msra.mxu0 0.0
    %819 = vmatprep.subr.mxu0 0.0
    %820 = vmatpush1.msra.mxu0 0.0
    %821 = vmatprep.subr.mxu0 0.0
    %822 = vmatpush1.msra.mxu0 0.0
    %823 = vmatprep.subr.mxu0 0.0
    %824 = vmatpush1.msra.mxu0 0.0
    %825 = vmatprep.subr.mxu0 0.0
    %826 = vmatpush1.msra.mxu0 0.0
    %827 = vmatprep.subr.mxu0 0.0
    %828 = vmatpush1.msra.mxu0 0.0
    %829 = vmatprep.mubr.f32.mxu0 0.0
    %830 = vmatmul.mubr.f32.gmra.mrb[0].mxu0 %v760
    %v831 = vpop.f32.mrb[0].mxu0
    %v832 = vadd.f32 0.0, %v831
    %v833 = vpop.f32.mrb[0].mxu0
    %834 = vmatprep.mubr.f32.mxu0 0.0
    %835 = vmatmul.mubr.f32.gmra.mrb[0].mxu0 %v763
    %v836 = vpop.f32.mrb[0].mxu0
    %v837 = vadd.f32 0.0, %v836
    %v838 = vpop.f32.mrb[0].mxu0
    %839 = vdwg.mxu0
    %v840 = vrcp.pop %v832
    %v841 = vrcp.pop %v837
    %v842 = vmul.f32 %v832, %v840
    %v843 = vmul.f32 %v837, %v841
    %v844 = vsub.f32 2.0, %v842
    %v845 = vsub.f32 2.0, %v843
    %v846 = vmul.f32 %v840, %v844
    %v847 = vmul.f32 %v841, %v845
    %v848 = vmul.f32 %v755, %v846
    %v849 = vmul.f32 %v757, %v847
    %858 = vrot.lane.b32.xlu0 %v588, 64
    %v859 = vpop.permute.xlu0 %858
    %860 = vrot.lane.b32.xlu0 %v589, 64
    %v861 = vpop.permute.xlu0 %860
    %862 = vrot.lane.b32.xlu0 %v590, 64
    %v863 = vpop.permute.xlu0 %862
    %864 = vrot.lane.b32.xlu0 %v591, 64
    %v865 = vpop.permute.xlu0 %864
    %866 = vrot.lane.b32.xlu0 %v592, 64
    %v867 = vpop.permute.xlu0 %866
    %868 = vrot.lane.b32.xlu0 %v593, 64
    %v869 = vpop.permute.xlu0 %868
    %870 = vrot.lane.b32.xlu0 %v594, 64
    %v871 = vpop.permute.xlu0 %870
    %872 = vrot.lane.b32.xlu0 %v595, 64
    %v873 = vpop.permute.xlu0 %872
    %v883 = vsel %vm758, %v848, 0
    %v886 = vsel %vm758, %v849, 0
    %888 = vmatprep.subr.mxu0 0.0
    %889 = vmatpush1.msra.mxu0 %v859
    %890 = vmatprep.subr.mxu0 0.0
    %891 = vmatpush1.msra.mxu0 %v861
    %892 = vmatprep.subr.mxu0 0.0
    %893 = vmatpush1.msra.mxu0 %v863
    %894 = vmatprep.subr.mxu0 0.0
    %895 = vmatpush1.msra.mxu0 %v865
    %896 = vmatprep.subr.mxu0 0.0
    %897 = vmatpush1.msra.mxu0 %v867
    %898 = vmatprep.subr.mxu0 0.0
    %899 = vmatpush1.msra.mxu0 %v869
    %900 = vmatprep.subr.mxu0 0.0
    %901 = vmatpush1.msra.mxu0 %v871
    %902 = vmatprep.subr.mxu0 0.0
    %903 = vmatpush1.msra.mxu0 %v873
    %904 = vmatprep.subr.mxu0 0.0
    %905 = vmatpush1.msra.mxu0 0.0
    %906 = vmatprep.subr.mxu0 0.0
    %907 = vmatpush1.msra.mxu0 0.0
    %908 = vmatprep.subr.mxu0 0.0
    %909 = vmatpush1.msra.mxu0 0.0
    %910 = vmatprep.subr.mxu0 0.0
    %911 = vmatpush1.msra.mxu0 0.0
    %912 = vmatprep.subr.mxu0 0.0
    %913 = vmatpush1.msra.mxu0 0.0
    %914 = vmatprep.subr.mxu0 0.0
    %915 = vmatpush1.msra.mxu0 0.0
    %916 = vmatprep.subr.mxu0 0.0
    %917 = vmatpush1.msra.mxu0 0.0
    %918 = vmatprep.subr.mxu0 0.0
    %919 = vmatpush1.msra.mxu0 0.0
    %920 = vmatprep.subr.mxu0 0.0
    %921 = vmatpush1.msra.mxu0 0.0
    %922 = vmatprep.subr.mxu0 0.0
    %923 = vmatpush1.msra.mxu0 0.0
    %924 = vmatprep.subr.mxu0 0.0
    %925 = vmatpush1.msra.mxu0 0.0
    %926 = vmatprep.subr.mxu0 0.0
    %927 = vmatpush1.msra.mxu0 0.0
    %928 = vmatprep.subr.mxu0 0.0
    %929 = vmatpush1.msra.mxu0 0.0
    %930 = vmatprep.subr.mxu0 0.0
    %931 = vmatpush1.msra.mxu0 0.0
    %932 = vmatprep.subr.mxu0 0.0
    %933 = vmatpush1.msra.mxu0 0.0
    %934 = vmatprep.subr.mxu0 0.0
    %935 = vmatpush1.msra.mxu0 0.0
    %936 = vmatprep.subr.mxu0 0.0
    %937 = vmatpush1.msra.mxu0 0.0
    %938 = vmatprep.subr.mxu0 0.0
    %939 = vmatpush1.msra.mxu0 0.0
    %940 = vmatprep.subr.mxu0 0.0
    %941 = vmatpush1.msra.mxu0 0.0
    %942 = vmatprep.subr.mxu0 0.0
    %943 = vmatpush1.msra.mxu0 0.0
    %944 = vmatprep.subr.mxu0 0.0
    %945 = vmatpush1.msra.mxu0 0.0
    %946 = vmatprep.subr.mxu0 0.0
    %947 = vmatpush1.msra.mxu0 0.0
    %948 = vmatprep.subr.mxu0 0.0
    %949 = vmatpush1.msra.mxu0 0.0
    %950 = vmatprep.subr.mxu0 0.0
    %951 = vmatpush1.msra.mxu0 0.0
    %952 = vmatprep.mubr.f32.mxu0 0.0
    %953 = vmatmul.mubr.f32.gmra.mrb[0].mxu0 %v883
    %v954 = vpop.f32.mrb[0].mxu0
    %v955 = vadd.f32 0.0, %v954
    %v956 = vpop.f32.mrb[0].mxu0
    %957 = vmatprep.mubr.f32.mxu0 0.0
    %958 = vmatmul.mubr.f32.gmra.mrb[0].mxu0 %v886
    %v959 = vpop.f32.mrb[0].mxu0
    %v960 = vadd.f32 0.0, %v959
    %v961 = vpop.f32.mrb[0].mxu0
    %962 = vdwg.mxu0
    %v963 = vlaneseq
    %v964 = vshrl.u32 %v963, 7
    %v965 = vsub.s32 3, %v964
    %v966 = vrot.slane %v149, %v965
    %v968 = vsel %vm245, %v955, 0
    %v971 = vsel %vm245, %v960, 0
    %973 = vmatprep.subr.mxu0 0.0
    %974 = vmatpush1.msra.mxu0 %v213
    %975 = vmatprep.subr.mxu0 0.0
    %976 = vmatpush1.msra.mxu0 %v214
    %977 = vmatprep.subr.mxu0 0.0
    %978 = vmatpush1.msra.mxu0 %v215
    %979 = vmatprep.subr.mxu0 0.0
    %980 = vmatpush1.msra.mxu0 %v216
    %981 = vmatprep.subr.mxu0 0.0
    %982 = vmatpush1.msra.mxu0 0.0
    %983 = vmatprep.subr.mxu0 0.0
    %984 = vmatpush1.msra.mxu0 0.0
    %985 = vmatprep.subr.mxu0 0.0
    %986 = vmatpush1.msra.mxu0 0.0
    %987 = vmatprep.subr.mxu0 0.0
    %988 = vmatpush1.msra.mxu0 0.0
    %989 = vmatprep.subr.mxu0 0.0
    %990 = vmatpush1.msra.mxu0 0.0
    %991 = vmatprep.subr.mxu0 0.0
    %992 = vmatpush1.msra.mxu0 0.0
    %993 = vmatprep.subr.mxu0 0.0
    %994 = vmatpush1.msra.mxu0 0.0
    %995 = vmatprep.subr.mxu0 0.0
    %996 = vmatpush1.msra.mxu0 0.0
    %997 = vmatprep.subr.mxu0 0.0
    %998 = vmatpush1.msra.mxu0 0.0
    %999 = vmatprep.subr.mxu0 0.0
    %1000 = vmatpush1.msra.mxu0 0.0
    %1001 = vmatprep.subr.mxu0 0.0
    %1002 = vmatpush1.msra.mxu0 0.0
    %1003 = vmatprep.subr.mxu0 0.0
    %1004 = vmatpush1.msra.mxu0 0.0
    %1005 = vmatprep.subr.mxu0 0.0
    %1006 = vmatpush1.msra.mxu0 0.0
    %1007 = vmatprep.subr.mxu0 0.0
    %1008 = vmatpush1.msra.mxu0 0.0
    %1009 = vmatprep.subr.mxu0 0.0
    %1010 = vmatpush1.msra.mxu0 0.0
    %1011 = vmatprep.subr.mxu0 0.0
    %1012 = vmatpush1.msra.mxu0 0.0
    %1013 = vmatprep.subr.mxu0 0.0
    %1014 = vmatpush1.msra.mxu0 0.0
    %1015 = vmatprep.subr.mxu0 0.0
    %1016 = vmatpush1.msra.mxu0 0.0
    %1017 = vmatprep.subr.mxu0 0.0
    %1018 = vmatpush1.msra.mxu0 0.0
    %1019 = vmatprep.subr.mxu0 0.0
    %1020 = vmatpush1.msra.mxu0 0.0
    %1021 = vmatprep.subr.mxu0 0.0
    %1022 = vmatpush1.msra.mxu0 0.0
    %1023 = vmatprep.subr.mxu0 0.0
    %1024 = vmatpush1.msra.mxu0 0.0
    %1025 = vmatprep.subr.mxu0 0.0
    %1026 = vmatpush1.msra.mxu0 0.0
    %1027 = vmatprep.subr.mxu0 0.0
    %1028 = vmatpush1.msra.mxu0 0.0
    %1029 = vmatprep.subr.mxu0 0.0
    %1030 = vmatpush1.msra.mxu0 0.0
    %1031 = vmatprep.subr.mxu0 0.0
    %1032 = vmatpush1.msra.mxu0 0.0
    %1033 = vmatprep.subr.mxu0 0.0
    %1034 = vmatpush1.msra.mxu0 0.0
    %1035 = vmatprep.subr.mxu0 0.0
    %1036 = vmatpush1.msra.mxu0 0.0
    %1037 = vmatprep.mubr.f32.mxu0 0.0
    %1038 = vmatmul.mubr.f32.gmra.mrb[0].mxu0 %v968
    %v1039 = vpop.f32.mrb[0].mxu0
    %v1040 = vadd.f32 %v966, %v1039
    %v1041 = vpop.f32.mrb[0].mxu0
    %1042 = vmatprep.mubr.f32.mxu0 0.0
    %1043 = vmatmul.mubr.f32.gmra.mrb[0].mxu0 %v971
    %v1044 = vpop.f32.mrb[0].mxu0
    %v1045 = vadd.f32 %v966, %v1044
    %v1046 = vpop.f32.mrb[0].mxu0
    %1047 = vdwg.mxu0
    %v1048 = vadd.f32 %v151, %v1040
    %v1049 = vadd.f32 %v152, %v1045
    %v1050 = vsel %vm245, %v1048, 0.0
    %1051 = vadd.xlane.f32.xlu0 %v1050
    %v1052 = vpop.xlane.xlu0 %1051
    %v1053 = vsel %vm245, %v1049, 0.0
    %1054 = vadd.xlane.f32.xlu0 %v1053
    %v1055 = vpop.xlane.xlu0 %1054
    %v1056 = vrcp.pop 32.0
    %v1057 = vmul.f32 %v1052, %v1056
    %v1058 = vmul.f32 %v1055, %v1056
    %v1059 = vsub.f32 %v1048, %v1057
    %v1060 = vsub.f32 %v1049, %v1058
    %v1061 = vmul.f32 %v1059, %v1059
    %v1062 = vmul.f32 %v1060, %v1060
    %v1063 = vsel %vm245, %v1061, 0.0
    %1064 = vadd.xlane.f32.xlu0 %v1063
    %v1065 = vpop.xlane.xlu0 %1064
    %v1066 = vsel %vm245, %v1062, 0.0
    %1067 = vadd.xlane.f32.xlu0 %v1066
    %v1068 = vpop.xlane.xlu0 %1067
    %v1069 = vmul.f32 %v1065, %v1056
    %v1070 = vmul.f32 %v1068, %v1056
    %v1071 = vadd.f32 %v1069, 1e-05
    %v1072 = vadd.f32 %v1070, 1e-05
    %v1073 = vrsqrt.pop %v1071
    %v1074 = vrsqrt.pop %v1072
    %v1075 = vmul.f32 %v1059, %v1073
    %v1076 = vmul.f32 %v1060, %v1074
    %v1077 = vlaneseq
    %v1078 = vshrl.u32 %v1077, 7
    %v1079 = vsub.s32 6, %v1078
    %v1080 = vrot.slane %v149, %v1079
    %v1081 = vmul.f32 %v1075, %v1080
    %v1082 = vmul.f32 %v1076, %v1080
    %v1083 = vlaneseq
    %v1084 = vshrl.u32 %v1083, 7
    %v1085 = vsub.s32 7, %v1084
    %v1086 = vrot.slane %v149, %v1085
    %v1087 = vadd.f32 %v1081, %v1086
    %v1088 = vadd.f32 %v1082, %v1086
    %v1089 = vlaneseq
    %v1090 = vshrl.u32 %v1089, 7
    %v1091 = vsub.s32 4, %v1090
    %v1092 = vrot.slane %v149, %v1091
    %v1094 = vsel %vm245, %v1087, 0
    %v1097 = vsel %vm245, %v1088, 0
    %1099 = vmatprep.subr.mxu0 0.0
    %1100 = vmatpush1.msra.mxu0 %v217
    %1101 = vmatprep.subr.mxu0 0.0
    %1102 = vmatpush1.msra.mxu0 %v218
    %1103 = vmatprep.subr.mxu0 0.0
    %1104 = vmatpush1.msra.mxu0 %v219
    %1105 = vmatprep.subr.mxu0 0.0
    %1106 = vmatpush1.msra.mxu0 %v220
    %1107 = vmatprep.subr.mxu0 0.0
    %1108 = vmatpush1.msra.mxu0 0.0
    %1109 = vmatprep.subr.mxu0 0.0
    %1110 = vmatpush1.msra.mxu0 0.0
    %1111 = vmatprep.subr.mxu0 0.0
    %1112 = vmatpush1.msra.mxu0 0.0
    %1113 = vmatprep.subr.mxu0 0.0
    %1114 = vmatpush1.msra.mxu0 0.0
    %1115 = vmatprep.subr.mxu0 0.0
    %1116 = vmatpush1.msra.mxu0 0.0
    %1117 = vmatprep.subr.mxu0 0.0
    %1118 = vmatpush1.msra.mxu0 0.0
    %1119 = vmatprep.subr.mxu0 0.0
    %1120 = vmatpush1.msra.mxu0 0.0
    %1121 = vmatprep.subr.mxu0 0.0
    %1122 = vmatpush1.msra.mxu0 0.0
    %1123 = vmatprep.subr.mxu0 0.0
    %1124 = vmatpush1.msra.mxu0 0.0
    %1125 = vmatprep.subr.mxu0 0.0
    %1126 = vmatpush1.msra.mxu0 0.0
    %1127 = vmatprep.subr.mxu0 0.0
    %1128 = vmatpush1.msra.mxu0 0.0
    %1129 = vmatprep.subr.mxu0 0.0
    %1130 = vmatpush1.msra.mxu0 0.0
    %1131 = vmatprep.subr.mxu0 0.0
    %1132 = vmatpush1.msra.mxu0 0.0
    %1133 = vmatprep.subr.mxu0 0.0
    %1134 = vmatpush1.msra.mxu0 0.0
    %1135 = vmatprep.subr.mxu0 0.0
    %1136 = vmatpush1.msra.mxu0 0.0
    %1137 = vmatprep.subr.mxu0 0.0
    %1138 = vmatpush1.msra.mxu0 0.0
    %1139 = vmatprep.subr.mxu0 0.0
    %1140 = vmatpush1.msra.mxu0 0.0
    %1141 = vmatprep.subr.mxu0 0.0
    %1142 = vmatpush1.msra.mxu0 0.0
    %1143 = vmatprep.subr.mxu0 0.0
    %1144 = vmatpush1.msra.mxu0 0.0
    %1145 = vmatprep.subr.mxu0 0.0
    %1146 = vmatpush1.msra.mxu0 0.0
    %1147 = vmatprep.subr.mxu0 0.0
    %1148 = vmatpush1.msra.mxu0 0.0
    %1149 = vmatprep.subr.mxu0 0.0
    %1150 = vmatpush1.msra.mxu0 0.0
    %1151 = vmatprep.subr.mxu0 0.0
    %1152 = vmatpush1.msra.mxu0 0.0
    %1153 = vmatprep.subr.mxu0 0.0
    %1154 = vmatpush1.msra.mxu0 0.0
    %1155 = vmatprep.subr.mxu0 0.0
    %1156 = vmatpush1.msra.mxu0 0.0
    %1157 = vmatprep.subr.mxu0 0.0
    %1158 = vmatpush1.msra.mxu0 0.0
    %1159 = vmatprep.subr.mxu0 0.0
    %1160 = vmatpush1.msra.mxu0 0.0
    %1161 = vmatprep.subr.mxu0 0.0
    %1162 = vmatpush1.msra.mxu0 0.0
    %1163 = vmatprep.mubr.f32.mxu0 0.0
    %1164 = vmatmul.mubr.f32.gmra.mrb[0].mxu0 %v1094
    %v1165 = vpop.f32.mrb[0].mxu0
    %v1166 = vadd.f32 %v1092, %v1165
    %v1167 = vpop.f32.mrb[0].mxu0
    %1168 = vmatprep.mubr.f32.mxu0 0.0
    %1169 = vmatmul.mubr.f32.gmra.mrb[0].mxu0 %v1097
    %v1170 = vpop.f32.mrb[0].mxu0
    %v1171 = vadd.f32 %v1092, %v1170
    %v1172 = vpop.f32.mrb[0].mxu0
    %1173 = vdwg.mxu0
    %v1175 = vsel %vm245, %v1166, 0
    %v1178 = vsel %vm245, %v1171, 0
    %v1181 = vsel %vm245, %v343, 0
    %v1184 = vsel %vm245, %v344, 0
    %v1187 = vsel %vm245, %v345, 0
    %v1190 = vsel %vm245, %v346, 0
    %v1193 = vsel %vm245, %v347, 0
    %v1196 = vsel %vm245, %v348, 0
    %v1199 = vsel %vm245, %v349, 0
    %v1202 = vsel %vm245, %v350, 0
    %v1205 = vsel %vm245, %v351, 0
    %v1208 = vsel %vm245, %v352, 0
    %v1211 = vsel %vm245, %v353, 0
    %v1214 = vsel %vm245, %v354, 0
    %v1217 = vsel %vm245, %v355, 0
    %v1220 = vsel %vm245, %v356, 0
    %v1223 = vsel %vm245, %v357, 0
    %v1226 = vsel %vm245, %v358, 0
    %1228 = vmatprep.subr.mxu0 0.0
    %1229 = vmatpush1.xpose.msra.mxu0 %v1181
    %1230 = vmatprep.subr.mxu0 0.0
    %1231 = vmatpush1.xpose.msra.mxu0 %v1184
    %1232 = vmatprep.subr.mxu0 0.0
    %1233 = vmatpush1.xpose.msra.mxu0 %v1187
    %1234 = vmatprep.subr.mxu0 0.0
    %1235 = vmatpush1.xpose.msra.mxu0 %v1190
    %1236 = vmatprep.subr.mxu0 0.0
    %1237 = vmatpush1.xpose.msra.mxu0 %v1193
    %1238 = vmatprep.subr.mxu0 0.0
    %1239 = vmatpush1.xpose.msra.mxu0 %v1196
    %1240 = vmatprep.subr.mxu0 0.0
    %1241 = vmatpush1.xpose.msra.mxu0 %v1199
    %1242 = vmatprep.subr.mxu0 0.0
    %1243 = vmatpush1.xpose.msra.mxu0 %v1202
    %1244 = vmatprep.subr.mxu0 0.0
    %1245 = vmatpush1.xpose.msra.mxu0 %v1205
    %1246 = vmatprep.subr.mxu0 0.0
    %1247 = vmatpush1.xpose.msra.mxu0 %v1208
    %1248 = vmatprep.subr.mxu0 0.0
    %1249 = vmatpush1.xpose.msra.mxu0 %v1211
    %1250 = vmatprep.subr.mxu0 0.0
    %1251 = vmatpush1.xpose.msra.mxu0 %v1214
    %1252 = vmatprep.subr.mxu0 0.0
    %1253 = vmatpush1.xpose.msra.mxu0 %v1217
    %1254 = vmatprep.subr.mxu0 0.0
    %1255 = vmatpush1.xpose.msra.mxu0 %v1220
    %1256 = vmatprep.subr.mxu0 0.0
    %1257 = vmatpush1.xpose.msra.mxu0 %v1223
    %1258 = vmatprep.subr.mxu0 0.0
    %1259 = vmatpush1.xpose.msra.mxu0 %v1226
    %1260 = vmatprep.subr.mxu0 0.0
    %1261 = vmatpush1.xpose.msra.mxu0 0.0
    %1262 = vmatprep.subr.mxu0 0.0
    %1263 = vmatpush1.xpose.msra.mxu0 0.0
    %1264 = vmatprep.subr.mxu0 0.0
    %1265 = vmatpush1.xpose.msra.mxu0 0.0
    %1266 = vmatprep.subr.mxu0 0.0
    %1267 = vmatpush1.xpose.msra.mxu0 0.0
    %1268 = vmatprep.subr.mxu0 0.0
    %1269 = vmatpush1.xpose.msra.mxu0 0.0
    %1270 = vmatprep.subr.mxu0 0.0
    %1271 = vmatpush1.xpose.msra.mxu0 0.0
    %1272 = vmatprep.subr.mxu0 0.0
    %1273 = vmatpush1.xpose.msra.mxu0 0.0
    %1274 = vmatprep.subr.mxu0 0.0
    %1275 = vmatpush1.xpose.msra.mxu0 0.0
    %1276 = vmatprep.subr.mxu0 0.0
    %1277 = vmatpush1.xpose.msra.mxu0 0.0
    %1278 = vmatprep.subr.mxu0 0.0
    %1279 = vmatpush1.xpose.msra.mxu0 0.0
    %1280 = vmatprep.subr.mxu0 0.0
    %1281 = vmatpush1.xpose.msra.mxu0 0.0
    %1282 = vmatprep.subr.mxu0 0.0
    %1283 = vmatpush1.xpose.msra.mxu0 0.0
    %1284 = vmatprep.subr.mxu0 0.0
    %1285 = vmatpush1.xpose.msra.mxu0 0.0
    %1286 = vmatprep.subr.mxu0 0.0
    %1287 = vmatpush1.xpose.msra.mxu0 0.0
    %1288 = vmatprep.subr.mxu0 0.0
    %1289 = vmatpush1.xpose.msra.mxu0 0.0
    %1290 = vmatprep.subr.mxu0 0.0
    %1291 = vmatpush1.xpose.msra.mxu0 0.0
    %1292 = vmatprep.mubr.f32.mxu0 0.0
    %1293 = vmatmul.mubr.f32.gmra.mrb[0].mxu0 %v1175
    %v1294 = vpop.f32.mrb[0].mxu0
    %v1295 = vadd.f32 %v159, %v1294
    %v1296 = vpop.f32.mrb[0].mxu0
    %1297 = vmatprep.mubr.f32.mxu0 0.0
    %1298 = vmatmul.mubr.f32.gmra.mrb[0].mxu0 %v1178
    %v1299 = vpop.f32.mrb[0].mxu0
    %v1300 = vadd.f32 %v160, %v1299
    %v1301 = vpop.f32.mrb[0].mxu0
    %1302 = vdwg.mxu0
    %v1303 = vsel %vm245, %v1295, -inf
    %1304 = vmax.xlane.f32.xlu0 %v1303
    %v1305 = vpop.xlane.xlu0 %1304
    %v1306 = vsel %vm245, %v1300, -inf
    %1307 = vmax.xlane.f32.xlu0 %v1306
    %v1308 = vpop.xlane.xlu0 %1307
    %vm1309 = vcmask 523520
    %v1310 = vsel %vm1309, %v1295, -inf
    %1311 = vmax.xlane.f32.xlu0 %v1310
    %v1312 = vpop.xlane.xlu0 %1311
    %v1313 = vsel %vm1309, %v1300, -inf
    %1314 = vmax.xlane.f32.xlu0 %v1313
    %v1315 = vpop.xlane.xlu0 %1314
    %vm1316 = vcmask 785920
    %v1317 = vsel %vm1316, %v1295, -inf
    %1318 = vmax.xlane.f32.xlu0 %v1317
    %v1319 = vpop.xlane.xlu0 %1318
    %v1320 = vsel %vm1316, %v1300, -inf
    %1321 = vmax.xlane.f32.xlu0 %v1320
    %v1322 = vpop.xlane.xlu0 %1321
    %vm1323 = vcmask 1048320
    %v1324 = vsel %vm1323, %v1295, -inf
    %1325 = vmax.xlane.f32.xlu0 %v1324
    %v1326 = vpop.xlane.xlu0 %1325
    %v1327 = vsel %vm1323, %v1300, -inf
    %1328 = vmax.xlane.f32.xlu0 %v1327
    %v1329 = vpop.xlane.xlu0 %1328
    %v1330 = vsel %vm245, %v1305, %v1312
    %v1331 = vsel %vm245, %v1308, %v1315
    %v1332 = vsel %vm758, %v1330, %v1319
    %v1333 = vsel %vm758, %v1331, %v1322
    %vm1334 = vcmask 785408
    %v1335 = vsel %vm1334, %v1332, %v1326
    %v1336 = vsel %vm1334, %v1333, %v1329
    %v1337 = vsub.f32 %v1295, %v1335
    %v1338 = vsub.f32 %v1300, %v1336
    %v1339 = vmul.f32 %v1337, 1.442695
    %v1340 = vpow.pop %v1339
    %v1341 = vmul.f32 %v1338, 1.442695
    %v1342 = vpow.pop %v1341
    %1343 = vmatprep.subr.mxu0 0.0
    %1344 = vmatpush1.msra.mxu0 %v193
    %1345 = vmatprep.subr.mxu0 0.0
    %1346 = vmatpush1.msra.mxu0 %v194
    %1347 = vmatprep.subr.mxu0 0.0
    %1348 = vmatpush1.msra.mxu0 %v195
    %1349 = vmatprep.subr.mxu0 0.0
    %1350 = vmatpush1.msra.mxu0 %v196
    %1351 = vmatprep.subr.mxu0 0.0
    %1352 = vmatpush1.msra.mxu0 %v197
    %1353 = vmatprep.subr.mxu0 0.0
    %1354 = vmatpush1.msra.mxu0 %v198
    %1355 = vmatprep.subr.mxu0 0.0
    %1356 = vmatpush1.msra.mxu0 %v199
    %1357 = vmatprep.subr.mxu0 0.0
    %1358 = vmatpush1.msra.mxu0 %v200
    %1359 = vmatprep.subr.mxu0 0.0
    %1360 = vmatpush1.msra.mxu0 %v201
    %1361 = vmatprep.subr.mxu0 0.0
    %1362 = vmatpush1.msra.mxu0 %v202
    %1363 = vmatprep.subr.mxu0 0.0
    %1364 = vmatpush1.msra.mxu0 %v203
    %1365 = vmatprep.subr.mxu0 0.0
    %1366 = vmatpush1.msra.mxu0 %v204
    %1367 = vmatprep.subr.mxu0 0.0
    %1368 = vmatpush1.msra.mxu0 %v205
    %1369 = vmatprep.subr.mxu0 0.0
    %1370 = vmatpush1.msra.mxu0 %v206
    %1371 = vmatprep.subr.mxu0 0.0
    %1372 = vmatpush1.msra.mxu0 %v207
    %1373 = vmatprep.subr.mxu0 0.0
    %1374 = vmatpush1.msra.mxu0 %v208
    %1375 = vmatprep.subr.mxu0 0.0
    %1376 = vmatpush1.msra.mxu0 0.0
    %1377 = vmatprep.subr.mxu0 0.0
    %1378 = vmatpush1.msra.mxu0 0.0
    %1379 = vmatprep.subr.mxu0 0.0
    %1380 = vmatpush1.msra.mxu0 0.0
    %1381 = vmatprep.subr.mxu0 0.0
    %1382 = vmatpush1.msra.mxu0 0.0
    %1383 = vmatprep.subr.mxu0 0.0
    %1384 = vmatpush1.msra.mxu0 0.0
    %1385 = vmatprep.subr.mxu0 0.0
    %1386 = vmatpush1.msra.mxu0 0.0
    %1387 = vmatprep.subr.mxu0 0.0
    %1388 = vmatpush1.msra.mxu0 0.0
    %1389 = vmatprep.subr.mxu0 0.0
    %1390 = vmatpush1.msra.mxu0 0.0
    %1391 = vmatprep.subr.mxu0 0.0
    %1392 = vmatpush1.msra.mxu0 0.0
    %1393 = vmatprep.subr.mxu0 0.0
    %1394 = vmatpush1.msra.mxu0 0.0
    %1395 = vmatprep.subr.mxu0 0.0
    %1396 = vmatpush1.msra.mxu0 0.0
    %1397 = vmatprep.subr.mxu0 0.0
    %1398 = vmatpush1.msra.mxu0 0.0
    %1399 = vmatprep.subr.mxu0 0.0
    %1400 = vmatpush1.msra.mxu0 0.0
    %1401 = vmatprep.subr.mxu0 0.0
    %1402 = vmatpush1.msra.mxu0 0.0
    %1403 = vmatprep.subr.mxu0 0.0
    %1404 = vmatpush1.msra.mxu0 0.0
    %1405 = vmatprep.subr.mxu0 0.0
    %1406 = vmatpush1.msra.mxu0 0.0
    %1407 = vmatprep.mubr.f32.mxu0 0.0
    %1408 = vmatmul.mubr.f32.gmra.mrb[0].mxu0 %v1340
    %v1409 = vpop.f32.mrb[0].mxu0
    %v1410 = vadd.f32 0.0, %v1409
    %v1411 = vpop.f32.mrb[0].mxu0
    %1412 = vmatprep.mubr.f32.mxu0 0.0
    %1413 = vmatmul.mubr.f32.gmra.mrb[0].mxu0 %v1342
    %v1414 = vpop.f32.mrb[0].mxu0
    %v1415 = vadd.f32 0.0, %v1414
    %v1416 = vpop.f32.mrb[0].mxu0
    %1417 = vdwg.mxu0
    %v1418 = vrcp.pop %v1410
    %v1419 = vrcp.pop %v1415
    %v1420 = vmul.f32 %v1410, %v1418
    %v1421 = vmul.f32 %v1415, %v1419
    %v1422 = vsub.f32 2.0, %v1420
    %v1423 = vsub.f32 2.0, %v1421
    %v1424 = vmul.f32 %v1418, %v1422
    %v1425 = vmul.f32 %v1419, %v1423
    %v1426 = vmul.f32 %v1340, %v1424
    %v1427 = vmul.f32 %v1342, %v1425
    %1444 = vrot.lane.b32.xlu0 %v423, 96
    %v1445 = vpop.permute.xlu0 %1444
    %1446 = vrot.lane.b32.xlu0 %v424, 96
    %v1447 = vpop.permute.xlu0 %1446
    %1448 = vrot.lane.b32.xlu0 %v425, 96
    %v1449 = vpop.permute.xlu0 %1448
    %1450 = vrot.lane.b32.xlu0 %v426, 96
    %v1451 = vpop.permute.xlu0 %1450
    %1452 = vrot.lane.b32.xlu0 %v427, 96
    %v1453 = vpop.permute.xlu0 %1452
    %1454 = vrot.lane.b32.xlu0 %v428, 96
    %v1455 = vpop.permute.xlu0 %1454
    %1456 = vrot.lane.b32.xlu0 %v429, 96
    %v1457 = vpop.permute.xlu0 %1456
    %1458 = vrot.lane.b32.xlu0 %v430, 96
    %v1459 = vpop.permute.xlu0 %1458
    %1460 = vrot.lane.b32.xlu0 %v431, 96
    %v1461 = vpop.permute.xlu0 %1460
    %1462 = vrot.lane.b32.xlu0 %v432, 96
    %v1463 = vpop.permute.xlu0 %1462
    %1464 = vrot.lane.b32.xlu0 %v433, 96
    %v1465 = vpop.permute.xlu0 %1464
    %1466 = vrot.lane.b32.xlu0 %v434, 96
    %v1467 = vpop.permute.xlu0 %1466
    %1468 = vrot.lane.b32.xlu0 %v435, 96
    %v1469 = vpop.permute.xlu0 %1468
    %1470 = vrot.lane.b32.xlu0 %v436, 96
    %v1471 = vpop.permute.xlu0 %1470
    %1472 = vrot.lane.b32.xlu0 %v437, 96
    %v1473 = vpop.permute.xlu0 %1472
    %1474 = vrot.lane.b32.xlu0 %v438, 96
    %v1475 = vpop.permute.xlu0 %1474
    %1492 = vmatprep.subr.mxu0 0.0
    %1493 = vmatpush1.msra.mxu0 %v1445
    %1494 = vmatprep.subr.mxu0 0.0
    %1495 = vmatpush1.msra.mxu0 %v1447
    %1496 = vmatprep.subr.mxu0 0.0
    %1497 = vmatpush1.msra.mxu0 %v1449
    %1498 = vmatprep.subr.mxu0 0.0
    %1499 = vmatpush1.msra.mxu0 %v1451
    %1500 = vmatprep.subr.mxu0 0.0
    %1501 = vmatpush1.msra.mxu0 %v1453
    %1502 = vmatprep.subr.mxu0 0.0
    %1503 = vmatpush1.msra.mxu0 %v1455
    %1504 = vmatprep.subr.mxu0 0.0
    %1505 = vmatpush1.msra.mxu0 %v1457
    %1506 = vmatprep.subr.mxu0 0.0
    %1507 = vmatpush1.msra.mxu0 %v1459
    %1508 = vmatprep.subr.mxu0 0.0
    %1509 = vmatpush1.msra.mxu0 %v1461
    %1510 = vmatprep.subr.mxu0 0.0
    %1511 = vmatpush1.msra.mxu0 %v1463
    %1512 = vmatprep.subr.mxu0 0.0
    %1513 = vmatpush1.msra.mxu0 %v1465
    %1514 = vmatprep.subr.mxu0 0.0
    %1515 = vmatpush1.msra.mxu0 %v1467
    %1516 = vmatprep.subr.mxu0 0.0
    %1517 = vmatpush1.msra.mxu0 %v1469
    %1518 = vmatprep.subr.mxu0 0.0
    %1519 = vmatpush1.msra.mxu0 %v1471
    %1520 = vmatprep.subr.mxu0 0.0
    %1521 = vmatpush1.msra.mxu0 %v1473
    %1522 = vmatprep.subr.mxu0 0.0
    %1523 = vmatpush1.msra.mxu0 %v1475
    %1524 = vmatprep.subr.mxu0 0.0
    %1525 = vmatpush1.msra.mxu0 0.0
    %1526 = vmatprep.subr.mxu0 0.0
    %1527 = vmatpush1.msra.mxu0 0.0
    %1528 = vmatprep.subr.mxu0 0.0
    %1529 = vmatpush1.msra.mxu0 0.0
    %1530 = vmatprep.subr.mxu0 0.0
    %1531 = vmatpush1.msra.mxu0 0.0
    %1532 = vmatprep.subr.mxu0 0.0
    %1533 = vmatpush1.msra.mxu0 0.0
    %1534 = vmatprep.subr.mxu0 0.0
    %1535 = vmatpush1.msra.mxu0 0.0
    %1536 = vmatprep.subr.mxu0 0.0
    %1537 = vmatpush1.msra.mxu0 0.0
    %1538 = vmatprep.subr.mxu0 0.0
    %1539 = vmatpush1.msra.mxu0 0.0
    %1540 = vmatprep.subr.mxu0 0.0
    %1541 = vmatpush1.msra.mxu0 0.0
    %1542 = vmatprep.subr.mxu0 0.0
    %1543 = vmatpush1.msra.mxu0 0.0
    %1544 = vmatprep.subr.mxu0 0.0
    %1545 = vmatpush1.msra.mxu0 0.0
    %1546 = vmatprep.subr.mxu0 0.0
    %1547 = vmatpush1.msra.mxu0 0.0
    %1548 = vmatprep.subr.mxu0 0.0
    %1549 = vmatpush1.msra.mxu0 0.0
    %1550 = vmatprep.subr.mxu0 0.0
    %1551 = vmatpush1.msra.mxu0 0.0
    %1552 = vmatprep.subr.mxu0 0.0
    %1553 = vmatpush1.msra.mxu0 0.0
    %1554 = vmatprep.subr.mxu0 0.0
    %1555 = vmatpush1.msra.mxu0 0.0
    %1556 = vmatprep.mubr.f32.mxu0 0.0
    %1557 = vmatmul.mubr.f32.gmra.mrb[0].mxu0 %v1426
    %v1558 = vpop.f32.mrb[0].mxu0
    %v1559 = vadd.f32 0.0, %v1558
    %v1560 = vpop.f32.mrb[0].mxu0
    %1561 = vmatprep.mubr.f32.mxu0 0.0
    %1562 = vmatmul.mubr.f32.gmra.mrb[0].mxu0 %v1427
    %v1563 = vpop.f32.mrb[0].mxu0
    %v1564 = vadd.f32 0.0, %v1563
    %v1565 = vpop.f32.mrb[0].mxu0
    %1566 = vdwg.mxu0
    %v1567 = vlaneseq
    %v1568 = vshrl.u32 %v1567, 7
    %v1569 = vsub.s32 5, %v1568
    %v1570 = vrot.slane %v149, %v1569
    %v1572 = vsel %vm245, %v1559, 0
    %v1575 = vsel %vm245, %v1564, 0
    %1577 = vmatprep.subr.mxu0 0.0
    %1578 = vmatpush1.msra.mxu0 %v221
    %1579 = vmatprep.subr.mxu0 0.0
    %1580 = vmatpush1.msra.mxu0 %v222
    %1581 = vmatprep.subr.mxu0 0.0
    %1582 = vmatpush1.msra.mxu0 %v223
    %1583 = vmatprep.subr.mxu0 0.0
    %1584 = vmatpush1.msra.mxu0 %v224
    %1585 = vmatprep.subr.mxu0 0.0
    %1586 = vmatpush1.msra.mxu0 0.0
    %1587 = vmatprep.subr.mxu0 0.0
    %1588 = vmatpush1.msra.mxu0 0.0
    %1589 = vmatprep.subr.mxu0 0.0
    %1590 = vmatpush1.msra.mxu0 0.0
    %1591 = vmatprep.subr.mxu0 0.0
    %1592 = vmatpush1.msra.mxu0 0.0
    %1593 = vmatprep.subr.mxu0 0.0
    %1594 = vmatpush1.msra.mxu0 0.0
    %1595 = vmatprep.subr.mxu0 0.0
    %1596 = vmatpush1.msra.mxu0 0.0
    %1597 = vmatprep.subr.mxu0 0.0
    %1598 = vmatpush1.msra.mxu0 0.0
    %1599 = vmatprep.subr.mxu0 0.0
    %1600 = vmatpush1.msra.mxu0 0.0
    %1601 = vmatprep.subr.mxu0 0.0
    %1602 = vmatpush1.msra.mxu0 0.0
    %1603 = vmatprep.subr.mxu0 0.0
    %1604 = vmatpush1.msra.mxu0 0.0
    %1605 = vmatprep.subr.mxu0 0.0
    %1606 = vmatpush1.msra.mxu0 0.0
    %1607 = vmatprep.subr.mxu0 0.0
    %1608 = vmatpush1.msra.mxu0 0.0
    %1609 = vmatprep.subr.mxu0 0.0
    %1610 = vmatpush1.msra.mxu0 0.0
    %1611 = vmatprep.subr.mxu0 0.0
    %1612 = vmatpush1.msra.mxu0 0.0
    %1613 = vmatprep.subr.mxu0 0.0
    %1614 = vmatpush1.msra.mxu0 0.0
    %1615 = vmatprep.subr.mxu0 0.0
    %1616 = vmatpush1.msra.mxu0 0.0
    %1617 = vmatprep.subr.mxu0 0.0
    %1618 = vmatpush1.msra.mxu0 0.0
    %1619 = vmatprep.subr.mxu0 0.0
    %1620 = vmatpush1.msra.mxu0 0.0
    %1621 = vmatprep.subr.mxu0 0.0
    %1622 = vmatpush1.msra.mxu0 0.0
    %1623 = vmatprep.subr.mxu0 0.0
    %1624 = vmatpush1.msra.mxu0 0.0
    %1625 = vmatprep.subr.mxu0 0.0
    %1626 = vmatpush1.msra.mxu0 0.0
    %1627 = vmatprep.subr.mxu0 0.0
    %1628 = vmatpush1.msra.mxu0 0.0
    %1629 = vmatprep.subr.mxu0 0.0
    %1630 = vmatpush1.msra.mxu0 0.0
    %1631 = vmatprep.subr.mxu0 0.0
    %1632 = vmatpush1.msra.mxu0 0.0
    %1633 = vmatprep.subr.mxu0 0.0
    %1634 = vmatpush1.msra.mxu0 0.0
    %1635 = vmatprep.subr.mxu0 0.0
    %1636 = vmatpush1.msra.mxu0 0.0
    %1637 = vmatprep.subr.mxu0 0.0
    %1638 = vmatpush1.msra.mxu0 0.0
    %1639 = vmatprep.subr.mxu0 0.0
    %1640 = vmatpush1.msra.mxu0 0.0
    %1641 = vmatprep.mubr.f32.mxu0 0.0
    %1642 = vmatmul.mubr.f32.gmra.mrb[0].mxu0 %v1572
    %v1643 = vpop.f32.mrb[0].mxu0
    %v1644 = vadd.f32 %v1570, %v1643
    %v1645 = vpop.f32.mrb[0].mxu0
    %1646 = vmatprep.mubr.f32.mxu0 0.0
    %1647 = vmatmul.mubr.f32.gmra.mrb[0].mxu0 %v1575
    %v1648 = vpop.f32.mrb[0].mxu0
    %v1649 = vadd.f32 %v1570, %v1648
    %v1650 = vpop.f32.mrb[0].mxu0
    %1651 = vdwg.mxu0
    %v1652 = vadd.f32 %v1087, %v1644
    %v1653 = vadd.f32 %v1088, %v1649
    %v1654 = vsel %vm245, %v1652, 0.0
    %1655 = vadd.xlane.f32.xlu0 %v1654
    %v1656 = vpop.xlane.xlu0 %1655
    %v1657 = vsel %vm245, %v1653, 0.0
    %1658 = vadd.xlane.f32.xlu0 %v1657
    %v1659 = vpop.xlane.xlu0 %1658
    %v1660 = vmul.f32 %v1656, %v1056
    %v1661 = vmul.f32 %v1659, %v1056
    %v1662 = vsub.f32 %v1652, %v1660
    %v1663 = vsub.f32 %v1653, %v1661
    %v1664 = vmul.f32 %v1662, %v1662
    %v1665 = vmul.f32 %v1663, %v1663
    %v1666 = vsel %vm245, %v1664, 0.0
    %1667 = vadd.xlane.f32.xlu0 %v1666
    %v1668 = vpop.xlane.xlu0 %1667
    %v1669 = vsel %vm245, %v1665, 0.0
    %1670 = vadd.xlane.f32.xlu0 %v1669
    %v1671 = vpop.xlane.xlu0 %1670
    %v1672 = vmul.f32 %v1668, %v1056
    %v1673 = vmul.f32 %v1671, %v1056
    %v1674 = vadd.f32 %v1672, 1e-05
    %v1675 = vadd.f32 %v1673, 1e-05
    %v1676 = vrsqrt.pop %v1674
    %v1677 = vrsqrt.pop %v1675
    %v1678 = vmul.f32 %v1662, %v1676
    %v1679 = vmul.f32 %v1663, %v1677
    %v1680 = vlaneseq
    %v1681 = vshrl.u32 %v1680, 7
    %v1682 = vsub.s32 0, %v1681
    %v1683 = vrot.slane %v150, %v1682
    %v1684 = vmul.f32 %v1678, %v1683
    %v1685 = vmul.f32 %v1679, %v1683
    %v1686 = vlaneseq
    %v1687 = vshrl.u32 %v1686, 7
    %v1688 = vsub.s32 1, %v1687
    %v1689 = vrot.slane %v150, %v1688
    %v1690 = vadd.f32 %v1684, %v1689
    %v1691 = vadd.f32 %v1685, %v1689
    %v1692 = vlaneseq
    %v1693 = vshrl.u32 %v1692, 7
    %v1694 = vsub.s32 2, %v1693
    %v1695 = vrot.slane %v149, %v1694
    %v1697 = vsel %vm245, %v1690, 0
    %v1700 = vsel %vm245, %v1691, 0
    %1702 = vmatprep.subr.mxu0 0.0
    %1703 = vmatpush1.msra.mxu0 %v225
    %1704 = vmatprep.subr.mxu0 0.0
    %1705 = vmatpush1.msra.mxu0 %v226
    %1706 = vmatprep.subr.mxu0 0.0
    %1707 = vmatpush1.msra.mxu0 %v227
    %1708 = vmatprep.subr.mxu0 0.0
    %1709 = vmatpush1.msra.mxu0 %v228
    %1710 = vmatprep.subr.mxu0 0.0
    %1711 = vmatpush1.msra.mxu0 0.0
    %1712 = vmatprep.subr.mxu0 0.0
    %1713 = vmatpush1.msra.mxu0 0.0
    %1714 = vmatprep.subr.mxu0 0.0
    %1715 = vmatpush1.msra.mxu0 0.0
    %1716 = vmatprep.subr.mxu0 0.0
    %1717 = vmatpush1.msra.mxu0 0.0
    %1718 = vmatprep.subr.mxu0 0.0
    %1719 = vmatpush1.msra.mxu0 0.0
    %1720 = vmatprep.subr.mxu0 0.0
    %1721 = vmatpush1.msra.mxu0 0.0
    %1722 = vmatprep.subr.mxu0 0.0
    %1723 = vmatpush1.msra.mxu0 0.0
    %1724 = vmatprep.subr.mxu0 0.0
    %1725 = vmatpush1.msra.mxu0 0.0
    %1726 = vmatprep.subr.mxu0 0.0
    %1727 = vmatpush1.msra.mxu0 0.0
    %1728 = vmatprep.subr.mxu0 0.0
    %1729 = vmatpush1.msra.mxu0 0.0
    %1730 = vmatprep.subr.mxu0 0.0
    %1731 = vmatpush1.msra.mxu0 0.0
    %1732 = vmatprep.subr.mxu0 0.0
    %1733 = vmatpush1.msra.mxu0 0.0
    %1734 = vmatprep.subr.mxu0 0.0
    %1735 = vmatpush1.msra.mxu0 0.0
    %1736 = vmatprep.subr.mxu0 0.0
    %1737 = vmatpush1.msra.mxu0 0.0
    %1738 = vmatprep.subr.mxu0 0.0
    %1739 = vmatpush1.msra.mxu0 0.0
    %1740 = vmatprep.subr.mxu0 0.0
    %1741 = vmatpush1.msra.mxu0 0.0
    %1742 = vmatprep.subr.mxu0 0.0
    %1743 = vmatpush1.msra.mxu0 0.0
    %1744 = vmatprep.subr.mxu0 0.0
    %1745 = vmatpush1.msra.mxu0 0.0
    %1746 = vmatprep.subr.mxu0 0.0
    %1747 = vmatpush1.msra.mxu0 0.0
    %1748 = vmatprep.subr.mxu0 0.0
    %1749 = vmatpush1.msra.mxu0 0.0
    %1750 = vmatprep.subr.mxu0 0.0
    %1751 = vmatpush1.msra.mxu0 0.0
    %1752 = vmatprep.subr.mxu0 0.0
    %1753 = vmatpush1.msra.mxu0 0.0
    %1754 = vmatprep.subr.mxu0 0.0
    %1755 = vmatpush1.msra.mxu0 0.0
    %1756 = vmatprep.subr.mxu0 0.0
    %1757 = vmatpush1.msra.mxu0 0.0
    %1758 = vmatprep.subr.mxu0 0.0
    %1759 = vmatpush1.msra.mxu0 0.0
    %1760 = vmatprep.subr.mxu0 0.0
    %1761 = vmatpush1.msra.mxu0 0.0
    %1762 = vmatprep.subr.mxu0 0.0
    %1763 = vmatpush1.msra.mxu0 0.0
    %1764 = vmatprep.subr.mxu0 0.0
    %1765 = vmatpush1.msra.mxu0 0.0
    %1766 = vmatprep.mubr.f32.mxu0 0.0
    %1767 = vmatmul.mubr.f32.gmra.mrb[0].mxu0 %v1697
    %v1768 = vpop.f32.mrb[0].mxu0
    %v1769 = vadd.f32 %v1695, %v1768
    %v1770 = vpop.f32.mrb[0].mxu0
    %1771 = vmatprep.mubr.f32.mxu0 0.0
    %1772 = vmatmul.mubr.f32.gmra.mrb[0].mxu0 %v1700
    %v1773 = vpop.f32.mrb[0].mxu0
    %v1774 = vadd.f32 %v1695, %v1773
    %v1775 = vpop.f32.mrb[0].mxu0
    %1776 = vdwg.mxu0
    %v1777 = vmax.f32 %v1769, 0.0
    %v1778 = vmax.f32 %v1774, 0.0
    %v1779 = vlaneseq
    %v1780 = vshrl.u32 %v1779, 7
    %v1781 = vsub.s32 4, %v1780
    %v1782 = vrot.slane %v150, %v1781
    %v1784 = vsel %vm758, %v1777, 0
    %v1787 = vsel %vm758, %v1778, 0
    %1789 = vmatprep.subr.mxu0 0.0
    %1790 = vmatpush1.msra.mxu0 %v229
    %1791 = vmatprep.subr.mxu0 0.0
    %1792 = vmatpush1.msra.mxu0 %v230
    %1793 = vmatprep.subr.mxu0 0.0
    %1794 = vmatpush1.msra.mxu0 %v231
    %1795 = vmatprep.subr.mxu0 0.0
    %1796 = vmatpush1.msra.mxu0 %v232
    %1797 = vmatprep.subr.mxu0 0.0
    %1798 = vmatpush1.msra.mxu0 %v233
    %1799 = vmatprep.subr.mxu0 0.0
    %1800 = vmatpush1.msra.mxu0 %v234
    %1801 = vmatprep.subr.mxu0 0.0
    %1802 = vmatpush1.msra.mxu0 %v235
    %1803 = vmatprep.subr.mxu0 0.0
    %1804 = vmatpush1.msra.mxu0 %v236
    %1805 = vmatprep.subr.mxu0 0.0
    %1806 = vmatpush1.msra.mxu0 0.0
    %1807 = vmatprep.subr.mxu0 0.0
    %1808 = vmatpush1.msra.mxu0 0.0
    %1809 = vmatprep.subr.mxu0 0.0
    %1810 = vmatpush1.msra.mxu0 0.0
    %1811 = vmatprep.subr.mxu0 0.0
    %1812 = vmatpush1.msra.mxu0 0.0
    %1813 = vmatprep.subr.mxu0 0.0
    %1814 = vmatpush1.msra.mxu0 0.0
    %1815 = vmatprep.subr.mxu0 0.0
    %1816 = vmatpush1.msra.mxu0 0.0
    %1817 = vmatprep.subr.mxu0 0.0
    %1818 = vmatpush1.msra.mxu0 0.0
    %1819 = vmatprep.subr.mxu0 0.0
    %1820 = vmatpush1.msra.mxu0 0.0
    %1821 = vmatprep.subr.mxu0 0.0
    %1822 = vmatpush1.msra.mxu0 0.0
    %1823 = vmatprep.subr.mxu0 0.0
    %1824 = vmatpush1.msra.mxu0 0.0
    %1825 = vmatprep.subr.mxu0 0.0
    %1826 = vmatpush1.msra.mxu0 0.0
    %1827 = vmatprep.subr.mxu0 0.0
    %1828 = vmatpush1.msra.mxu0 0.0
    %1829 = vmatprep.subr.mxu0 0.0
    %1830 = vmatpush1.msra.mxu0 0.0
    %1831 = vmatprep.subr.mxu0 0.0
    %1832 = vmatpush1.msra.mxu0 0.0
    %1833 = vmatprep.subr.mxu0 0.0
    %1834 = vmatpush1.msra.mxu0 0.0
    %1835 = vmatprep.subr.mxu0 0.0
    %1836 = vmatpush1.msra.mxu0 0.0
    %1837 = vmatprep.subr.mxu0 0.0
    %1838 = vmatpush1.msra.mxu0 0.0
    %1839 = vmatprep.subr.mxu0 0.0
    %1840 = vmatpush1.msra.mxu0 0.0
    %1841 = vmatprep.subr.mxu0 0.0
    %1842 = vmatpush1.msra.mxu0 0.0
    %1843 = vmatprep.subr.mxu0 0.0
    %1844 = vmatpush1.msra.mxu0 0.0
    %1845 = vmatprep.subr.mxu0 0.0
    %1846 = vmatpush1.msra.mxu0 0.0
    %1847 = vmatprep.subr.mxu0 0.0
    %1848 = vmatpush1.msra.mxu0 0.0
    %1849 = vmatprep.subr.mxu0 0.0
    %1850 = vmatpush1.msra.mxu0 0.0
    %1851 = vmatprep.subr.mxu0 0.0
    %1852 = vmatpush1.msra.mxu0 0.0
    %1853 = vmatprep.mubr.f32.mxu0 0.0
    %1854 = vmatmul.mubr.f32.gmra.mrb[0].mxu0 %v1784
    %v1855 = vpop.f32.mrb[0].mxu0
    %v1856 = vadd.f32 %v1782, %v1855
    %v1857 = vpop.f32.mrb[0].mxu0
    %1858 = vmatprep.mubr.f32.mxu0 0.0
    %1859 = vmatmul.mubr.f32.gmra.mrb[0].mxu0 %v1787
    %v1860 = vpop.f32.mrb[0].mxu0
    %v1861 = vadd.f32 %v1782, %v1860
    %v1862 = vpop.f32.mrb[0].mxu0
    %1863 = vdwg.mxu0
    %v1864 = vadd.f32 %v1690, %v1856
    %v1865 = vadd.f32 %v1691, %v1861
    %v1866 = vsel %vm245, %v1864, 0.0
    %1867 = vadd.xlane.f32.xlu0 %v1866
    %v1868 = vpop.xlane.xlu0 %1867
    %v1869 = vsel %vm245, %v1865, 0.0
    %1870 = vadd.xlane.f32.xlu0 %v1869
    %v1871 = vpop.xlane.xlu0 %1870
    %v1872 = vmul.f32 %v1868, %v1056
    %v1873 = vmul.f32 %v1871, %v1056
    %v1874 = vsub.f32 %v1864, %v1872
    %v1875 = vsub.f32 %v1865, %v1873
    %v1876 = vmul.f32 %v1874, %v1874
    %v1877 = vmul.f32 %v1875, %v1875
    %v1878 = vsel %vm245, %v1876, 0.0
    %1879 = vadd.xlane.f32.xlu0 %v1878
    %v1880 = vpop.xlane.xlu0 %1879
    %v1881 = vsel %vm245, %v1877, 0.0
    %1882 = vadd.xlane.f32.xlu0 %v1881
    %v1883 = vpop.xlane.xlu0 %1882
    %v1884 = vmul.f32 %v1880, %v1056
    %v1885 = vmul.f32 %v1883, %v1056
    %v1886 = vadd.f32 %v1884, 1e-05
    %v1887 = vadd.f32 %v1885, 1e-05
    %v1888 = vrsqrt.pop %v1886
    %v1889 = vrsqrt.pop %v1887
    %v1890 = vmul.f32 %v1874, %v1888
    %v1891 = vmul.f32 %v1875, %v1889
    %v1892 = vlaneseq
    %v1893 = vshrl.u32 %v1892, 7
    %v1894 = vsub.s32 2, %v1893
    %v1895 = vrot.slane %v150, %v1894
    %v1896 = vmul.f32 %v1890, %v1895
    %v1897 = vmul.f32 %v1891, %v1895
    %v1898 = vlaneseq
    %v1899 = vshrl.u32 %v1898, 7
    %v1900 = vsub.s32 3, %v1899
    %v1901 = vrot.slane %v150, %v1900
    %v1902 = vadd.f32 %v1896, %v1901
    %v1903 = vadd.f32 %v1897, %v1901
    %v1905 = vsel %vm245, %v1902, 0
    %v1908 = vsel %vm245, %v1903, 0
    %1910 = vmatprep.subr.mxu0 0.0
    %1911 = vmatpush1.msra.mxu0 %v209
    %1912 = vmatprep.subr.mxu0 0.0
    %1913 = vmatpush1.msra.mxu0 %v210
    %1914 = vmatprep.subr.mxu0 0.0
    %1915 = vmatpush1.msra.mxu0 %v211
    %1916 = vmatprep.subr.mxu0 0.0
    %1917 = vmatpush1.msra.mxu0 %v212
    %1918 = vmatprep.subr.mxu0 0.0
    %1919 = vmatpush1.msra.mxu0 0.0
    %1920 = vmatprep.subr.mxu0 0.0
    %1921 = vmatpush1.msra.mxu0 0.0
    %1922 = vmatprep.subr.mxu0 0.0
    %1923 = vmatpush1.msra.mxu0 0.0
    %1924 = vmatprep.subr.mxu0 0.0
    %1925 = vmatpush1.msra.mxu0 0.0
    %1926 = vmatprep.subr.mxu0 0.0
    %1927 = vmatpush1.msra.mxu0 0.0
    %1928 = vmatprep.subr.mxu0 0.0
    %1929 = vmatpush1.msra.mxu0 0.0
    %1930 = vmatprep.subr.mxu0 0.0
    %1931 = vmatpush1.msra.mxu0 0.0
    %1932 = vmatprep.subr.mxu0 0.0
    %1933 = vmatpush1.msra.mxu0 0.0
    %1934 = vmatprep.subr.mxu0 0.0
    %1935 = vmatpush1.msra.mxu0 0.0
    %1936 = vmatprep.subr.mxu0 0.0
    %1937 = vmatpush1.msra.mxu0 0.0
    %1938 = vmatprep.subr.mxu0 0.0
    %1939 = vmatpush1.msra.mxu0 0.0
    %1940 = vmatprep.subr.mxu0 0.0
    %1941 = vmatpush1.msra.mxu0 0.0
    %1942 = vmatprep.subr.mxu0 0.0
    %1943 = vmatpush1.msra.mxu0 0.0
    %1944 = vmatprep.subr.mxu0 0.0
    %1945 = vmatpush1.msra.mxu0 0.0
    %1946 = vmatprep.subr.mxu0 0.0
    %1947 = vmatpush1.msra.mxu0 0.0
    %1948 = vmatprep.subr.mxu0 0.0
    %1949 = vmatpush1.msra.mxu0 0.0
    %1950 = vmatprep.subr.mxu0 0.0
    %1951 = vmatpush1.msra.mxu0 0.0
    %1952 = vmatprep.subr.mxu0 0.0
    %1953 = vmatpush1.msra.mxu0 0.0
    %1954 = vmatprep.subr.mxu0 0.0
    %1955 = vmatpush1.msra.mxu0 0.0
    %1956 = vmatprep.subr.mxu0 0.0
    %1957 = vmatpush1.msra.mxu0 0.0
    %1958 = vmatprep.subr.mxu0 0.0
    %1959 = vmatpush1.msra.mxu0 0.0
    %1960 = vmatprep.subr.mxu0 0.0
    %1961 = vmatpush1.msra.mxu0 0.0
    %1962 = vmatprep.subr.mxu0 0.0
    %1963 = vmatpush1.msra.mxu0 0.0
    %1964 = vmatprep.subr.mxu0 0.0
    %1965 = vmatpush1.msra.mxu0 0.0
    %1966 = vmatprep.subr.mxu0 0.0
    %1967 = vmatpush1.msra.mxu0 0.0
    %1968 = vmatprep.subr.mxu0 0.0
    %1969 = vmatpush1.msra.mxu0 0.0
    %1970 = vmatprep.subr.mxu0 0.0
    %1971 = vmatpush1.msra.mxu0 0.0
    %1972 = vmatprep.subr.mxu0 0.0
    %1973 = vmatpush1.msra.mxu0 0.0
    %1974 = vmatprep.mubr.f32.mxu0 0.0
    %1975 = vmatmul.mubr.f32.gmra.mrb[0].mxu0 %v1905
    %v1976 = vpop.f32.mrb[0].mxu0
    %v1977 = vadd.f32 %v442, %v1976
    %v1978 = vpop.f32.mrb[0].mxu0
    %1979 = vmatprep.mubr.f32.mxu0 0.0
    %1980 = vmatmul.mubr.f32.gmra.mrb[0].mxu0 %v1908
    %v1981 = vpop.f32.mrb[0].mxu0
    %v1982 = vadd.f32 %v442, %v1981
    %v1983 = vpop.f32.mrb[0].mxu0
    %1984 = vdwg.mxu0
    %v1985 = vmul.f32 %v1977, %v533
    %v1986 = vmul.f32 %v1982, %v535
    %v1987 = vmul.f32 %v1977, %v537
    %v1988 = vmul.f32 %v1982, %v539
    %v1989 = vmul.f32 %v1977, %v541
    %v1990 = vmul.f32 %v1982, %v543
    %v1991 = vmul.f32 %v1977, %v545
    %v1992 = vmul.f32 %v1982, %v547
    %v1993 = vmul.f32 %v1977, %v565
    %v1994 = vmul.f32 %v1982, %v567
    %v1995 = vmul.f32 %v1977, %v569
    %v1996 = vmul.f32 %v1982, %v571
    %v1997 = vmul.f32 %v1977, %v573
    %v1998 = vmul.f32 %v1982, %v575
    %v1999 = vmul.f32 %v1977, %v577
    %v2000 = vmul.f32 %v1982, %v579
    %2009 = vrot.lane.b32.xlu0 %v1985, 96
    %v2010 = vpop.permute.xlu0 %2009
    %2011 = vrot.lane.b32.xlu0 %v1986, 96
    %v2012 = vpop.permute.xlu0 %2011
    %2013 = vrot.lane.b32.xlu0 %v1987, 96
    %v2014 = vpop.permute.xlu0 %2013
    %2015 = vrot.lane.b32.xlu0 %v1988, 96
    %v2016 = vpop.permute.xlu0 %2015
    %2017 = vrot.lane.b32.xlu0 %v1989, 96
    %v2018 = vpop.permute.xlu0 %2017
    %2019 = vrot.lane.b32.xlu0 %v1990, 96
    %v2020 = vpop.permute.xlu0 %2019
    %2021 = vrot.lane.b32.xlu0 %v1991, 96
    %v2022 = vpop.permute.xlu0 %2021
    %2023 = vrot.lane.b32.xlu0 %v1992, 96
    %v2024 = vpop.permute.xlu0 %2023
    %v2026 = vsel %vm245, %v1977, 0
    %v2029 = vsel %vm245, %v1982, 0
    %v2031 = vsel %vm245, %v2010, 0
    %v2033 = vsel %vm245, %v2012, 0
    %v2035 = vsel %vm245, %v2014, 0
    %v2037 = vsel %vm245, %v2016, 0
    %v2039 = vsel %vm245, %v2018, 0
    %v2041 = vsel %vm245, %v2020, 0
    %v2043 = vsel %vm245, %v2022, 0
    %v2045 = vsel %vm245, %v2024, 0
    %2047 = vmatprep.subr.mxu0 0.0
    %2048 = vmatpush1.xpose.msra.mxu0 %v2031
    %2049 = vmatprep.subr.mxu0 0.0
    %2050 = vmatpush1.xpose.msra.mxu0 %v2033
    %2051 = vmatprep.subr.mxu0 0.0
    %2052 = vmatpush1.xpose.msra.mxu0 %v2035
    %2053 = vmatprep.subr.mxu0 0.0
    %2054 = vmatpush1.xpose.msra.mxu0 %v2037
    %2055 = vmatprep.subr.mxu0 0.0
    %2056 = vmatpush1.xpose.msra.mxu0 %v2039
    %2057 = vmatprep.subr.mxu0 0.0
    %2058 = vmatpush1.xpose.msra.mxu0 %v2041
    %2059 = vmatprep.subr.mxu0 0.0
    %2060 = vmatpush1.xpose.msra.mxu0 %v2043
    %2061 = vmatprep.subr.mxu0 0.0
    %2062 = vmatpush1.xpose.msra.mxu0 %v2045
    %2063 = vmatprep.subr.mxu0 0.0
    %2064 = vmatpush1.xpose.msra.mxu0 0.0
    %2065 = vmatprep.subr.mxu0 0.0
    %2066 = vmatpush1.xpose.msra.mxu0 0.0
    %2067 = vmatprep.subr.mxu0 0.0
    %2068 = vmatpush1.xpose.msra.mxu0 0.0
    %2069 = vmatprep.subr.mxu0 0.0
    %2070 = vmatpush1.xpose.msra.mxu0 0.0
    %2071 = vmatprep.subr.mxu0 0.0
    %2072 = vmatpush1.xpose.msra.mxu0 0.0
    %2073 = vmatprep.subr.mxu0 0.0
    %2074 = vmatpush1.xpose.msra.mxu0 0.0
    %2075 = vmatprep.subr.mxu0 0.0
    %2076 = vmatpush1.xpose.msra.mxu0 0.0
    %2077 = vmatprep.subr.mxu0 0.0
    %2078 = vmatpush1.xpose.msra.mxu0 0.0
    %2079 = vmatprep.subr.mxu0 0.0
    %2080 = vmatpush1.xpose.msra.mxu0 0.0
    %2081 = vmatprep.subr.mxu0 0.0
    %2082 = vmatpush1.xpose.msra.mxu0 0.0
    %2083 = vmatprep.subr.mxu0 0.0
    %2084 = vmatpush1.xpose.msra.mxu0 0.0
    %2085 = vmatprep.subr.mxu0 0.0
    %2086 = vmatpush1.xpose.msra.mxu0 0.0
    %2087 = vmatprep.subr.mxu0 0.0
    %2088 = vmatpush1.xpose.msra.mxu0 0.0
    %2089 = vmatprep.subr.mxu0 0.0
    %2090 = vmatpush1.xpose.msra.mxu0 0.0
    %2091 = vmatprep.subr.mxu0 0.0
    %2092 = vmatpush1.xpose.msra.mxu0 0.0
    %2093 = vmatprep.subr.mxu0 0.0
    %2094 = vmatpush1.xpose.msra.mxu0 0.0
    %2095 = vmatprep.subr.mxu0 0.0
    %2096 = vmatpush1.xpose.msra.mxu0 0.0
    %2097 = vmatprep.subr.mxu0 0.0
    %2098 = vmatpush1.xpose.msra.mxu0 0.0
    %2099 = vmatprep.subr.mxu0 0.0
    %2100 = vmatpush1.xpose.msra.mxu0 0.0
    %2101 = vmatprep.subr.mxu0 0.0
    %2102 = vmatpush1.xpose.msra.mxu0 0.0
    %2103 = vmatprep.subr.mxu0 0.0
    %2104 = vmatpush1.xpose.msra.mxu0 0.0
    %2105 = vmatprep.subr.mxu0 0.0
    %2106 = vmatpush1.xpose.msra.mxu0 0.0
    %2107 = vmatprep.subr.mxu0 0.0
    %2108 = vmatpush1.xpose.msra.mxu0 0.0
    %2109 = vmatprep.subr.mxu0 0.0
    %2110 = vmatpush1.xpose.msra.mxu0 0.0
    %2111 = vmatprep.mubr.f32.mxu0 0.0
    %2112 = vmatmul.mubr.f32.gmra.mrb[0].mxu0 %v2026
    %v2113 = vpop.f32.mrb[0].mxu0
    %v2114 = vadd.f32 %v157, %v2113
    %v2115 = vpop.f32.mrb[0].mxu0
    %2116 = vmatprep.mubr.f32.mxu0 0.0
    %2117 = vmatmul.mubr.f32.gmra.mrb[0].mxu0 %v2029
    %v2118 = vpop.f32.mrb[0].mxu0
    %v2119 = vadd.f32 %v158, %v2118
    %v2120 = vpop.f32.mrb[0].mxu0
    %2121 = vdwg.mxu0
    %v2122 = vsel %vm717, %v2114, -inf
    %2123 = vmax.xlane.f32.xlu0 %v2122
    %v2124 = vpop.xlane.xlu0 %2123
    %v2125 = vsel %vm717, %v2119, -inf
    %2126 = vmax.xlane.f32.xlu0 %v2125
    %v2127 = vpop.xlane.xlu0 %2126
    %v2128 = vsel %vm724, %v2114, -inf
    %2129 = vmax.xlane.f32.xlu0 %v2128
    %v2130 = vpop.xlane.xlu0 %2129
    %v2131 = vsel %vm724, %v2119, -inf
    %2132 = vmax.xlane.f32.xlu0 %v2131
    %v2133 = vpop.xlane.xlu0 %2132
    %v2134 = vsel %vm731, %v2114, -inf
    %2135 = vmax.xlane.f32.xlu0 %v2134
    %v2136 = vpop.xlane.xlu0 %2135
    %v2137 = vsel %vm731, %v2119, -inf
    %2138 = vmax.xlane.f32.xlu0 %v2137
    %v2139 = vpop.xlane.xlu0 %2138
    %v2140 = vsel %vm738, %v2114, -inf
    %2141 = vmax.xlane.f32.xlu0 %v2140
    %v2142 = vpop.xlane.xlu0 %2141
    %v2143 = vsel %vm738, %v2119, -inf
    %2144 = vmax.xlane.f32.xlu0 %v2143
    %v2145 = vpop.xlane.xlu0 %2144
    %v2146 = vsel %vm717, %v2124, %v2130
    %v2147 = vsel %vm717, %v2127, %v2133
    %v2148 = vsel %vm245, %v2146, %v2136
    %v2149 = vsel %vm245, %v2147, %v2139
    %v2150 = vsel %vm749, %v2148, %v2142
    %v2151 = vsel %vm749, %v2149, %v2145
    %v2152 = vsub.f32 %v2114, %v2150
    %v2153 = vsub.f32 %v2119, %v2151
    %v2154 = vmul.f32 %v2152, 1.442695
    %v2155 = vpow.pop %v2154
    %v2156 = vmul.f32 %v2153, 1.442695
    %v2157 = vpow.pop %v2156
    %v2159 = vsel %vm758, %v2155, 0
    %v2162 = vsel %vm758, %v2157, 0
    %2164 = vmatprep.subr.mxu0 0.0
    %2165 = vmatpush1.msra.mxu0 %v185
    %2166 = vmatprep.subr.mxu0 0.0
    %2167 = vmatpush1.msra.mxu0 %v186
    %2168 = vmatprep.subr.mxu0 0.0
    %2169 = vmatpush1.msra.mxu0 %v187
    %2170 = vmatprep.subr.mxu0 0.0
    %2171 = vmatpush1.msra.mxu0 %v188
    %2172 = vmatprep.subr.mxu0 0.0
    %2173 = vmatpush1.msra.mxu0 %v189
    %2174 = vmatprep.subr.mxu0 0.0
    %2175 = vmatpush1.msra.mxu0 %v190
    %2176 = vmatprep.subr.mxu0 0.0
    %2177 = vmatpush1.msra.mxu0 %v191
    %2178 = vmatprep.subr.mxu0 0.0
    %2179 = vmatpush1.msra.mxu0 %v192
    %2180 = vmatprep.subr.mxu0 0.0
    %2181 = vmatpush1.msra.mxu0 0.0
    %2182 = vmatprep.subr.mxu0 0.0
    %2183 = vmatpush1.msra.mxu0 0.0
    %2184 = vmatprep.subr.mxu0 0.0
    %2185 = vmatpush1.msra.mxu0 0.0
    %2186 = vmatprep.subr.mxu0 0.0
    %2187 = vmatpush1.msra.mxu0 0.0
    %2188 = vmatprep.subr.mxu0 0.0
    %2189 = vmatpush1.msra.mxu0 0.0
    %2190 = vmatprep.subr.mxu0 0.0
    %2191 = vmatpush1.msra.mxu0 0.0
    %2192 = vmatprep.subr.mxu0 0.0
    %2193 = vmatpush1.msra.mxu0 0.0
    %2194 = vmatprep.subr.mxu0 0.0
    %2195 = vmatpush1.msra.mxu0 0.0
    %2196 = vmatprep.subr.mxu0 0.0
    %2197 = vmatpush1.msra.mxu0 0.0
    %2198 = vmatprep.subr.mxu0 0.0
    %2199 = vmatpush1.msra.mxu0 0.0
    %2200 = vmatprep.subr.mxu0 0.0
    %2201 = vmatpush1.msra.mxu0 0.0
    %2202 = vmatprep.subr.mxu0 0.0
    %2203 = vmatpush1.msra.mxu0 0.0
    %2204 = vmatprep.subr.mxu0 0.0
    %2205 = vmatpush1.msra.mxu0 0.0
    %2206 = vmatprep.subr.mxu0 0.0
    %2207 = vmatpush1.msra.mxu0 0.0
    %2208 = vmatprep.subr.mxu0 0.0
    %2209 = vmatpush1.msra.mxu0 0.0
    %2210 = vmatprep.subr.mxu0 0.0
    %2211 = vmatpush1.msra.mxu0 0.0
    %2212 = vmatprep.subr.mxu0 0.0
    %2213 = vmatpush1.msra.mxu0 0.0
    %2214 = vmatprep.subr.mxu0 0.0
    %2215 = vmatpush1.msra.mxu0 0.0
    %2216 = vmatprep.subr.mxu0 0.0
    %2217 = vmatpush1.msra.mxu0 0.0
    %2218 = vmatprep.subr.mxu0 0.0
    %2219 = vmatpush1.msra.mxu0 0.0
    %2220 = vmatprep.subr.mxu0 0.0
    %2221 = vmatpush1.msra.mxu0 0.0
    %2222 = vmatprep.subr.mxu0 0.0
    %2223 = vmatpush1.msra.mxu0 0.0
    %2224 = vmatprep.subr.mxu0 0.0
    %2225 = vmatpush1.msra.mxu0 0.0
    %2226 = vmatprep.subr.mxu0 0.0
    %2227 = vmatpush1.msra.mxu0 0.0
    %2228 = vmatprep.mubr.f32.mxu0 0.0
    %2229 = vmatmul.mubr.f32.gmra.mrb[0].mxu0 %v2159
    %v2230 = vpop.f32.mrb[0].mxu0
    %v2231 = vadd.f32 0.0, %v2230
    %v2232 = vpop.f32.mrb[0].mxu0
    %2233 = vmatprep.mubr.f32.mxu0 0.0
    %2234 = vmatmul.mubr.f32.gmra.mrb[0].mxu0 %v2162
    %v2235 = vpop.f32.mrb[0].mxu0
    %v2236 = vadd.f32 0.0, %v2235
    %v2237 = vpop.f32.mrb[0].mxu0
    %2238 = vdwg.mxu0
    %v2239 = vrcp.pop %v2231
    %v2240 = vrcp.pop %v2236
    %v2241 = vmul.f32 %v2231, %v2239
    %v2242 = vmul.f32 %v2236, %v2240
    %v2243 = vsub.f32 2.0, %v2241
    %v2244 = vsub.f32 2.0, %v2242
    %v2245 = vmul.f32 %v2239, %v2243
    %v2246 = vmul.f32 %v2240, %v2244
    %v2247 = vmul.f32 %v2155, %v2245
    %v2248 = vmul.f32 %v2157, %v2246
    %2257 = vrot.lane.b32.xlu0 %v1993, 64
    %v2258 = vpop.permute.xlu0 %2257
    %2259 = vrot.lane.b32.xlu0 %v1994, 64
    %v2260 = vpop.permute.xlu0 %2259
    %2261 = vrot.lane.b32.xlu0 %v1995, 64
    %v2262 = vpop.permute.xlu0 %2261
    %2263 = vrot.lane.b32.xlu0 %v1996, 64
    %v2264 = vpop.permute.xlu0 %2263
    %2265 = vrot.lane.b32.xlu0 %v1997, 64
    %v2266 = vpop.permute.xlu0 %2265
    %2267 = vrot.lane.b32.xlu0 %v1998, 64
    %v2268 = vpop.permute.xlu0 %2267
    %2269 = vrot.lane.b32.xlu0 %v1999, 64
    %v2270 = vpop.permute.xlu0 %2269
    %2271 = vrot.lane.b32.xlu0 %v2000, 64
    %v2272 = vpop.permute.xlu0 %2271
    %v2282 = vsel %vm758, %v2247, 0
    %v2285 = vsel %vm758, %v2248, 0
    %2287 = vmatprep.subr.mxu0 0.0
    %2288 = vmatpush1.msra.mxu0 %v2258
    %2289 = vmatprep.subr.mxu0 0.0
    %2290 = vmatpush1.msra.mxu0 %v2260
    %2291 = vmatprep.subr.mxu0 0.0
    %2292 = vmatpush1.msra.mxu0 %v2262
    %2293 = vmatprep.subr.mxu0 0.0
    %2294 = vmatpush1.msra.mxu0 %v2264
    %2295 = vmatprep.subr.mxu0 0.0
    %2296 = vmatpush1.msra.mxu0 %v2266
    %2297 = vmatprep.subr.mxu0 0.0
    %2298 = vmatpush1.msra.mxu0 %v2268
    %2299 = vmatprep.subr.mxu0 0.0
    %2300 = vmatpush1.msra.mxu0 %v2270
    %2301 = vmatprep.subr.mxu0 0.0
    %2302 = vmatpush1.msra.mxu0 %v2272
    %2303 = vmatprep.subr.mxu0 0.0
    %2304 = vmatpush1.msra.mxu0 0.0
    %2305 = vmatprep.subr.mxu0 0.0
    %2306 = vmatpush1.msra.mxu0 0.0
    %2307 = vmatprep.subr.mxu0 0.0
    %2308 = vmatpush1.msra.mxu0 0.0
    %2309 = vmatprep.subr.mxu0 0.0
    %2310 = vmatpush1.msra.mxu0 0.0
    %2311 = vmatprep.subr.mxu0 0.0
    %2312 = vmatpush1.msra.mxu0 0.0
    %2313 = vmatprep.subr.mxu0 0.0
    %2314 = vmatpush1.msra.mxu0 0.0
    %2315 = vmatprep.subr.mxu0 0.0
    %2316 = vmatpush1.msra.mxu0 0.0
    %2317 = vmatprep.subr.mxu0 0.0
    %2318 = vmatpush1.msra.mxu0 0.0
    %2319 = vmatprep.subr.mxu0 0.0
    %2320 = vmatpush1.msra.mxu0 0.0
    %2321 = vmatprep.subr.mxu0 0.0
    %2322 = vmatpush1.msra.mxu0 0.0
    %2323 = vmatprep.subr.mxu0 0.0
    %2324 = vmatpush1.msra.mxu0 0.0
    %2325 = vmatprep.subr.mxu0 0.0
    %2326 = vmatpush1.msra.mxu0 0.0
    %2327 = vmatprep.subr.mxu0 0.0
    %2328 = vmatpush1.msra.mxu0 0.0
    %2329 = vmatprep.subr.mxu0 0.0
    %2330 = vmatpush1.msra.mxu0 0.0
    %2331 = vmatprep.subr.mxu0 0.0
    %2332 = vmatpush1.msra.mxu0 0.0
    %2333 = vmatprep.subr.mxu0 0.0
    %2334 = vmatpush1.msra.mxu0 0.0
    %2335 = vmatprep.subr.mxu0 0.0
    %2336 = vmatpush1.msra.mxu0 0.0
    %2337 = vmatprep.subr.mxu0 0.0
    %2338 = vmatpush1.msra.mxu0 0.0
    %2339 = vmatprep.subr.mxu0 0.0
    %2340 = vmatpush1.msra.mxu0 0.0
    %2341 = vmatprep.subr.mxu0 0.0
    %2342 = vmatpush1.msra.mxu0 0.0
    %2343 = vmatprep.subr.mxu0 0.0
    %2344 = vmatpush1.msra.mxu0 0.0
    %2345 = vmatprep.subr.mxu0 0.0
    %2346 = vmatpush1.msra.mxu0 0.0
    %2347 = vmatprep.subr.mxu0 0.0
    %2348 = vmatpush1.msra.mxu0 0.0
    %2349 = vmatprep.subr.mxu0 0.0
    %2350 = vmatpush1.msra.mxu0 0.0
    %2351 = vmatprep.mubr.f32.mxu0 0.0
    %2352 = vmatmul.mubr.f32.gmra.mrb[0].mxu0 %v2282
    %v2353 = vpop.f32.mrb[0].mxu0
    %v2354 = vadd.f32 0.0, %v2353
    %v2355 = vpop.f32.mrb[0].mxu0
    %2356 = vmatprep.mubr.f32.mxu0 0.0
    %2357 = vmatmul.mubr.f32.gmra.mrb[0].mxu0 %v2285
    %v2358 = vpop.f32.mrb[0].mxu0
    %v2359 = vadd.f32 0.0, %v2358
    %v2360 = vpop.f32.mrb[0].mxu0
    %2361 = vdwg.mxu0
    %v2363 = vsel %vm245, %v2354, 0
    %v2366 = vsel %vm245, %v2359, 0
    %2368 = vmatprep.subr.mxu0 0.0
    %2369 = vmatpush1.msra.mxu0 %v213
    %2370 = vmatprep.subr.mxu0 0.0
    %2371 = vmatpush1.msra.mxu0 %v214
    %2372 = vmatprep.subr.mxu0 0.0
    %2373 = vmatpush1.msra.mxu0 %v215
    %2374 = vmatprep.subr.mxu0 0.0
    %2375 = vmatpush1.msra.mxu0 %v216
    %2376 = vmatprep.subr.mxu0 0.0
    %2377 = vmatpush1.msra.mxu0 0.0
    %2378 = vmatprep.subr.mxu0 0.0
    %2379 = vmatpush1.msra.mxu0 0.0
    %2380 = vmatprep.subr.mxu0 0.0
    %2381 = vmatpush1.msra.mxu0 0.0
    %2382 = vmatprep.subr.mxu0 0.0
    %2383 = vmatpush1.msra.mxu0 0.0
    %2384 = vmatprep.subr.mxu0 0.0
    %2385 = vmatpush1.msra.mxu0 0.0
    %2386 = vmatprep.subr.mxu0 0.0
    %2387 = vmatpush1.msra.mxu0 0.0
    %2388 = vmatprep.subr.mxu0 0.0
    %2389 = vmatpush1.msra.mxu0 0.0
    %2390 = vmatprep.subr.mxu0 0.0
    %2391 = vmatpush1.msra.mxu0 0.0
    %2392 = vmatprep.subr.mxu0 0.0
    %2393 = vmatpush1.msra.mxu0 0.0
    %2394 = vmatprep.subr.mxu0 0.0
    %2395 = vmatpush1.msra.mxu0 0.0
    %2396 = vmatprep.subr.mxu0 0.0
    %2397 = vmatpush1.msra.mxu0 0.0
    %2398 = vmatprep.subr.mxu0 0.0
    %2399 = vmatpush1.msra.mxu0 0.0
    %2400 = vmatprep.subr.mxu0 0.0
    %2401 = vmatpush1.msra.mxu0 0.0
    %2402 = vmatprep.subr.mxu0 0.0
    %2403 = vmatpush1.msra.mxu0 0.0
    %2404 = vmatprep.subr.mxu0 0.0
    %2405 = vmatpush1.msra.mxu0 0.0
    %2406 = vmatprep.subr.mxu0 0.0
    %2407 = vmatpush1.msra.mxu0 0.0
    %2408 = vmatprep.subr.mxu0 0.0
    %2409 = vmatpush1.msra.mxu0 0.0
    %2410 = vmatprep.subr.mxu0 0.0
    %2411 = vmatpush1.msra.mxu0 0.0
    %2412 = vmatprep.subr.mxu0 0.0
    %2413 = vmatpush1.msra.mxu0 0.0
    %2414 = vmatprep.subr.mxu0 0.0
    %2415 = vmatpush1.msra.mxu0 0.0
    %2416 = vmatprep.subr.mxu0 0.0
    %2417 = vmatpush1.msra.mxu0 0.0
    %2418 = vmatprep.subr.mxu0 0.0
    %2419 = vmatpush1.msra.mxu0 0.0
    %2420 = vmatprep.subr.mxu0 0.0
    %2421 = vmatpush1.msra.mxu0 0.0
    %2422 = vmatprep.subr.mxu0 0.0
    %2423 = vmatpush1.msra.mxu0 0.0
    %2424 = vmatprep.subr.mxu0 0.0
    %2425 = vmatpush1.msra.mxu0 0.0
    %2426 = vmatprep.subr.mxu0 0.0
    %2427 = vmatpush1.msra.mxu0 0.0
    %2428 = vmatprep.subr.mxu0 0.0
    %2429 = vmatpush1.msra.mxu0 0.0
    %2430 = vmatprep.subr.mxu0 0.0
    %2431 = vmatpush1.msra.mxu0 0.0
    %2432 = vmatprep.mubr.f32.mxu0 0.0
    %2433 = vmatmul.mubr.f32.gmra.mrb[0].mxu0 %v2363
    %v2434 = vpop.f32.mrb[0].mxu0
    %v2435 = vadd.f32 %v966, %v2434
    %v2436 = vpop.f32.mrb[0].mxu0
    %2437 = vmatprep.mubr.f32.mxu0 0.0
    %2438 = vmatmul.mubr.f32.gmra.mrb[0].mxu0 %v2366
    %v2439 = vpop.f32.mrb[0].mxu0
    %v2440 = vadd.f32 %v966, %v2439
    %v2441 = vpop.f32.mrb[0].mxu0
    %2442 = vdwg.mxu0
    %v2443 = vadd.f32 %v1902, %v2435
    %v2444 = vadd.f32 %v1903, %v2440
    %v2445 = vsel %vm245, %v2443, 0.0
    %2446 = vadd.xlane.f32.xlu0 %v2445
    %v2447 = vpop.xlane.xlu0 %2446
    %v2448 = vsel %vm245, %v2444, 0.0
    %2449 = vadd.xlane.f32.xlu0 %v2448
    %v2450 = vpop.xlane.xlu0 %2449
    %v2451 = vmul.f32 %v2447, %v1056
    %v2452 = vmul.f32 %v2450, %v1056
    %v2453 = vsub.f32 %v2443, %v2451
    %v2454 = vsub.f32 %v2444, %v2452
    %v2455 = vmul.f32 %v2453, %v2453
    %v2456 = vmul.f32 %v2454, %v2454
    %v2457 = vsel %vm245, %v2455, 0.0
    %2458 = vadd.xlane.f32.xlu0 %v2457
    %v2459 = vpop.xlane.xlu0 %2458
    %v2460 = vsel %vm245, %v2456, 0.0
    %2461 = vadd.xlane.f32.xlu0 %v2460
    %v2462 = vpop.xlane.xlu0 %2461
    %v2463 = vmul.f32 %v2459, %v1056
    %v2464 = vmul.f32 %v2462, %v1056
    %v2465 = vadd.f32 %v2463, 1e-05
    %v2466 = vadd.f32 %v2464, 1e-05
    %v2467 = vrsqrt.pop %v2465
    %v2468 = vrsqrt.pop %v2466
    %v2469 = vmul.f32 %v2453, %v2467
    %v2470 = vmul.f32 %v2454, %v2468
    %v2471 = vmul.f32 %v2469, %v1080
    %v2472 = vmul.f32 %v2470, %v1080
    %v2473 = vadd.f32 %v2471, %v1086
    %v2474 = vadd.f32 %v2472, %v1086
    %v2476 = vsel %vm245, %v2473, 0
    %v2479 = vsel %vm245, %v2474, 0
    %2481 = vmatprep.subr.mxu0 0.0
    %2482 = vmatpush1.msra.mxu0 %v217
    %2483 = vmatprep.subr.mxu0 0.0
    %2484 = vmatpush1.msra.mxu0 %v218
    %2485 = vmatprep.subr.mxu0 0.0
    %2486 = vmatpush1.msra.mxu0 %v219
    %2487 = vmatprep.subr.mxu0 0.0
    %2488 = vmatpush1.msra.mxu0 %v220
    %2489 = vmatprep.subr.mxu0 0.0
    %2490 = vmatpush1.msra.mxu0 0.0
    %2491 = vmatprep.subr.mxu0 0.0
    %2492 = vmatpush1.msra.mxu0 0.0
    %2493 = vmatprep.subr.mxu0 0.0
    %2494 = vmatpush1.msra.mxu0 0.0
    %2495 = vmatprep.subr.mxu0 0.0
    %2496 = vmatpush1.msra.mxu0 0.0
    %2497 = vmatprep.subr.mxu0 0.0
    %2498 = vmatpush1.msra.mxu0 0.0
    %2499 = vmatprep.subr.mxu0 0.0
    %2500 = vmatpush1.msra.mxu0 0.0
    %2501 = vmatprep.subr.mxu0 0.0
    %2502 = vmatpush1.msra.mxu0 0.0
    %2503 = vmatprep.subr.mxu0 0.0
    %2504 = vmatpush1.msra.mxu0 0.0
    %2505 = vmatprep.subr.mxu0 0.0
    %2506 = vmatpush1.msra.mxu0 0.0
    %2507 = vmatprep.subr.mxu0 0.0
    %2508 = vmatpush1.msra.mxu0 0.0
    %2509 = vmatprep.subr.mxu0 0.0
    %2510 = vmatpush1.msra.mxu0 0.0
    %2511 = vmatprep.subr.mxu0 0.0
    %2512 = vmatpush1.msra.mxu0 0.0
    %2513 = vmatprep.subr.mxu0 0.0
    %2514 = vmatpush1.msra.mxu0 0.0
    %2515 = vmatprep.subr.mxu0 0.0
    %2516 = vmatpush1.msra.mxu0 0.0
    %2517 = vmatprep.subr.mxu0 0.0
    %2518 = vmatpush1.msra.mxu0 0.0
    %2519 = vmatprep.subr.mxu0 0.0
    %2520 = vmatpush1.msra.mxu0 0.0
    %2521 = vmatprep.subr.mxu0 0.0
    %2522 = vmatpush1.msra.mxu0 0.0
    %2523 = vmatprep.subr.mxu0 0.0
    %2524 = vmatpush1.msra.mxu0 0.0
    %2525 = vmatprep.subr.mxu0 0.0
    %2526 = vmatpush1.msra.mxu0 0.0
    %2527 = vmatprep.subr.mxu0 0.0
    %2528 = vmatpush1.msra.mxu0 0.0
    %2529 = vmatprep.subr.mxu0 0.0
    %2530 = vmatpush1.msra.mxu0 0.0
    %2531 = vmatprep.subr.mxu0 0.0
    %2532 = vmatpush1.msra.mxu0 0.0
    %2533 = vmatprep.subr.mxu0 0.0
    %2534 = vmatpush1.msra.mxu0 0.0
    %2535 = vmatprep.subr.mxu0 0.0
    %2536 = vmatpush1.msra.mxu0 0.0
    %2537 = vmatprep.subr.mxu0 0.0
    %2538 = vmatpush1.msra.mxu0 0.0
    %2539 = vmatprep.subr.mxu0 0.0
    %2540 = vmatpush1.msra.mxu0 0.0
    %2541 = vmatprep.subr.mxu0 0.0
    %2542 = vmatpush1.msra.mxu0 0.0
    %2543 = vmatprep.subr.mxu0 0.0
    %2544 = vmatpush1.msra.mxu0 0.0
    %2545 = vmatprep.mubr.f32.mxu0 0.0
    %2546 = vmatmul.mubr.f32.gmra.mrb[0].mxu0 %v2476
    %v2547 = vpop.f32.mrb[0].mxu0
    %v2548 = vadd.f32 %v1092, %v2547
    %v2549 = vpop.f32.mrb[0].mxu0
    %2550 = vmatprep.mubr.f32.mxu0 0.0
    %2551 = vmatmul.mubr.f32.gmra.mrb[0].mxu0 %v2479
    %v2552 = vpop.f32.mrb[0].mxu0
    %v2553 = vadd.f32 %v1092, %v2552
    %v2554 = vpop.f32.mrb[0].mxu0
    %2555 = vdwg.mxu0
    %v2557 = vsel %vm245, %v2548, 0
    %v2560 = vsel %vm245, %v2553, 0
    %2562 = vmatprep.subr.mxu0 0.0
    %2563 = vmatpush1.xpose.msra.mxu0 %v1181
    %2564 = vmatprep.subr.mxu0 0.0
    %2565 = vmatpush1.xpose.msra.mxu0 %v1184
    %2566 = vmatprep.subr.mxu0 0.0
    %2567 = vmatpush1.xpose.msra.mxu0 %v1187
    %2568 = vmatprep.subr.mxu0 0.0
    %2569 = vmatpush1.xpose.msra.mxu0 %v1190
    %2570 = vmatprep.subr.mxu0 0.0
    %2571 = vmatpush1.xpose.msra.mxu0 %v1193
    %2572 = vmatprep.subr.mxu0 0.0
    %2573 = vmatpush1.xpose.msra.mxu0 %v1196
    %2574 = vmatprep.subr.mxu0 0.0
    %2575 = vmatpush1.xpose.msra.mxu0 %v1199
    %2576 = vmatprep.subr.mxu0 0.0
    %2577 = vmatpush1.xpose.msra.mxu0 %v1202
    %2578 = vmatprep.subr.mxu0 0.0
    %2579 = vmatpush1.xpose.msra.mxu0 %v1205
    %2580 = vmatprep.subr.mxu0 0.0
    %2581 = vmatpush1.xpose.msra.mxu0 %v1208
    %2582 = vmatprep.subr.mxu0 0.0
    %2583 = vmatpush1.xpose.msra.mxu0 %v1211
    %2584 = vmatprep.subr.mxu0 0.0
    %2585 = vmatpush1.xpose.msra.mxu0 %v1214
    %2586 = vmatprep.subr.mxu0 0.0
    %2587 = vmatpush1.xpose.msra.mxu0 %v1217
    %2588 = vmatprep.subr.mxu0 0.0
    %2589 = vmatpush1.xpose.msra.mxu0 %v1220
    %2590 = vmatprep.subr.mxu0 0.0
    %2591 = vmatpush1.xpose.msra.mxu0 %v1223
    %2592 = vmatprep.subr.mxu0 0.0
    %2593 = vmatpush1.xpose.msra.mxu0 %v1226
    %2594 = vmatprep.subr.mxu0 0.0
    %2595 = vmatpush1.xpose.msra.mxu0 0.0
    %2596 = vmatprep.subr.mxu0 0.0
    %2597 = vmatpush1.xpose.msra.mxu0 0.0
    %2598 = vmatprep.subr.mxu0 0.0
    %2599 = vmatpush1.xpose.msra.mxu0 0.0
    %2600 = vmatprep.subr.mxu0 0.0
    %2601 = vmatpush1.xpose.msra.mxu0 0.0
    %2602 = vmatprep.subr.mxu0 0.0
    %2603 = vmatpush1.xpose.msra.mxu0 0.0
    %2604 = vmatprep.subr.mxu0 0.0
    %2605 = vmatpush1.xpose.msra.mxu0 0.0
    %2606 = vmatprep.subr.mxu0 0.0
    %2607 = vmatpush1.xpose.msra.mxu0 0.0
    %2608 = vmatprep.subr.mxu0 0.0
    %2609 = vmatpush1.xpose.msra.mxu0 0.0
    %2610 = vmatprep.subr.mxu0 0.0
    %2611 = vmatpush1.xpose.msra.mxu0 0.0
    %2612 = vmatprep.subr.mxu0 0.0
    %2613 = vmatpush1.xpose.msra.mxu0 0.0
    %2614 = vmatprep.subr.mxu0 0.0
    %2615 = vmatpush1.xpose.msra.mxu0 0.0
    %2616 = vmatprep.subr.mxu0 0.0
    %2617 = vmatpush1.xpose.msra.mxu0 0.0
    %2618 = vmatprep.subr.mxu0 0.0
    %2619 = vmatpush1.xpose.msra.mxu0 0.0
    %2620 = vmatprep.subr.mxu0 0.0
    %2621 = vmatpush1.xpose.msra.mxu0 0.0
    %2622 = vmatprep.subr.mxu0 0.0
    %2623 = vmatpush1.xpose.msra.mxu0 0.0
    %2624 = vmatprep.subr.mxu0 0.0
    %2625 = vmatpush1.xpose.msra.mxu0 0.0
    %2626 = vmatprep.mubr.f32.mxu0 0.0
    %2627 = vmatmul.mubr.f32.gmra.mrb[0].mxu0 %v2557
    %v2628 = vpop.f32.mrb[0].mxu0
    %v2629 = vadd.f32 %v159, %v2628
    %v2630 = vpop.f32.mrb[0].mxu0
    %2631 = vmatprep.mubr.f32.mxu0 0.0
    %2632 = vmatmul.mubr.f32.gmra.mrb[0].mxu0 %v2560
    %v2633 = vpop.f32.mrb[0].mxu0
    %v2634 = vadd.f32 %v160, %v2633
    %v2635 = vpop.f32.mrb[0].mxu0
    %2636 = vdwg.mxu0
    %v2637 = vsel %vm245, %v2629, -inf
    %2638 = vmax.xlane.f32.xlu0 %v2637
    %v2639 = vpop.xlane.xlu0 %2638
    %v2640 = vsel %vm245, %v2634, -inf
    %2641 = vmax.xlane.f32.xlu0 %v2640
    %v2642 = vpop.xlane.xlu0 %2641
    %v2643 = vsel %vm1309, %v2629, -inf
    %2644 = vmax.xlane.f32.xlu0 %v2643
    %v2645 = vpop.xlane.xlu0 %2644
    %v2646 = vsel %vm1309, %v2634, -inf
    %2647 = vmax.xlane.f32.xlu0 %v2646
    %v2648 = vpop.xlane.xlu0 %2647
    %v2649 = vsel %vm1316, %v2629, -inf
    %2650 = vmax.xlane.f32.xlu0 %v2649
    %v2651 = vpop.xlane.xlu0 %2650
    %v2652 = vsel %vm1316, %v2634, -inf
    %2653 = vmax.xlane.f32.xlu0 %v2652
    %v2654 = vpop.xlane.xlu0 %2653
    %v2655 = vsel %vm1323, %v2629, -inf
    %2656 = vmax.xlane.f32.xlu0 %v2655
    %v2657 = vpop.xlane.xlu0 %2656
    %v2658 = vsel %vm1323, %v2634, -inf
    %2659 = vmax.xlane.f32.xlu0 %v2658
    %v2660 = vpop.xlane.xlu0 %2659
    %v2661 = vsel %vm245, %v2639, %v2645
    %v2662 = vsel %vm245, %v2642, %v2648
    %v2663 = vsel %vm758, %v2661, %v2651
    %v2664 = vsel %vm758, %v2662, %v2654
    %v2665 = vsel %vm1334, %v2663, %v2657
    %v2666 = vsel %vm1334, %v2664, %v2660
    %v2667 = vsub.f32 %v2629, %v2665
    %v2668 = vsub.f32 %v2634, %v2666
    %v2669 = vmul.f32 %v2667, 1.442695
    %v2670 = vpow.pop %v2669
    %v2671 = vmul.f32 %v2668, 1.442695
    %v2672 = vpow.pop %v2671
    %2673 = vmatprep.subr.mxu0 0.0
    %2674 = vmatpush1.msra.mxu0 %v193
    %2675 = vmatprep.subr.mxu0 0.0
    %2676 = vmatpush1.msra.mxu0 %v194
    %2677 = vmatprep.subr.mxu0 0.0
    %2678 = vmatpush1.msra.mxu0 %v195
    %2679 = vmatprep.subr.mxu0 0.0
    %2680 = vmatpush1.msra.mxu0 %v196
    %2681 = vmatprep.subr.mxu0 0.0
    %2682 = vmatpush1.msra.mxu0 %v197
    %2683 = vmatprep.subr.mxu0 0.0
    %2684 = vmatpush1.msra.mxu0 %v198
    %2685 = vmatprep.subr.mxu0 0.0
    %2686 = vmatpush1.msra.mxu0 %v199
    %2687 = vmatprep.subr.mxu0 0.0
    %2688 = vmatpush1.msra.mxu0 %v200
    %2689 = vmatprep.subr.mxu0 0.0
    %2690 = vmatpush1.msra.mxu0 %v201
    %2691 = vmatprep.subr.mxu0 0.0
    %2692 = vmatpush1.msra.mxu0 %v202
    %2693 = vmatprep.subr.mxu0 0.0
    %2694 = vmatpush1.msra.mxu0 %v203
    %2695 = vmatprep.subr.mxu0 0.0
    %2696 = vmatpush1.msra.mxu0 %v204
    %2697 = vmatprep.subr.mxu0 0.0
    %2698 = vmatpush1.msra.mxu0 %v205
    %2699 = vmatprep.subr.mxu0 0.0
    %2700 = vmatpush1.msra.mxu0 %v206
    %2701 = vmatprep.subr.mxu0 0.0
    %2702 = vmatpush1.msra.mxu0 %v207
    %2703 = vmatprep.subr.mxu0 0.0
    %2704 = vmatpush1.msra.mxu0 %v208
    %2705 = vmatprep.subr.mxu0 0.0
    %2706 = vmatpush1.msra.mxu0 0.0
    %2707 = vmatprep.subr.mxu0 0.0
    %2708 = vmatpush1.msra.mxu0 0.0
    %2709 = vmatprep.subr.mxu0 0.0
    %2710 = vmatpush1.msra.mxu0 0.0
    %2711 = vmatprep.subr.mxu0 0.0
    %2712 = vmatpush1.msra.mxu0 0.0
    %2713 = vmatprep.subr.mxu0 0.0
    %2714 = vmatpush1.msra.mxu0 0.0
    %2715 = vmatprep.subr.mxu0 0.0
    %2716 = vmatpush1.msra.mxu0 0.0
    %2717 = vmatprep.subr.mxu0 0.0
    %2718 = vmatpush1.msra.mxu0 0.0
    %2719 = vmatprep.subr.mxu0 0.0
    %2720 = vmatpush1.msra.mxu0 0.0
    %2721 = vmatprep.subr.mxu0 0.0
    %2722 = vmatpush1.msra.mxu0 0.0
    %2723 = vmatprep.subr.mxu0 0.0
    %2724 = vmatpush1.msra.mxu0 0.0
    %2725 = vmatprep.subr.mxu0 0.0
    %2726 = vmatpush1.msra.mxu0 0.0
    %2727 = vmatprep.subr.mxu0 0.0
    %2728 = vmatpush1.msra.mxu0 0.0
    %2729 = vmatprep.subr.mxu0 0.0
    %2730 = vmatpush1.msra.mxu0 0.0
    %2731 = vmatprep.subr.mxu0 0.0
    %2732 = vmatpush1.msra.mxu0 0.0
    %2733 = vmatprep.subr.mxu0 0.0
    %2734 = vmatpush1.msra.mxu0 0.0
    %2735 = vmatprep.subr.mxu0 0.0
    %2736 = vmatpush1.msra.mxu0 0.0
    %2737 = vmatprep.mubr.f32.mxu0 0.0
    %2738 = vmatmul.mubr.f32.gmra.mrb[0].mxu0 %v2670
    %v2739 = vpop.f32.mrb[0].mxu0
    %v2740 = vadd.f32 0.0, %v2739
    %v2741 = vpop.f32.mrb[0].mxu0
    %2742 = vmatprep.mubr.f32.mxu0 0.0
    %2743 = vmatmul.mubr.f32.gmra.mrb[0].mxu0 %v2672
    %v2744 = vpop.f32.mrb[0].mxu0
    %v2745 = vadd.f32 0.0, %v2744
    %v2746 = vpop.f32.mrb[0].mxu0
    %2747 = vdwg.mxu0
    %v2748 = vrcp.pop %v2740
    %v2749 = vrcp.pop %v2745
    %v2750 = vmul.f32 %v2740, %v2748
    %v2751 = vmul.f32 %v2745, %v2749
    %v2752 = vsub.f32 2.0, %v2750
    %v2753 = vsub.f32 2.0, %v2751
    %v2754 = vmul.f32 %v2748, %v2752
    %v2755 = vmul.f32 %v2749, %v2753
    %v2756 = vmul.f32 %v2670, %v2754
    %v2757 = vmul.f32 %v2672, %v2755
    %2758 = vmatprep.subr.mxu0 0.0
    %2759 = vmatpush1.msra.mxu0 %v1445
    %2760 = vmatprep.subr.mxu0 0.0
    %2761 = vmatpush1.msra.mxu0 %v1447
    %2762 = vmatprep.subr.mxu0 0.0
    %2763 = vmatpush1.msra.mxu0 %v1449
    %2764 = vmatprep.subr.mxu0 0.0
    %2765 = vmatpush1.msra.mxu0 %v1451
    %2766 = vmatprep.subr.mxu0 0.0
    %2767 = vmatpush1.msra.mxu0 %v1453
    %2768 = vmatprep.subr.mxu0 0.0
    %2769 = vmatpush1.msra.mxu0 %v1455
    %2770 = vmatprep.subr.mxu0 0.0
    %2771 = vmatpush1.msra.mxu0 %v1457
    %2772 = vmatprep.subr.mxu0 0.0
    %2773 = vmatpush1.msra.mxu0 %v1459
    %2774 = vmatprep.subr.mxu0 0.0
    %2775 = vmatpush1.msra.mxu0 %v1461
    %2776 = vmatprep.subr.mxu0 0.0
    %2777 = vmatpush1.msra.mxu0 %v1463
    %2778 = vmatprep.subr.mxu0 0.0
    %2779 = vmatpush1.msra.mxu0 %v1465
    %2780 = vmatprep.subr.mxu0 0.0
    %2781 = vmatpush1.msra.mxu0 %v1467
    %2782 = vmatprep.subr.mxu0 0.0
    %2783 = vmatpush1.msra.mxu0 %v1469
    %2784 = vmatprep.subr.mxu0 0.0
    %2785 = vmatpush1.msra.mxu0 %v1471
    %2786 = vmatprep.subr.mxu0 0.0
    %2787 = vmatpush1.msra.mxu0 %v1473
    %2788 = vmatprep.subr.mxu0 0.0
    %2789 = vmatpush1.msra.mxu0 %v1475
    %2790 = vmatprep.subr.mxu0 0.0
    %2791 = vmatpush1.msra.mxu0 0.0
    %2792 = vmatprep.subr.mxu0 0.0
    %2793 = vmatpush1.msra.mxu0 0.0
    %2794 = vmatprep.subr.mxu0 0.0
    %2795 = vmatpush1.msra.mxu0 0.0
    %2796 = vmatprep.subr.mxu0 0.0
    %2797 = vmatpush1.msra.mxu0 0.0
    %2798 = vmatprep.subr.mxu0 0.0
    %2799 = vmatpush1.msra.mxu0 0.0
    %2800 = vmatprep.subr.mxu0 0.0
    %2801 = vmatpush1.msra.mxu0 0.0
    %2802 = vmatprep.subr.mxu0 0.0
    %2803 = vmatpush1.msra.mxu0 0.0
    %2804 = vmatprep.subr.mxu0 0.0
    %2805 = vmatpush1.msra.mxu0 0.0
    %2806 = vmatprep.subr.mxu0 0.0
    %2807 = vmatpush1.msra.mxu0 0.0
    %2808 = vmatprep.subr.mxu0 0.0
    %2809 = vmatpush1.msra.mxu0 0.0
    %2810 = vmatprep.subr.mxu0 0.0
    %2811 = vmatpush1.msra.mxu0 0.0
    %2812 = vmatprep.subr.mxu0 0.0
    %2813 = vmatpush1.msra.mxu0 0.0
    %2814 = vmatprep.subr.mxu0 0.0
    %2815 = vmatpush1.msra.mxu0 0.0
    %2816 = vmatprep.subr.mxu0 0.0
    %2817 = vmatpush1.msra.mxu0 0.0
    %2818 = vmatprep.subr.mxu0 0.0
    %2819 = vmatpush1.msra.mxu0 0.0
    %2820 = vmatprep.subr.mxu0 0.0
    %2821 = vmatpush1.msra.mxu0 0.0
    %2822 = vmatprep.mubr.f32.mxu0 0.0
    %2823 = vmatmul.mubr.f32.gmra.mrb[0].mxu0 %v2756
    %v2824 = vpop.f32.mrb[0].mxu0
    %v2825 = vadd.f32 0.0, %v2824
    %v2826 = vpop.f32.mrb[0].mxu0
    %2827 = vmatprep.mubr.f32.mxu0 0.0
    %2828 = vmatmul.mubr.f32.gmra.mrb[0].mxu0 %v2757
    %v2829 = vpop.f32.mrb[0].mxu0
    %v2830 = vadd.f32 0.0, %v2829
    %v2831 = vpop.f32.mrb[0].mxu0
    %2832 = vdwg.mxu0
    %v2834 = vsel %vm245, %v2825, 0
    %v2837 = vsel %vm245, %v2830, 0
    %2839 = vmatprep.subr.mxu0 0.0
    %2840 = vmatpush1.msra.mxu0 %v221
    %2841 = vmatprep.subr.mxu0 0.0
    %2842 = vmatpush1.msra.mxu0 %v222
    %2843 = vmatprep.subr.mxu0 0.0
    %2844 = vmatpush1.msra.mxu0 %v223
    %2845 = vmatprep.subr.mxu0 0.0
    %2846 = vmatpush1.msra.mxu0 %v224
    %2847 = vmatprep.subr.mxu0 0.0
    %2848 = vmatpush1.msra.mxu0 0.0
    %2849 = vmatprep.subr.mxu0 0.0
    %2850 = vmatpush1.msra.mxu0 0.0
    %2851 = vmatprep.subr.mxu0 0.0
    %2852 = vmatpush1.msra.mxu0 0.0
    %2853 = vmatprep.subr.mxu0 0.0
    %2854 = vmatpush1.msra.mxu0 0.0
    %2855 = vmatprep.subr.mxu0 0.0
    %2856 = vmatpush1.msra.mxu0 0.0
    %2857 = vmatprep.subr.mxu0 0.0
    %2858 = vmatpush1.msra.mxu0 0.0
    %2859 = vmatprep.subr.mxu0 0.0
    %2860 = vmatpush1.msra.mxu0 0.0
    %2861 = vmatprep.subr.mxu0 0.0
    %2862 = vmatpush1.msra.mxu0 0.0
    %2863 = vmatprep.subr.mxu0 0.0
    %2864 = vmatpush1.msra.mxu0 0.0
    %2865 = vmatprep.subr.mxu0 0.0
    %2866 = vmatpush1.msra.mxu0 0.0
    %2867 = vmatprep.subr.mxu0 0.0
    %2868 = vmatpush1.msra.mxu0 0.0
    %2869 = vmatprep.subr.mxu0 0.0
    %2870 = vmatpush1.msra.mxu0 0.0
    %2871 = vmatprep.subr.mxu0 0.0
    %2872 = vmatpush1.msra.mxu0 0.0
    %2873 = vmatprep.subr.mxu0 0.0
    %2874 = vmatpush1.msra.mxu0 0.0
    %2875 = vmatprep.subr.mxu0 0.0
    %2876 = vmatpush1.msra.mxu0 0.0
    %2877 = vmatprep.subr.mxu0 0.0
    %2878 = vmatpush1.msra.mxu0 0.0
    %2879 = vmatprep.subr.mxu0 0.0
    %2880 = vmatpush1.msra.mxu0 0.0
    %2881 = vmatprep.subr.mxu0 0.0
    %2882 = vmatpush1.msra.mxu0 0.0
    %2883 = vmatprep.subr.mxu0 0.0
    %2884 = vmatpush1.msra.mxu0 0.0
    %2885 = vmatprep.subr.mxu0 0.0
    %2886 = vmatpush1.msra.mxu0 0.0
    %2887 = vmatprep.subr.mxu0 0.0
    %2888 = vmatpush1.msra.mxu0 0.0
    %2889 = vmatprep.subr.mxu0 0.0
    %2890 = vmatpush1.msra.mxu0 0.0
    %2891 = vmatprep.subr.mxu0 0.0
    %2892 = vmatpush1.msra.mxu0 0.0
    %2893 = vmatprep.subr.mxu0 0.0
    %2894 = vmatpush1.msra.mxu0 0.0
    %2895 = vmatprep.subr.mxu0 0.0
    %2896 = vmatpush1.msra.mxu0 0.0
    %2897 = vmatprep.subr.mxu0 0.0
    %2898 = vmatpush1.msra.mxu0 0.0
    %2899 = vmatprep.subr.mxu0 0.0
    %2900 = vmatpush1.msra.mxu0 0.0
    %2901 = vmatprep.subr.mxu0 0.0
    %2902 = vmatpush1.msra.mxu0 0.0
    %2903 = vmatprep.mubr.f32.mxu0 0.0
    %2904 = vmatmul.mubr.f32.gmra.mrb[0].mxu0 %v2834
    %v2905 = vpop.f32.mrb[0].mxu0
    %v2906 = vadd.f32 %v1570, %v2905
    %v2907 = vpop.f32.mrb[0].mxu0
    %2908 = vmatprep.mubr.f32.mxu0 0.0
    %2909 = vmatmul.mubr.f32.gmra.mrb[0].mxu0 %v2837
    %v2910 = vpop.f32.mrb[0].mxu0
    %v2911 = vadd.f32 %v1570, %v2910
    %v2912 = vpop.f32.mrb[0].mxu0
    %2913 = vdwg.mxu0
    %v2914 = vadd.f32 %v2473, %v2906
    %v2915 = vadd.f32 %v2474, %v2911
    %v2916 = vsel %vm245, %v2914, 0.0
    %2917 = vadd.xlane.f32.xlu0 %v2916
    %v2918 = vpop.xlane.xlu0 %2917
    %v2919 = vsel %vm245, %v2915, 0.0
    %2920 = vadd.xlane.f32.xlu0 %v2919
    %v2921 = vpop.xlane.xlu0 %2920
    %v2922 = vmul.f32 %v2918, %v1056
    %v2923 = vmul.f32 %v2921, %v1056
    %v2924 = vsub.f32 %v2914, %v2922
    %v2925 = vsub.f32 %v2915, %v2923
    %v2926 = vmul.f32 %v2924, %v2924
    %v2927 = vmul.f32 %v2925, %v2925
    %v2928 = vsel %vm245, %v2926, 0.0
    %2929 = vadd.xlane.f32.xlu0 %v2928
    %v2930 = vpop.xlane.xlu0 %2929
    %v2931 = vsel %vm245, %v2927, 0.0
    %2932 = vadd.xlane.f32.xlu0 %v2931
    %v2933 = vpop.xlane.xlu0 %2932
    %v2934 = vmul.f32 %v2930, %v1056
    %v2935 = vmul.f32 %v2933, %v1056
    %v2936 = vadd.f32 %v2934, 1e-05
    %v2937 = vadd.f32 %v2935, 1e-05
    %v2938 = vrsqrt.pop %v2936
    %v2939 = vrsqrt.pop %v2937
    %v2940 = vmul.f32 %v2924, %v2938
    %v2941 = vmul.f32 %v2925, %v2939
    %v2942 = vmul.f32 %v2940, %v1683
    %v2943 = vmul.f32 %v2941, %v1683
    %v2944 = vadd.f32 %v2942, %v1689
    %v2945 = vadd.f32 %v2943, %v1689
    %v2947 = vsel %vm245, %v2944, 0
    %v2950 = vsel %vm245, %v2945, 0
    %2952 = vmatprep.subr.mxu0 0.0
    %2953 = vmatpush1.msra.mxu0 %v225
    %2954 = vmatprep.subr.mxu0 0.0
    %2955 = vmatpush1.msra.mxu0 %v226
    %2956 = vmatprep.subr.mxu0 0.0
    %2957 = vmatpush1.msra.mxu0 %v227
    %2958 = vmatprep.subr.mxu0 0.0
    %2959 = vmatpush1.msra.mxu0 %v228
    %2960 = vmatprep.subr.mxu0 0.0
    %2961 = vmatpush1.msra.mxu0 0.0
    %2962 = vmatprep.subr.mxu0 0.0
    %2963 = vmatpush1.msra.mxu0 0.0
    %2964 = vmatprep.subr.mxu0 0.0
    %2965 = vmatpush1.msra.mxu0 0.0
    %2966 = vmatprep.subr.mxu0 0.0
    %2967 = vmatpush1.msra.mxu0 0.0
    %2968 = vmatprep.subr.mxu0 0.0
    %2969 = vmatpush1.msra.mxu0 0.0
    %2970 = vmatprep.subr.mxu0 0.0
    %2971 = vmatpush1.msra.mxu0 0.0
    %2972 = vmatprep.subr.mxu0 0.0
    %2973 = vmatpush1.msra.mxu0 0.0
    %2974 = vmatprep.subr.mxu0 0.0
    %2975 = vmatpush1.msra.mxu0 0.0
    %2976 = vmatprep.subr.mxu0 0.0
    %2977 = vmatpush1.msra.mxu0 0.0
    %2978 = vmatprep.subr.mxu0 0.0
    %2979 = vmatpush1.msra.mxu0 0.0
    %2980 = vmatprep.subr.mxu0 0.0
    %2981 = vmatpush1.msra.mxu0 0.0
    %2982 = vmatprep.subr.mxu0 0.0
    %2983 = vmatpush1.msra.mxu0 0.0
    %2984 = vmatprep.subr.mxu0 0.0
    %2985 = vmatpush1.msra.mxu0 0.0
    %2986 = vmatprep.subr.mxu0 0.0
    %2987 = vmatpush1.msra.mxu0 0.0
    %2988 = vmatprep.subr.mxu0 0.0
    %2989 = vmatpush1.msra.mxu0 0.0
    %2990 = vmatprep.subr.mxu0 0.0
    %2991 = vmatpush1.msra.mxu0 0.0
    %2992 = vmatprep.subr.mxu0 0.0
    %2993 = vmatpush1.msra.mxu0 0.0
    %2994 = vmatprep.subr.mxu0 0.0
    %2995 = vmatpush1.msra.mxu0 0.0
    %2996 = vmatprep.subr.mxu0 0.0
    %2997 = vmatpush1.msra.mxu0 0.0
    %2998 = vmatprep.subr.mxu0 0.0
    %2999 = vmatpush1.msra.mxu0 0.0
    %3000 = vmatprep.subr.mxu0 0.0
    %3001 = vmatpush1.msra.mxu0 0.0
    %3002 = vmatprep.subr.mxu0 0.0
    %3003 = vmatpush1.msra.mxu0 0.0
    %3004 = vmatprep.subr.mxu0 0.0
    %3005 = vmatpush1.msra.mxu0 0.0
    %3006 = vmatprep.subr.mxu0 0.0
    %3007 = vmatpush1.msra.mxu0 0.0
    %3008 = vmatprep.subr.mxu0 0.0
    %3009 = vmatpush1.msra.mxu0 0.0
    %3010 = vmatprep.subr.mxu0 0.0
    %3011 = vmatpush1.msra.mxu0 0.0
    %3012 = vmatprep.subr.mxu0 0.0
    %3013 = vmatpush1.msra.mxu0 0.0
    %3014 = vmatprep.subr.mxu0 0.0
    %3015 = vmatpush1.msra.mxu0 0.0
    %3016 = vmatprep.mubr.f32.mxu0 0.0
    %3017 = vmatmul.mubr.f32.gmra.mrb[0].mxu0 %v2947
    %v3018 = vpop.f32.mrb[0].mxu0
    %v3019 = vadd.f32 %v1695, %v3018
    %v3020 = vpop.f32.mrb[0].mxu0
    %3021 = vmatprep.mubr.f32.mxu0 0.0
    %3022 = vmatmul.mubr.f32.gmra.mrb[0].mxu0 %v2950
    %v3023 = vpop.f32.mrb[0].mxu0
    %v3024 = vadd.f32 %v1695, %v3023
    %v3025 = vpop.f32.mrb[0].mxu0
    %3026 = vdwg.mxu0
    %v3027 = vmax.f32 %v3019, 0.0
    %v3028 = vmax.f32 %v3024, 0.0
    %v3030 = vsel %vm758, %v3027, 0
    %v3033 = vsel %vm758, %v3028, 0
    %3035 = vmatprep.subr.mxu0 0.0
    %3036 = vmatpush1.msra.mxu0 %v229
    %3037 = vmatprep.subr.mxu0 0.0
    %3038 = vmatpush1.msra.mxu0 %v230
    %3039 = vmatprep.subr.mxu0 0.0
    %3040 = vmatpush1.msra.mxu0 %v231
    %3041 = vmatprep.subr.mxu0 0.0
    %3042 = vmatpush1.msra.mxu0 %v232
    %3043 = vmatprep.subr.mxu0 0.0
    %3044 = vmatpush1.msra.mxu0 %v233
    %3045 = vmatprep.subr.mxu0 0.0
    %3046 = vmatpush1.msra.mxu0 %v234
    %3047 = vmatprep.subr.mxu0 0.0
    %3048 = vmatpush1.msra.mxu0 %v235
    %3049 = vmatprep.subr.mxu0 0.0
    %3050 = vmatpush1.msra.mxu0 %v236
    %3051 = vmatprep.subr.mxu0 0.0
    %3052 = vmatpush1.msra.mxu0 0.0
    %3053 = vmatprep.subr.mxu0 0.0
    %3054 = vmatpush1.msra.mxu0 0.0
    %3055 = vmatprep.subr.mxu0 0.0
    %3056 = vmatpush1.msra.mxu0 0.0
    %3057 = vmatprep.subr.mxu0 0.0
    %3058 = vmatpush1.msra.mxu0 0.0
    %3059 = vmatprep.subr.mxu0 0.0
    %3060 = vmatpush1.msra.mxu0 0.0
    %3061 = vmatprep.subr.mxu0 0.0
    %3062 = vmatpush1.msra.mxu0 0.0
    %3063 = vmatprep.subr.mxu0 0.0
    %3064 = vmatpush1.msra.mxu0 0.0
    %3065 = vmatprep.subr.mxu0 0.0
    %3066 = vmatpush1.msra.mxu0 0.0
    %3067 = vmatprep.subr.mxu0 0.0
    %3068 = vmatpush1.msra.mxu0 0.0
    %3069 = vmatprep.subr.mxu0 0.0
    %3070 = vmatpush1.msra.mxu0 0.0
    %3071 = vmatprep.subr.mxu0 0.0
    %3072 = vmatpush1.msra.mxu0 0.0
    %3073 = vmatprep.subr.mxu0 0.0
    %3074 = vmatpush1.msra.mxu0 0.0
    %3075 = vmatprep.subr.mxu0 0.0
    %3076 = vmatpush1.msra.mxu0 0.0
    %3077 = vmatprep.subr.mxu0 0.0
    %3078 = vmatpush1.msra.mxu0 0.0
    %3079 = vmatprep.subr.mxu0 0.0
    %3080 = vmatpush1.msra.mxu0 0.0
    %3081 = vmatprep.subr.mxu0 0.0
    %3082 = vmatpush1.msra.mxu0 0.0
    %3083 = vmatprep.subr.mxu0 0.0
    %3084 = vmatpush1.msra.mxu0 0.0
    %3085 = vmatprep.subr.mxu0 0.0
    %3086 = vmatpush1.msra.mxu0 0.0
    %3087 = vmatprep.subr.mxu0 0.0
    %3088 = vmatpush1.msra.mxu0 0.0
    %3089 = vmatprep.subr.mxu0 0.0
    %3090 = vmatpush1.msra.mxu0 0.0
    %3091 = vmatprep.subr.mxu0 0.0
    %3092 = vmatpush1.msra.mxu0 0.0
    %3093 = vmatprep.subr.mxu0 0.0
    %3094 = vmatpush1.msra.mxu0 0.0
    %3095 = vmatprep.subr.mxu0 0.0
    %3096 = vmatpush1.msra.mxu0 0.0
    %3097 = vmatprep.subr.mxu0 0.0
    %3098 = vmatpush1.msra.mxu0 0.0
    %3099 = vmatprep.mubr.f32.mxu0 0.0
    %3100 = vmatmul.mubr.f32.gmra.mrb[0].mxu0 %v3030
    %v3101 = vpop.f32.mrb[0].mxu0
    %v3102 = vadd.f32 %v1782, %v3101
    %v3103 = vpop.f32.mrb[0].mxu0
    %3104 = vmatprep.mubr.f32.mxu0 0.0
    %3105 = vmatmul.mubr.f32.gmra.mrb[0].mxu0 %v3033
    %v3106 = vpop.f32.mrb[0].mxu0
    %v3107 = vadd.f32 %v1782, %v3106
    %v3108 = vpop.f32.mrb[0].mxu0
    %3109 = vdwg.mxu0
    %v3110 = vadd.f32 %v2944, %v3102
    %v3111 = vadd.f32 %v2945, %v3107
    %v3112 = vsel %vm245, %v3110, 0.0
    %3113 = vadd.xlane.f32.xlu0 %v3112
    %v3114 = vpop.xlane.xlu0 %3113
    %v3115 = vsel %vm245, %v3111, 0.0
    %3116 = vadd.xlane.f32.xlu0 %v3115
    %v3117 = vpop.xlane.xlu0 %3116
    %v3118 = vmul.f32 %v3114, %v1056
    %v3119 = vmul.f32 %v3117, %v1056
    %v3120 = vsub.f32 %v3110, %v3118
    %v3121 = vsub.f32 %v3111, %v3119
    %v3122 = vmul.f32 %v3120, %v3120
    %v3123 = vmul.f32 %v3121, %v3121
    %v3124 = vsel %vm245, %v3122, 0.0
    %3125 = vadd.xlane.f32.xlu0 %v3124
    %v3126 = vpop.xlane.xlu0 %3125
    %v3127 = vsel %vm245, %v3123, 0.0
    %3128 = vadd.xlane.f32.xlu0 %v3127
    %v3129 = vpop.xlane.xlu0 %3128
    %v3130 = vmul.f32 %v3126, %v1056
    %v3131 = vmul.f32 %v3129, %v1056
    %v3132 = vadd.f32 %v3130, 1e-05
    %v3133 = vadd.f32 %v3131, 1e-05
    %v3134 = vrsqrt.pop %v3132
    %v3135 = vrsqrt.pop %v3133
    %v3136 = vmul.f32 %v3120, %v3134
    %v3137 = vmul.f32 %v3121, %v3135
    %v3138 = vmul.f32 %v3136, %v1895
    %v3139 = vmul.f32 %v3137, %v1895
    %v3140 = vadd.f32 %v3138, %v1901
    %v3141 = vadd.f32 %v3139, %v1901
    %3142 = vst.msk [vmem:[#allocation14] sm:$0xff] %vm245, %v3140
    %3143 = vst.msk [vmem:[#allocation14 + $0x8] sm:$0xff] %vm245, %v3141
    // Predicated region
    $region94: #{transformer_decoder.1} parent=1 // pred_check
      _
    $region95: #{transformer_decoder.1} parent=1 // pred_check_branch
      %3145 = sbr.rel (0) target = $region97
    $region96: #{transformer_decoder.1} parent=1 // pred_region
      %s3147 = ssub.s32 256, 256
      %3148 = vsyncadd [#allocation4], %s3147
      %s3149 = sshll.u32 [#allocation14], 4
      %s3150 = int_to_ptr.vmem [resolvable:$true] %s3149
      %3155 = dma.vmem_to_hbm [thread:$0]  %s3150, 256, %s16, [#allocation4], 128, 128, 8
    $region97: #{transformer_decoder.1} parent=1 // pred_fallthru
      _
    // Predicated region
    $region98: #{transformer_decoder.1} parent=1 // pred_check
      _
    $region99: #{transformer_decoder.1} parent=1 // pred_check_branch
      %3157 = sbr.rel (0) target = $region101
    $region100: #{transformer_decoder.1} parent=1 // pred_region
      %3158 = dma.done [#allocation4], 256
    $region101: #{transformer_decoder.1} parent=1 // pred_fallthru
      _
    %3159 = vsyncpa [#allocation3], 1
    %3160 = vsyncpa [#allocation6], 1
    %3161 = vsyncpa [#allocation9], 1
    %3162 = vsyncpa [#allocation12], 1
    %3163 = vsyncpa [#allocation4], 1

</llo_original>
